<compile_context>
chip_gen: v7x
topology: tpu7x:2x2x1
jax: 0.10.0
libtpu: 0.0.40
codegen_flags: <defaults>
</compile_context>

<pallas_src>
import jax
import jax.numpy as jnp
from jax.experimental import pallas as pl
from jax.experimental.pallas import tpu as pltpu

LN_EPS = 1e-5  # torch.nn.LayerNorm default


def _layernorm(y, gamma, beta):
    mu = jnp.mean(y, axis=-1, keepdims=True)
    var = jnp.mean((y - mu) ** 2, axis=-1, keepdims=True)
    # NOTE: eps must stay inside the rsqrt so zero-padded batch rows (var == 0)
    # remain finite; those rows are sliced off in the wrapper.
    return (y - mu) * jax.lax.rsqrt(var + LN_EPS) * gamma + beta


def critic_kernel(obs_ref, act_ref, wt_ref, w0h_ref, w0a_ref,
                  w11_ref, w21_ref, wq2_ref, sp_ref, out_ref):
    F = wt_ref.shape[1]
    H2 = w0h_ref.shape[1]
    H = H2 // 2

    # packed small params: one [10, P] f32 array (single DMA).
    # NOTE: rows are sliced to their true length (:F / :H2 / :2) FIRST; the
    # per-branch [:, :H] / [:, H:] slices below must operate on the :H2-sliced
    # rows, never directly on the padded [10, P] rows.
    sp = sp_ref[...]
    bt, gt, bet = sp[0:1, :F], sp[1:2, :F], sp[2:3, :F]
    b0, g0, be0 = sp[3:4, :H2], sp[4:5, :H2], sp[5:6, :H2]
    b1, g1, be1 = sp[6:7, :H2], sp[7:8, :H2], sp[8:9, :H2]
    bq = sp[9:10, :2]

    # ---- trunk: Linear -> LayerNorm -> Tanh ----
    # obs arrives in its native dtype and is cast to bf16 on the vregs right
    # before the MXU dot (f32 accumulation).
    obs = obs_ref[...].astype(jnp.bfloat16)
    h = jnp.dot(obs, wt_ref[...], preferred_element_type=jnp.float32) + bt
    h = jnp.tanh(_layernorm(h, gt, bet))

    # ---- fused layer-0 for BOTH Q branches (bf16 MXU, f32 accumulation) ----
    # concat([h, a]) @ [W1 | W2] == h @ Wh_fused + a @ Wa_fused  (lanes: [Q1 | Q2])
    a_bf = act_ref[...].astype(jnp.bfloat16)
    y0 = (jnp.dot(h.astype(jnp.bfloat16), w0h_ref[...],
                  preferred_element_type=jnp.float32)
          + jnp.dot(a_bf, w0a_ref[...], preferred_element_type=jnp.float32)
          + b0)
    y01 = jnp.maximum(_layernorm(y0[:, :H], g0[:, :H], be0[:, :H]), 0.0)
    y02 = jnp.maximum(_layernorm(y0[:, H:], g0[:, H:], be0[:, H:]), 0.0)

    # ---- per-branch hidden LinearNormAct (n_layers_critic = 1) ----
    y11 = jnp.dot(y01.astype(jnp.bfloat16), w11_ref[...],
                  preferred_element_type=jnp.float32) + b1[:, :H]
    y11 = jnp.maximum(_layernorm(y11, g1[:, :H], be1[:, :H]), 0.0)
    y12 = jnp.dot(y02.astype(jnp.bfloat16), w21_ref[...],
                  preferred_element_type=jnp.float32) + b1[:, H:]
    y12 = jnp.maximum(_layernorm(y12, g1[:, H:], be1[:, H:]), 0.0)

    # ---- heads: single block-diagonal matmul  [y11 | y12] @ [[w1q,0],[0,w2q]] ----
    yc = jnp.concatenate([y11, y12], axis=-1).astype(jnp.bfloat16)
    out_ref[...] = jnp.dot(yc, wq2_ref[...], preferred_element_type=jnp.float32) + bq


# ------------------------------ wrapper helpers ------------------------------

def _vmem_limit_bytes():
    """Generation-aware scoped-VMEM cap: ~75% of physical, capped at 100 MiB.

    v5e/v6e (128 MiB physical) -> 96 MiB; v7x (64 MiB per core) -> 48 MiB.
    """
    cap = 64 * 1024 * 1024  # conservative default (v7x per-TensorCore VMEM)
    try:
        info = pltpu.get_tpu_info()
        cap = int(getattr(info, "vmem_capacity_bytes", cap)) or cap
    except Exception:
        pass
    return min(cap * 3 // 4, 100 * 1024 * 1024)


def _pick_batch_tile(B, repr_dim, A, F, H, obs_itemsize, weight_bytes, vmem_limit):
    """Size the batch tile from the VMEM budget left after the resident weights."""
    headroom = 2 * 1024 * 1024
    resident = 2 * weight_bytes              # conservative: assume double-buffered weights
    budget = max(vmem_limit - resident - headroom, 1 * 1024 * 1024)
    # per-row bytes: double-buffered obs/action/output tiles + f32 intermediates
    per_row = 2 * (repr_dim * obs_itemsize + A * 4 + 2 * 4) + (F + 6 * H + 8) * 4
    tb = int(budget // per_row)
    tb = max(16, min(tb, 2048))
    tb = (tb // 16) * 16                     # multiple of 16 (bf16 sublane packing)
    tb = min(tb, ((B + 15) // 16) * 16)      # never tile beyond the padded batch
    # prefer >= 2 grid steps when the batch allows it (keeps both v7x cores busy)
    if B >= 32 and tb >= B:
        tb = ((pl.cdiv(B, 2) + 15) // 16) * 16
    return max(tb, 16)


_BUFFERED_SINGLE = pl.Buffered(1) if hasattr(pl, "Buffered") else None


def critic_forward(obs, action, packed):
    """obs: [B, C, H, W] (NCHW), action: [B, A]. Returns (q1, q2), each [B, 1]."""
    B = obs.shape[0]
    obs_flat = obs.reshape(B, -1)  # ViewFlatten (row-major, matches torch .view)
    repr_dim = obs_flat.shape[1]
    A = action.shape[1]

    wt, w0h, w0a, w11, w21, wq2, sp = packed
    F = wt.shape[1]
    H = w0h.shape[1] // 2
    weights = (wt, w0h, w0a, w11, w21, wq2, sp)
    weight_bytes = sum(int(w.size) * w.dtype.itemsize for w in weights)

    vmem_limit = _vmem_limit_bytes()
    TB = _pick_batch_tile(B, repr_dim, A, F, H,
                          jnp.dtype(obs_flat.dtype).itemsize, weight_bytes,
                          vmem_limit)
    B_pad = pl.cdiv(B, TB) * TB
    pad = B_pad - B
    # No wrapper-side dtype cast of obs: the bf16 cast happens on-chip, so obs
    # is read from HBM exactly once (the pad is a no-op when B % TB == 0).
    obs_f = jnp.pad(obs_flat, ((0, pad), (0, 0))) if pad else obs_flat
    act_f = jnp.pad(action, ((0, pad), (0, 0))) if pad else action

    cost = pl.CostEstimate(
        flops=int(2 * B_pad * (repr_dim * F + (F + A) * 2 * H + 2 * H * H + 2 * H * 2)),
        transcendentals=int(B_pad * F),
        bytes_accessed=int(B_pad * repr_dim * jnp.dtype(obs_f.dtype).itemsize
                           + B_pad * (A + 2) * 4 + weight_bytes),
    )

    def build(weight_pipeline_mode):
        def resident(a):  # grid-invariant weights stay resident across grid steps
            if weight_pipeline_mode is None:
                return pl.BlockSpec(a.shape, lambda i: (0, 0))
            return pl.BlockSpec(a.shape, lambda i: (0, 0),
                                pipeline_mode=weight_pipeline_mode)

        return pl.pallas_call(
            critic_kernel,
            out_shape=jax.ShapeDtypeStruct((B_pad, 2), jnp.float32),
            grid=(B_pad // TB,),
            in_specs=[
                pl.BlockSpec((TB, repr_dim), lambda i: (i, 0)),   # obs tile (pipelined)
                pl.BlockSpec((TB, A), lambda i: (i, 0)),          # action tile
                resident(wt), resident(w0h), resident(w0a),
                resident(w11), resident(w21), resident(wq2), resident(sp),
            ],
            out_specs=pl.BlockSpec((TB, 2), lambda i: (i, 0)),
            compiler_params=pltpu.CompilerParams(
                dimension_semantics=("parallel",),
                vmem_limit_bytes=vmem_limit,
            ),
            cost_estimate=cost,
        )

    try:
        # grid-invariant weights single-buffered: halves their VMEM footprint
        q = build(_BUFFERED_SINGLE)(obs_f, act_f, *weights)
    except Exception:
        # fallback: default double-buffering (still correct, slightly more VMEM)
        q = build(None)(obs_f, act_f, *weights)

    return q[:B, 0:1], q[:B, 1:2]


# ------------------------------ parameters -----------------------------------

def init_params(key, repr_dim, action_dim, feature_dim, hidden_dim):
    """Deterministic synthetic parameters (shapes match the nn.Module __init__)."""
    # TODO(synk): utils.rl.weight_init_rl (orthogonal init) not replicated; synthetic
    # normal init is used — forward-pass semantics are unaffected.
    ks = jax.random.split(key, 8)
    f32 = jnp.float32

    def lin(k, fan_in, fan_out, scale=0.05):
        return (jax.random.normal(k, (fan_in, fan_out), f32) * scale,
                jnp.zeros((1, fan_out), f32))

    def ln(dim):
        return jnp.ones((1, dim), f32), jnp.zeros((1, dim), f32)

    wt, bt = lin(ks[0], repr_dim, feature_dim)
    gt, bet = ln(feature_dim)
    w10, b10 = lin(ks[1], feature_dim + action_dim, hidden_dim)
    g10, be10 = ln(hidden_dim)
    w11, b11 = lin(ks[2], hidden_dim, hidden_dim)
    g11, be11 = ln(hidden_dim)
    w1q, b1q = lin(ks[3], hidden_dim, 1)
    w20, b20 = lin(ks[4], feature_dim + action_dim, hidden_dim)
    g20, be20 = ln(hidden_dim)
    w21, b21 = lin(ks[5], hidden_dim, hidden_dim)
    g21, be21 = ln(hidden_dim)
    w2q, b2q = lin(ks[6], hidden_dim, 1)

    return dict(wt=wt, bt=bt, gt=gt, bet=bet,
                w10=w10, b10=b10, g10=g10, be10=be10,
                w11=w11, b11=b11, g11=g11, be11=be11, w1q=w1q, b1q=b1q,
                w20=w20, b20=b20, g20=g20, be20=be20,
                w21=w21, b21=b21, g21=g21, be21=be21, w2q=w2q, b2q=b2q)


def pack_params(p, feature_dim, hidden_dim):
    """Fuse the two Q branches, bf16-cast MXU weights ONCE, pack small vectors."""
    F, H = feature_dim, hidden_dim
    H2 = 2 * H
    bf16 = jnp.bfloat16

    wt = p["wt"].astype(bf16)                                                   # [R, F]
    # layer-0 weights, split h-part / action-part and fused across branches
    w0h = jnp.concatenate([p["w10"][:F], p["w20"][:F]], axis=1).astype(bf16)    # [F, 2H]
    w0a = jnp.concatenate([p["w10"][F:], p["w20"][F:]], axis=1).astype(bf16)    # [A, 2H]
    w11 = p["w11"].astype(bf16)                                                 # [H, H]
    w21 = p["w21"].astype(bf16)                                                 # [H, H]
    # block-diagonal head so both Q heads are one matmul: [[w1q, 0], [0, w2q]]
    zq = jnp.zeros_like(p["w1q"])
    wq2 = jnp.concatenate([jnp.concatenate([p["w1q"], zq], axis=1),
                           jnp.concatenate([zq, p["w2q"]], axis=1)],
                          axis=0).astype(bf16)                                  # [2H, 2]

    P = ((max(F, H2, 2) + 127) // 128) * 128

    def row(v):
        v = jnp.ravel(v).astype(jnp.float32)
        return jnp.pad(v, (0, P - v.shape[0]))

    sp = jnp.stack([
        row(p["bt"]), row(p["gt"]), row(p["bet"]),
        row(jnp.concatenate([p["b10"], p["b20"]], axis=-1)),
        row(jnp.concatenate([p["g10"], p["g20"]], axis=-1)),
        row(jnp.concatenate([p["be10"], p["be20"]], axis=-1)),
        row(jnp.concatenate([p["b11"], p["b21"]], axis=-1)),
        row(jnp.concatenate([p["g11"], p["g21"]], axis=-1)),
        row(jnp.concatenate([p["be11"], p["be21"]], axis=-1)),
        row(jnp.concatenate([p["b1q"], p["b2q"]], axis=-1)),
    ], axis=0)                                                                  # [10, P]
    return (wt, w0h, w0a, w11, w21, wq2, sp)


def reference_forward(obs, action, p):
    """Pure-JAX f32 reference of the same forward pass."""
    B = obs.shape[0]
    x = obs.reshape(B, -1)
    h = jnp.tanh(_layernorm(x @ p["wt"] + p["bt"], p["gt"], p["bet"]))
    ha = jnp.concatenate([h, action], axis=-1)

    def q(w0, b0, g0, be0, w1, b1, g1, be1, wq, bq):
        y = jnp.maximum(_layernorm(ha @ w0 + b0, g0, be0), 0.0)
        y = jnp.maximum(_layernorm(y @ w1 + b1, g1, be1), 0.0)
        return y @ wq + bq

    q1 = q(p["w10"], p["b10"], p["g10"], p["be10"],
           p["w11"], p["b11"], p["g11"], p["be11"], p["w1q"], p["b1q"])
    q2 = q(p["w20"], p["b20"], p["g20"], p["be20"],
           p["w21"], p["b21"], p["g21"], p["be21"], p["w2q"], p["b2q"])
    return q1, q2


if __name__ == "__main__":
    # Small shapes consistent with the module: obs [B, C, H, W] -> repr_dim = C*H*W
    B, C, Hs, Ws = 2, 4, 16, 16
    repr_dim = C * Hs * Ws        # 1024
    action_dim = 6
    feature_dim = 32
    hidden_dim = 32

    key = jax.random.PRNGKey(0)
    k_obs, k_act, k_par = jax.random.split(key, 3)
    obs = jax.random.normal(k_obs, (B, C, Hs, Ws), jnp.float32)
    action = jax.random.normal(k_act, (B, action_dim), jnp.float32)

    full = init_params(k_par, repr_dim, action_dim, feature_dim, hidden_dim)
    packed = pack_params(full, feature_dim, hidden_dim)

    q1, q2 = critic_forward(obs, action, packed)
    q1 = jax.block_until_ready(q1)
    q2 = jax.block_until_ready(q2)

    # sanity check against a pure-JAX f32 reference (kernel uses bf16 MXU inputs
    # with f32 accumulation -> ~1e-2 relative error expected)
    r1, r2 = reference_forward(obs, action, full)
    assert q1.shape == (B, 1) and q2.shape == (B, 1)
    assert jnp.allclose(q1, r1, rtol=3e-2, atol=3e-2)
    assert jnp.allclose(q2, r2, rtol=3e-2, atol=3e-2)

    print("KERNEL_OK")
</pallas_src>

<mosaic_0001>
module attributes {stable_mosaic.version = 11 : i64} {
  func.func @critic_kernel(%arg0: i32, %arg1: memref<16x1024xf32, #tpu.memory_space<vmem>>, %arg2: memref<16x6xf32, #tpu.memory_space<vmem>>, %arg3: memref<1024x32xbf16, #tpu.memory_space<vmem>>, %arg4: memref<32x64xbf16, #tpu.memory_space<vmem>>, %arg5: memref<6x64xbf16, #tpu.memory_space<vmem>>, %arg6: memref<32x32xbf16, #tpu.memory_space<vmem>>, %arg7: memref<32x32xbf16, #tpu.memory_space<vmem>>, %arg8: memref<64x2xbf16, #tpu.memory_space<vmem>>, %arg9: memref<10x128xf32, #tpu.memory_space<vmem>>, %arg10: memref<16x2xf32, #tpu.memory_space<vmem>>) attributes {dimension_semantics = [#tpu.dimension_semantics<parallel>], iteration_bounds = array<i64: 1>, scalar_prefetch = 0 : i64, scratch_operands = 0 : i64, tpu.core_type = #tpu.core_type<tc>, window_params = [{transform_indices = @transform_0, window_bounds = array<i64: 16, 1024>}, {transform_indices = @transform_1, window_bounds = array<i64: 16, 6>}, {pipeline_mode = #tpu.pipeline_mode<synchronous>, transform_indices = @transform_2, window_bounds = array<i64: 1024, 32>}, {pipeline_mode = #tpu.pipeline_mode<synchronous>, transform_indices = @transform_3, window_bounds = array<i64: 32, 64>}, {pipeline_mode = #tpu.pipeline_mode<synchronous>, transform_indices = @transform_4, window_bounds = array<i64: 6, 64>}, {pipeline_mode = #tpu.pipeline_mode<synchronous>, transform_indices = @transform_5, window_bounds = array<i64: 32, 32>}, {pipeline_mode = #tpu.pipeline_mode<synchronous>, transform_indices = @transform_6, window_bounds = array<i64: 32, 32>}, {pipeline_mode = #tpu.pipeline_mode<synchronous>, transform_indices = @transform_7, window_bounds = array<i64: 64, 2>}, {pipeline_mode = #tpu.pipeline_mode<synchronous>, transform_indices = @transform_8, window_bounds = array<i64: 10, 128>}, {transform_indices = @transform_9, window_bounds = array<i64: 16, 2>}]} {
    %c0 = arith.constant 0 : index
    %c0_0 = arith.constant 0 : index
    %0 = vector.load %arg9[%c0, %c0_0] : memref<10x128xf32, #tpu.memory_space<vmem>>, vector<10x128xf32>
    %1 = vector.extract_strided_slice %0 {offsets = [0, 0], sizes = [1, 32], strides = [1, 1]} : vector<10x128xf32> to vector<1x32xf32>
    %2 = vector.extract_strided_slice %0 {offsets = [1, 0], sizes = [1, 32], strides = [1, 1]} : vector<10x128xf32> to vector<1x32xf32>
    %3 = vector.extract_strided_slice %0 {offsets = [2, 0], sizes = [1, 32], strides = [1, 1]} : vector<10x128xf32> to vector<1x32xf32>
    %4 = vector.extract_strided_slice %0 {offsets = [3, 0], sizes = [1, 64], strides = [1, 1]} : vector<10x128xf32> to vector<1x64xf32>
    %5 = vector.extract_strided_slice %0 {offsets = [4, 0], sizes = [1, 64], strides = [1, 1]} : vector<10x128xf32> to vector<1x64xf32>
    %6 = vector.extract_strided_slice %0 {offsets = [5, 0], sizes = [1, 64], strides = [1, 1]} : vector<10x128xf32> to vector<1x64xf32>
    %7 = vector.extract_strided_slice %0 {offsets = [6, 0], sizes = [1, 64], strides = [1, 1]} : vector<10x128xf32> to vector<1x64xf32>
    %8 = vector.extract_strided_slice %0 {offsets = [7, 0], sizes = [1, 64], strides = [1, 1]} : vector<10x128xf32> to vector<1x64xf32>
    %9 = vector.extract_strided_slice %0 {offsets = [8, 0], sizes = [1, 64], strides = [1, 1]} : vector<10x128xf32> to vector<1x64xf32>
    %10 = vector.extract_strided_slice %0 {offsets = [9, 0], sizes = [1, 2], strides = [1, 1]} : vector<10x128xf32> to vector<1x2xf32>
    %c0_1 = arith.constant 0 : index
    %c0_2 = arith.constant 0 : index
    %11 = vector.load %arg1[%c0_1, %c0_2] : memref<16x1024xf32, #tpu.memory_space<vmem>>, vector<16x1024xf32>
    %12 = arith.truncf %11 : vector<16x1024xf32> to vector<16x1024xbf16>
    %c0_3 = arith.constant 0 : index
    %c0_4 = arith.constant 0 : index
    %13 = vector.load %arg3[%c0_3, %c0_4] : memref<1024x32xbf16, #tpu.memory_space<vmem>>, vector<1024x32xbf16>
    %cst = arith.constant dense<0.000000e+00> : vector<16x32xf32>
    %14 = tpu.matmul %12, %13, %cst {dimension_numbers = #tpu.dot_dimension_numbers<[1], [0], [0], [1], [0, 0, 1, 1], [], []>} : vector<16x1024xbf16>, vector<1024x32xbf16>, vector<16x32xf32> -> vector<16x32xf32>
    %15 = vector.broadcast %1 : vector<1x32xf32> to vector<16x32xf32>
    %16 = arith.addf %14, %15 : vector<16x32xf32>
    %cst_5 = arith.constant dense<0.000000e+00> : vector<16xf32>
    %17 = vector.multi_reduction <add>, %16, %cst_5 [1] : vector<16x32xf32> to vector<16xf32>
    %18 = vector.shape_cast %17 : vector<16xf32> to vector<16x1xf32>
    %cst_6 = arith.constant 3.200000e+01 : f32
    %19 = vector.broadcast %cst_6 : f32 to vector<16x1xf32>
    %20 = arith.divf %18, %19 : vector<16x1xf32>
    %21 = vector.broadcast %20 : vector<16x1xf32> to vector<16x32xf32>
    %22 = arith.subf %16, %21 : vector<16x32xf32>
    %23 = arith.mulf %22, %22 : vector<16x32xf32>
    %cst_7 = arith.constant dense<0.000000e+00> : vector<16xf32>
    %24 = vector.multi_reduction <add>, %23, %cst_7 [1] : vector<16x32xf32> to vector<16xf32>
    %25 = vector.shape_cast %24 : vector<16xf32> to vector<16x1xf32>
    %cst_8 = arith.constant 3.200000e+01 : f32
    %26 = vector.broadcast %cst_8 : f32 to vector<16x1xf32>
    %27 = arith.divf %25, %26 : vector<16x1xf32>
    %28 = vector.broadcast %20 : vector<16x1xf32> to vector<16x32xf32>
    %29 = arith.subf %16, %28 : vector<16x32xf32>
    %cst_9 = arith.constant 9.99999974E-6 : f32
    %30 = vector.broadcast %cst_9 : f32 to vector<16x1xf32>
    %31 = arith.addf %27, %30 : vector<16x1xf32>
    %32 = math.rsqrt %31 : vector<16x1xf32>
    %33 = vector.broadcast %32 : vector<16x1xf32> to vector<16x32xf32>
    %34 = arith.mulf %29, %33 : vector<16x32xf32>
    %35 = vector.broadcast %2 : vector<1x32xf32> to vector<16x32xf32>
    %36 = arith.mulf %34, %35 : vector<16x32xf32>
    %37 = vector.broadcast %3 : vector<1x32xf32> to vector<16x32xf32>
    %38 = arith.addf %36, %37 : vector<16x32xf32>
    %39 = math.tanh %38 : vector<16x32xf32>
    %c0_10 = arith.constant 0 : index
    %c0_11 = arith.constant 0 : index
    %40 = vector.load %arg2[%c0_10, %c0_11] : memref<16x6xf32, #tpu.memory_space<vmem>>, vector<16x6xf32>
    %41 = arith.truncf %40 : vector<16x6xf32> to vector<16x6xbf16>
    %42 = arith.truncf %39 : vector<16x32xf32> to vector<16x32xbf16>
    %c0_12 = arith.constant 0 : index
    %c0_13 = arith.constant 0 : index
    %43 = vector.load %arg4[%c0_12, %c0_13] : memref<32x64xbf16, #tpu.memory_space<vmem>>, vector<32x64xbf16>
    %cst_14 = arith.constant dense<0.000000e+00> : vector<16x64xf32>
    %44 = tpu.matmul %42, %43, %cst_14 {dimension_numbers = #tpu.dot_dimension_numbers<[1], [0], [0], [1], [0, 0, 1, 1], [], []>} : vector<16x32xbf16>, vector<32x64xbf16>, vector<16x64xf32> -> vector<16x64xf32>
    %c0_15 = arith.constant 0 : index
    %c0_16 = arith.constant 0 : index
    %45 = vector.load %arg5[%c0_15, %c0_16] : memref<6x64xbf16, #tpu.memory_space<vmem>>, vector<6x64xbf16>
    %cst_17 = arith.constant dense<0.000000e+00> : vector<16x64xf32>
    %46 = tpu.matmul %41, %45, %cst_17 {dimension_numbers = #tpu.dot_dimension_numbers<[1], [0], [0], [1], [0, 0, 1, 1], [], []>} : vector<16x6xbf16>, vector<6x64xbf16>, vector<16x64xf32> -> vector<16x64xf32>
    %47 = arith.addf %44, %46 : vector<16x64xf32>
    %48 = vector.broadcast %4 : vector<1x64xf32> to vector<16x64xf32>
    %49 = arith.addf %47, %48 : vector<16x64xf32>
    %50 = vector.extract_strided_slice %49 {offsets = [0, 0], sizes = [16, 32], strides = [1, 1]} : vector<16x64xf32> to vector<16x32xf32>
    %51 = vector.extract_strided_slice %5 {offsets = [0, 0], sizes = [1, 32], strides = [1, 1]} : vector<1x64xf32> to vector<1x32xf32>
    %52 = vector.extract_strided_slice %6 {offsets = [0, 0], sizes = [1, 32], strides = [1, 1]} : vector<1x64xf32> to vector<1x32xf32>
    %cst_18 = arith.constant dense<0.000000e+00> : vector<16xf32>
    %53 = vector.multi_reduction <add>, %50, %cst_18 [1] : vector<16x32xf32> to vector<16xf32>
    %54 = vector.shape_cast %53 : vector<16xf32> to vector<16x1xf32>
    %cst_19 = arith.constant 3.200000e+01 : f32
    %55 = vector.broadcast %cst_19 : f32 to vector<16x1xf32>
    %56 = arith.divf %54, %55 : vector<16x1xf32>
    %57 = vector.broadcast %56 : vector<16x1xf32> to vector<16x32xf32>
    %58 = arith.subf %50, %57 : vector<16x32xf32>
    %59 = arith.mulf %58, %58 : vector<16x32xf32>
    %cst_20 = arith.constant dense<0.000000e+00> : vector<16xf32>
    %60 = vector.multi_reduction <add>, %59, %cst_20 [1] : vector<16x32xf32> to vector<16xf32>
    %61 = vector.shape_cast %60 : vector<16xf32> to vector<16x1xf32>
    %cst_21 = arith.constant 3.200000e+01 : f32
    %62 = vector.broadcast %cst_21 : f32 to vector<16x1xf32>
    %63 = arith.divf %61, %62 : vector<16x1xf32>
    %64 = vector.broadcast %56 : vector<16x1xf32> to vector<16x32xf32>
    %65 = arith.subf %50, %64 : vector<16x32xf32>
    %cst_22 = arith.constant 9.99999974E-6 : f32
    %66 = vector.broadcast %cst_22 : f32 to vector<16x1xf32>
    %67 = arith.addf %63, %66 : vector<16x1xf32>
    %68 = math.rsqrt %67 : vector<16x1xf32>
    %69 = vector.broadcast %68 : vector<16x1xf32> to vector<16x32xf32>
    %70 = arith.mulf %65, %69 : vector<16x32xf32>
    %71 = vector.broadcast %51 : vector<1x32xf32> to vector<16x32xf32>
    %72 = arith.mulf %70, %71 : vector<16x32xf32>
    %73 = vector.broadcast %52 : vector<1x32xf32> to vector<16x32xf32>
    %74 = arith.addf %72, %73 : vector<16x32xf32>
    %cst_23 = arith.constant 0.000000e+00 : f32
    %75 = vector.broadcast %cst_23 : f32 to vector<16x32xf32>
    %76 = arith.maximumf %74, %75 : vector<16x32xf32>
    %77 = vector.extract_strided_slice %49 {offsets = [0, 32], sizes = [16, 32], strides = [1, 1]} : vector<16x64xf32> to vector<16x32xf32>
    %78 = vector.extract_strided_slice %5 {offsets = [0, 32], sizes = [1, 32], strides = [1, 1]} : vector<1x64xf32> to vector<1x32xf32>
    %79 = vector.extract_strided_slice %6 {offsets = [0, 32], sizes = [1, 32], strides = [1, 1]} : vector<1x64xf32> to vector<1x32xf32>
    %cst_24 = arith.constant dense<0.000000e+00> : vector<16xf32>
    %80 = vector.multi_reduction <add>, %77, %cst_24 [1] : vector<16x32xf32> to vector<16xf32>
    %81 = vector.shape_cast %80 : vector<16xf32> to vector<16x1xf32>
    %cst_25 = arith.constant 3.200000e+01 : f32
    %82 = vector.broadcast %cst_25 : f32 to vector<16x1xf32>
    %83 = arith.divf %81, %82 : vector<16x1xf32>
    %84 = vector.broadcast %83 : vector<16x1xf32> to vector<16x32xf32>
    %85 = arith.subf %77, %84 : vector<16x32xf32>
    %86 = arith.mulf %85, %85 : vector<16x32xf32>
    %cst_26 = arith.constant dense<0.000000e+00> : vector<16xf32>
    %87 = vector.multi_reduction <add>, %86, %cst_26 [1] : vector<16x32xf32> to vector<16xf32>
    %88 = vector.shape_cast %87 : vector<16xf32> to vector<16x1xf32>
    %cst_27 = arith.constant 3.200000e+01 : f32
    %89 = vector.broadcast %cst_27 : f32 to vector<16x1xf32>
    %90 = arith.divf %88, %89 : vector<16x1xf32>
    %91 = vector.broadcast %83 : vector<16x1xf32> to vector<16x32xf32>
    %92 = arith.subf %77, %91 : vector<16x32xf32>
    %cst_28 = arith.constant 9.99999974E-6 : f32
    %93 = vector.broadcast %cst_28 : f32 to vector<16x1xf32>
    %94 = arith.addf %90, %93 : vector<16x1xf32>
    %95 = math.rsqrt %94 : vector<16x1xf32>
    %96 = vector.broadcast %95 : vector<16x1xf32> to vector<16x32xf32>
    %97 = arith.mulf %92, %96 : vector<16x32xf32>
    %98 = vector.broadcast %78 : vector<1x32xf32> to vector<16x32xf32>
    %99 = arith.mulf %97, %98 : vector<16x32xf32>
    %100 = vector.broadcast %79 : vector<1x32xf32> to vector<16x32xf32>
    %101 = arith.addf %99, %100 : vector<16x32xf32>
    %cst_29 = arith.constant 0.000000e+00 : f32
    %102 = vector.broadcast %cst_29 : f32 to vector<16x32xf32>
    %103 = arith.maximumf %101, %102 : vector<16x32xf32>
    %104 = arith.truncf %76 : vector<16x32xf32> to vector<16x32xbf16>
    %c0_30 = arith.constant 0 : index
    %c0_31 = arith.constant 0 : index
    %105 = vector.load %arg6[%c0_30, %c0_31] : memref<32x32xbf16, #tpu.memory_space<vmem>>, vector<32x32xbf16>
    %cst_32 = arith.constant dense<0.000000e+00> : vector<16x32xf32>
    %106 = tpu.matmul %104, %105, %cst_32 {dimension_numbers = #tpu.dot_dimension_numbers<[1], [0], [0], [1], [0, 0, 1, 1], [], []>} : vector<16x32xbf16>, vector<32x32xbf16>, vector<16x32xf32> -> vector<16x32xf32>
    %107 = vector.extract_strided_slice %7 {offsets = [0, 0], sizes = [1, 32], strides = [1, 1]} : vector<1x64xf32> to vector<1x32xf32>
    %108 = vector.broadcast %107 : vector<1x32xf32> to vector<16x32xf32>
    %109 = arith.addf %106, %108 : vector<16x32xf32>
    %110 = vector.extract_strided_slice %8 {offsets = [0, 0], sizes = [1, 32], strides = [1, 1]} : vector<1x64xf32> to vector<1x32xf32>
    %111 = vector.extract_strided_slice %9 {offsets = [0, 0], sizes = [1, 32], strides = [1, 1]} : vector<1x64xf32> to vector<1x32xf32>
    %cst_33 = arith.constant dense<0.000000e+00> : vector<16xf32>
    %112 = vector.multi_reduction <add>, %109, %cst_33 [1] : vector<16x32xf32> to vector<16xf32>
    %113 = vector.shape_cast %112 : vector<16xf32> to vector<16x1xf32>
    %cst_34 = arith.constant 3.200000e+01 : f32
    %114 = vector.broadcast %cst_34 : f32 to vector<16x1xf32>
    %115 = arith.divf %113, %114 : vector<16x1xf32>
    %116 = vector.broadcast %115 : vector<16x1xf32> to vector<16x32xf32>
    %117 = arith.subf %109, %116 : vector<16x32xf32>
    %118 = arith.mulf %117, %117 : vector<16x32xf32>
    %cst_35 = arith.constant dense<0.000000e+00> : vector<16xf32>
    %119 = vector.multi_reduction <add>, %118, %cst_35 [1] : vector<16x32xf32> to vector<16xf32>
    %120 = vector.shape_cast %119 : vector<16xf32> to vector<16x1xf32>
    %cst_36 = arith.constant 3.200000e+01 : f32
    %121 = vector.broadcast %cst_36 : f32 to vector<16x1xf32>
    %122 = arith.divf %120, %121 : vector<16x1xf32>
    %123 = vector.broadcast %115 : vector<16x1xf32> to vector<16x32xf32>
    %124 = arith.subf %109, %123 : vector<16x32xf32>
    %cst_37 = arith.constant 9.99999974E-6 : f32
    %125 = vector.broadcast %cst_37 : f32 to vector<16x1xf32>
    %126 = arith.addf %122, %125 : vector<16x1xf32>
    %127 = math.rsqrt %126 : vector<16x1xf32>
    %128 = vector.broadcast %127 : vector<16x1xf32> to vector<16x32xf32>
    %129 = arith.mulf %124, %128 : vector<16x32xf32>
    %130 = vector.broadcast %110 : vector<1x32xf32> to vector<16x32xf32>
    %131 = arith.mulf %129, %130 : vector<16x32xf32>
    %132 = vector.broadcast %111 : vector<1x32xf32> to vector<16x32xf32>
    %133 = arith.addf %131, %132 : vector<16x32xf32>
    %cst_38 = arith.constant 0.000000e+00 : f32
    %134 = vector.broadcast %cst_38 : f32 to vector<16x32xf32>
    %135 = arith.maximumf %133, %134 : vector<16x32xf32>
    %136 = arith.truncf %103 : vector<16x32xf32> to vector<16x32xbf16>
    %c0_39 = arith.constant 0 : index
    %c0_40 = arith.constant 0 : index
    %137 = vector.load %arg7[%c0_39, %c0_40] : memref<32x32xbf16, #tpu.memory_space<vmem>>, vector<32x32xbf16>
    %cst_41 = arith.constant dense<0.000000e+00> : vector<16x32xf32>
    %138 = tpu.matmul %136, %137, %cst_41 {dimension_numbers = #tpu.dot_dimension_numbers<[1], [0], [0], [1], [0, 0, 1, 1], [], []>} : vector<16x32xbf16>, vector<32x32xbf16>, vector<16x32xf32> -> vector<16x32xf32>
    %139 = vector.extract_strided_slice %7 {offsets = [0, 32], sizes = [1, 32], strides = [1, 1]} : vector<1x64xf32> to vector<1x32xf32>
    %140 = vector.broadcast %139 : vector<1x32xf32> to vector<16x32xf32>
    %141 = arith.addf %138, %140 : vector<16x32xf32>
    %142 = vector.extract_strided_slice %8 {offsets = [0, 32], sizes = [1, 32], strides = [1, 1]} : vector<1x64xf32> to vector<1x32xf32>
    %143 = vector.extract_strided_slice %9 {offsets = [0, 32], sizes = [1, 32], strides = [1, 1]} : vector<1x64xf32> to vector<1x32xf32>
    %cst_42 = arith.constant dense<0.000000e+00> : vector<16xf32>
    %144 = vector.multi_reduction <add>, %141, %cst_42 [1] : vector<16x32xf32> to vector<16xf32>
    %145 = vector.shape_cast %144 : vector<16xf32> to vector<16x1xf32>
    %cst_43 = arith.constant 3.200000e+01 : f32
    %146 = vector.broadcast %cst_43 : f32 to vector<16x1xf32>
    %147 = arith.divf %145, %146 : vector<16x1xf32>
    %148 = vector.broadcast %147 : vector<16x1xf32> to vector<16x32xf32>
    %149 = arith.subf %141, %148 : vector<16x32xf32>
    %150 = arith.mulf %149, %149 : vector<16x32xf32>
    %cst_44 = arith.constant dense<0.000000e+00> : vector<16xf32>
    %151 = vector.multi_reduction <add>, %150, %cst_44 [1] : vector<16x32xf32> to vector<16xf32>
    %152 = vector.shape_cast %151 : vector<16xf32> to vector<16x1xf32>
    %cst_45 = arith.constant 3.200000e+01 : f32
    %153 = vector.broadcast %cst_45 : f32 to vector<16x1xf32>
    %154 = arith.divf %152, %153 : vector<16x1xf32>
    %155 = vector.broadcast %147 : vector<16x1xf32> to vector<16x32xf32>
    %156 = arith.subf %141, %155 : vector<16x32xf32>
    %cst_46 = arith.constant 9.99999974E-6 : f32
    %157 = vector.broadcast %cst_46 : f32 to vector<16x1xf32>
    %158 = arith.addf %154, %157 : vector<16x1xf32>
    %159 = math.rsqrt %158 : vector<16x1xf32>
    %160 = vector.broadcast %159 : vector<16x1xf32> to vector<16x32xf32>
    %161 = arith.mulf %156, %160 : vector<16x32xf32>
    %162 = vector.broadcast %142 : vector<1x32xf32> to vector<16x32xf32>
    %163 = arith.mulf %161, %162 : vector<16x32xf32>
    %164 = vector.broadcast %143 : vector<1x32xf32> to vector<16x32xf32>
    %165 = arith.addf %163, %164 : vector<16x32xf32>
    %cst_47 = arith.constant 0.000000e+00 : f32
    %166 = vector.broadcast %cst_47 : f32 to vector<16x32xf32>
    %167 = arith.maximumf %165, %166 : vector<16x32xf32>
    %168 = tpu.concatenate %135, %167 in 1 : vector<16x32xf32>, vector<16x32xf32> -> vector<16x64xf32>
    %169 = arith.truncf %168 : vector<16x64xf32> to vector<16x64xbf16>
    %c0_48 = arith.constant 0 : index
    %c0_49 = arith.constant 0 : index
    %170 = vector.load %arg8[%c0_48, %c0_49] : memref<64x2xbf16, #tpu.memory_space<vmem>>, vector<64x2xbf16>
    %cst_50 = arith.constant dense<0.000000e+00> : vector<16x2xf32>
    %171 = tpu.matmul %169, %170, %cst_50 {dimension_numbers = #tpu.dot_dimension_numbers<[1], [0], [0], [1], [0, 0, 1, 1], [], []>} : vector<16x64xbf16>, vector<64x2xbf16>, vector<16x2xf32> -> vector<16x2xf32>
    %172 = vector.broadcast %10 : vector<1x2xf32> to vector<16x2xf32>
    %173 = arith.addf %171, %172 : vector<16x2xf32>
    %c0_51 = arith.constant 0 : index
    %c0_52 = arith.constant 0 : index
    %174 = vector.load %arg10[%c0_51, %c0_52] : memref<16x2xf32, #tpu.memory_space<vmem>>, vector<16x2xf32>
    tpu.vector_store %arg10[%c0_51, %c0_52], %173 {strides = array<i32>} : memref<16x2xf32, #tpu.memory_space<vmem>>, vector<16x2xf32>,
    return
  }
  func.func @transform_0(%arg0: i32) -> (i32, i32) {
    %c0_i32 = arith.constant 0 : i32
    %c0_i32_0 = arith.constant 0 : i32
    return %arg0, %c0_i32 : i32, i32
  }
  func.func @transform_1(%arg0: i32) -> (i32, i32) {
    %c0_i32 = arith.constant 0 : i32
    %c0_i32_0 = arith.constant 0 : i32
    return %arg0, %c0_i32 : i32, i32
  }
  func.func @transform_2(%arg0: i32) -> (i32, i32) {
    %c0_i32 = arith.constant 0 : i32
    %c0_i32_0 = arith.constant 0 : i32
    %c0_i32_1 = arith.constant 0 : i32
    return %c0_i32, %c0_i32_0 : i32, i32
  }
  func.func @transform_3(%arg0: i32) -> (i32, i32) {
    %c0_i32 = arith.constant 0 : i32
    %c0_i32_0 = arith.constant 0 : i32
    %c0_i32_1 = arith.constant 0 : i32
    return %c0_i32, %c0_i32_0 : i32, i32
  }
  func.func @transform_4(%arg0: i32) -> (i32, i32) {
    %c0_i32 = arith.constant 0 : i32
    %c0_i32_0 = arith.constant 0 : i32
    %c0_i32_1 = arith.constant 0 : i32
    return %c0_i32, %c0_i32_0 : i32, i32
  }
  func.func @transform_5(%arg0: i32) -> (i32, i32) {
    %c0_i32 = arith.constant 0 : i32
    %c0_i32_0 = arith.constant 0 : i32
    %c0_i32_1 = arith.constant 0 : i32
    return %c0_i32, %c0_i32_0 : i32, i32
  }
  func.func @transform_6(%arg0: i32) -> (i32, i32) {
    %c0_i32 = arith.constant 0 : i32
    %c0_i32_0 = arith.constant 0 : i32
    %c0_i32_1 = arith.constant 0 : i32
    return %c0_i32, %c0_i32_0 : i32, i32
  }
  func.func @transform_7(%arg0: i32) -> (i32, i32) {
    %c0_i32 = arith.constant 0 : i32
    %c0_i32_0 = arith.constant 0 : i32
    %c0_i32_1 = arith.constant 0 : i32
    return %c0_i32, %c0_i32_0 : i32, i32
  }
  func.func @transform_8(%arg0: i32) -> (i32, i32) {
    %c0_i32 = arith.constant 0 : i32
    %c0_i32_0 = arith.constant 0 : i32
    %c0_i32_1 = arith.constant 0 : i32
    return %c0_i32, %c0_i32_0 : i32, i32
  }
  func.func @transform_9(%arg0: i32) -> (i32, i32) {
    %c0_i32 = arith.constant 0 : i32
    %c0_i32_0 = arith.constant 0 : i32
    return %arg0, %c0_i32 : i32, i32
  }
}

module attributes {stable_mosaic.version = 11 : i64} {
  func.func @critic_kernel(%arg0: i32, %arg1: memref<16x1024xf32, #tpu.memory_space<vmem>>, %arg2: memref<16x6xf32, #tpu.memory_space<vmem>>, %arg3: memref<1024x32xbf16, #tpu.memory_space<vmem>>, %arg4: memref<32x64xbf16, #tpu.memory_space<vmem>>, %arg5: memref<6x64xbf16, #tpu.memory_space<vmem>>, %arg6: memref<32x32xbf16, #tpu.memory_space<vmem>>, %arg7: memref<32x32xbf16, #tpu.memory_space<vmem>>, %arg8: memref<64x2xbf16, #tpu.memory_space<vmem>>, %arg9: memref<10x128xf32, #tpu.memory_space<vmem>>, %arg10: memref<16x2xf32, #tpu.memory_space<vmem>>) attributes {dimension_semantics = [#tpu.dimension_semantics<parallel>], iteration_bounds = array<i64: 1>, scalar_prefetch = 0 : i64, scratch_operands = 0 : i64, tpu.core_type = #tpu.core_type<tc>, window_params = [{transform_indices = @transform_0, window_bounds = array<i64: 16, 1024>}, {transform_indices = @transform_1, window_bounds = array<i64: 16, 6>}, {pipeline_mode = #tpu.pipeline_mode<synchronous>, transform_indices = @transform_2, window_bounds = array<i64: 1024, 32>}, {pipeline_mode = #tpu.pipeline_mode<synchronous>, transform_indices = @transform_3, window_bounds = array<i64: 32, 64>}, {pipeline_mode = #tpu.pipeline_mode<synchronous>, transform_indices = @transform_4, window_bounds = array<i64: 6, 64>}, {pipeline_mode = #tpu.pipeline_mode<synchronous>, transform_indices = @transform_5, window_bounds = array<i64: 32, 32>}, {pipeline_mode = #tpu.pipeline_mode<synchronous>, transform_indices = @transform_6, window_bounds = array<i64: 32, 32>}, {pipeline_mode = #tpu.pipeline_mode<synchronous>, transform_indices = @transform_7, window_bounds = array<i64: 64, 2>}, {pipeline_mode = #tpu.pipeline_mode<synchronous>, transform_indices = @transform_8, window_bounds = array<i64: 10, 128>}, {transform_indices = @transform_9, window_bounds = array<i64: 16, 2>}]} {
    %c0 = arith.constant 0 : index
    %c0_0 = arith.constant 0 : index
    %0 = vector.load %arg9[%c0, %c0_0] : memref<10x128xf32, #tpu.memory_space<vmem>>, vector<10x128xf32>
    %1 = vector.extract_strided_slice %0 {offsets = [0, 0], sizes = [1, 32], strides = [1, 1]} : vector<10x128xf32> to vector<1x32xf32>
    %2 = vector.extract_strided_slice %0 {offsets = [1, 0], sizes = [1, 32], strides = [1, 1]} : vector<10x128xf32> to vector<1x32xf32>
    %3 = vector.extract_strided_slice %0 {offsets = [2, 0], sizes = [1, 32], strides = [1, 1]} : vector<10x128xf32> to vector<1x32xf32>
    %4 = vector.extract_strided_slice %0 {offsets = [3, 0], sizes = [1, 64], strides = [1, 1]} : vector<10x128xf32> to vector<1x64xf32>
    %5 = vector.extract_strided_slice %0 {offsets = [4, 0], sizes = [1, 64], strides = [1, 1]} : vector<10x128xf32> to vector<1x64xf32>
    %6 = vector.extract_strided_slice %0 {offsets = [5, 0], sizes = [1, 64], strides = [1, 1]} : vector<10x128xf32> to vector<1x64xf32>
    %7 = vector.extract_strided_slice %0 {offsets = [6, 0], sizes = [1, 64], strides = [1, 1]} : vector<10x128xf32> to vector<1x64xf32>
    %8 = vector.extract_strided_slice %0 {offsets = [7, 0], sizes = [1, 64], strides = [1, 1]} : vector<10x128xf32> to vector<1x64xf32>
    %9 = vector.extract_strided_slice %0 {offsets = [8, 0], sizes = [1, 64], strides = [1, 1]} : vector<10x128xf32> to vector<1x64xf32>
    %10 = vector.extract_strided_slice %0 {offsets = [9, 0], sizes = [1, 2], strides = [1, 1]} : vector<10x128xf32> to vector<1x2xf32>
    %c0_1 = arith.constant 0 : index
    %c0_2 = arith.constant 0 : index
    %11 = vector.load %arg1[%c0_1, %c0_2] : memref<16x1024xf32, #tpu.memory_space<vmem>>, vector<16x1024xf32>
    %12 = arith.truncf %11 : vector<16x1024xf32> to vector<16x1024xbf16>
    %c0_3 = arith.constant 0 : index
    %c0_4 = arith.constant 0 : index
    %13 = vector.load %arg3[%c0_3, %c0_4] : memref<1024x32xbf16, #tpu.memory_space<vmem>>, vector<1024x32xbf16>
    %cst = arith.constant dense<0.000000e+00> : vector<16x32xf32>
    %14 = tpu.matmul %12, %13, %cst {dimension_numbers = #tpu.dot_dimension_numbers<[1], [0], [0], [1], [0, 0, 1, 1], [], []>} : vector<16x1024xbf16>, vector<1024x32xbf16>, vector<16x32xf32> -> vector<16x32xf32>
    %15 = vector.broadcast %1 : vector<1x32xf32> to vector<16x32xf32>
    %16 = arith.addf %14, %15 : vector<16x32xf32>
    %cst_5 = arith.constant dense<0.000000e+00> : vector<16xf32>
    %17 = vector.multi_reduction <add>, %16, %cst_5 [1] : vector<16x32xf32> to vector<16xf32>
    %18 = vector.shape_cast %17 : vector<16xf32> to vector<16x1xf32>
    %cst_6 = arith.constant 3.200000e+01 : f32
    %19 = vector.broadcast %cst_6 : f32 to vector<16x1xf32>
    %20 = arith.divf %18, %19 : vector<16x1xf32>
    %21 = vector.broadcast %20 : vector<16x1xf32> to vector<16x32xf32>
    %22 = arith.subf %16, %21 : vector<16x32xf32>
    %23 = arith.mulf %22, %22 : vector<16x32xf32>
    %cst_7 = arith.constant dense<0.000000e+00> : vector<16xf32>
    %24 = vector.multi_reduction <add>, %23, %cst_7 [1] : vector<16x32xf32> to vector<16xf32>
    %25 = vector.shape_cast %24 : vector<16xf32> to vector<16x1xf32>
    %cst_8 = arith.constant 3.200000e+01 : f32
    %26 = vector.broadcast %cst_8 : f32 to vector<16x1xf32>
    %27 = arith.divf %25, %26 : vector<16x1xf32>
    %28 = vector.broadcast %20 : vector<16x1xf32> to vector<16x32xf32>
    %29 = arith.subf %16, %28 : vector<16x32xf32>
    %cst_9 = arith.constant 9.99999974E-6 : f32
    %30 = vector.broadcast %cst_9 : f32 to vector<16x1xf32>
    %31 = arith.addf %27, %30 : vector<16x1xf32>
    %32 = math.rsqrt %31 : vector<16x1xf32>
    %33 = vector.broadcast %32 : vector<16x1xf32> to vector<16x32xf32>
    %34 = arith.mulf %29, %33 : vector<16x32xf32>
    %35 = vector.broadcast %2 : vector<1x32xf32> to vector<16x32xf32>
    %36 = arith.mulf %34, %35 : vector<16x32xf32>
    %37 = vector.broadcast %3 : vector<1x32xf32> to vector<16x32xf32>
    %38 = arith.addf %36, %37 : vector<16x32xf32>
    %39 = math.tanh %38 : vector<16x32xf32>
    %c0_10 = arith.constant 0 : index
    %c0_11 = arith.constant 0 : index
    %40 = vector.load %arg2[%c0_10, %c0_11] : memref<16x6xf32, #tpu.memory_space<vmem>>, vector<16x6xf32>
    %41 = arith.truncf %40 : vector<16x6xf32> to vector<16x6xbf16>
    %42 = arith.truncf %39 : vector<16x32xf32> to vector<16x32xbf16>
    %c0_12 = arith.constant 0 : index
    %c0_13 = arith.constant 0 : index
    %43 = vector.load %arg4[%c0_12, %c0_13] : memref<32x64xbf16, #tpu.memory_space<vmem>>, vector<32x64xbf16>
    %cst_14 = arith.constant dense<0.000000e+00> : vector<16x64xf32>
    %44 = tpu.matmul %42, %43, %cst_14 {dimension_numbers = #tpu.dot_dimension_numbers<[1], [0], [0], [1], [0, 0, 1, 1], [], []>} : vector<16x32xbf16>, vector<32x64xbf16>, vector<16x64xf32> -> vector<16x64xf32>
    %c0_15 = arith.constant 0 : index
    %c0_16 = arith.constant 0 : index
    %45 = vector.load %arg5[%c0_15, %c0_16] : memref<6x64xbf16, #tpu.memory_space<vmem>>, vector<6x64xbf16>
    %cst_17 = arith.constant dense<0.000000e+00> : vector<16x64xf32>
    %46 = tpu.matmul %41, %45, %cst_17 {dimension_numbers = #tpu.dot_dimension_numbers<[1], [0], [0], [1], [0, 0, 1, 1], [], []>} : vector<16x6xbf16>, vector<6x64xbf16>, vector<16x64xf32> -> vector<16x64xf32>
    %47 = arith.addf %44, %46 : vector<16x64xf32>
    %48 = vector.broadcast %4 : vector<1x64xf32> to vector<16x64xf32>
    %49 = arith.addf %47, %48 : vector<16x64xf32>
    %50 = vector.extract_strided_slice %49 {offsets = [0, 0], sizes = [16, 32], strides = [1, 1]} : vector<16x64xf32> to vector<16x32xf32>
    %51 = vector.extract_strided_slice %5 {offsets = [0, 0], sizes = [1, 32], strides = [1, 1]} : vector<1x64xf32> to vector<1x32xf32>
    %52 = vector.extract_strided_slice %6 {offsets = [0, 0], sizes = [1, 32], strides = [1, 1]} : vector<1x64xf32> to vector<1x32xf32>
    %cst_18 = arith.constant dense<0.000000e+00> : vector<16xf32>
    %53 = vector.multi_reduction <add>, %50, %cst_18 [1] : vector<16x32xf32> to vector<16xf32>
    %54 = vector.shape_cast %53 : vector<16xf32> to vector<16x1xf32>
    %cst_19 = arith.constant 3.200000e+01 : f32
    %55 = vector.broadcast %cst_19 : f32 to vector<16x1xf32>
    %56 = arith.divf %54, %55 : vector<16x1xf32>
    %57 = vector.broadcast %56 : vector<16x1xf32> to vector<16x32xf32>
    %58 = arith.subf %50, %57 : vector<16x32xf32>
    %59 = arith.mulf %58, %58 : vector<16x32xf32>
    %cst_20 = arith.constant dense<0.000000e+00> : vector<16xf32>
    %60 = vector.multi_reduction <add>, %59, %cst_20 [1] : vector<16x32xf32> to vector<16xf32>
    %61 = vector.shape_cast %60 : vector<16xf32> to vector<16x1xf32>
    %cst_21 = arith.constant 3.200000e+01 : f32
    %62 = vector.broadcast %cst_21 : f32 to vector<16x1xf32>
    %63 = arith.divf %61, %62 : vector<16x1xf32>
    %64 = vector.broadcast %56 : vector<16x1xf32> to vector<16x32xf32>
    %65 = arith.subf %50, %64 : vector<16x32xf32>
    %cst_22 = arith.constant 9.99999974E-6 : f32
    %66 = vector.broadcast %cst_22 : f32 to vector<16x1xf32>
    %67 = arith.addf %63, %66 : vector<16x1xf32>
    %68 = math.rsqrt %67 : vector<16x1xf32>
    %69 = vector.broadcast %68 : vector<16x1xf32> to vector<16x32xf32>
    %70 = arith.mulf %65, %69 : vector<16x32xf32>
    %71 = vector.broadcast %51 : vector<1x32xf32> to vector<16x32xf32>
    %72 = arith.mulf %70, %71 : vector<16x32xf32>
    %73 = vector.broadcast %52 : vector<1x32xf32> to vector<16x32xf32>
    %74 = arith.addf %72, %73 : vector<16x32xf32>
    %cst_23 = arith.constant 0.000000e+00 : f32
    %75 = vector.broadcast %cst_23 : f32 to vector<16x32xf32>
    %76 = arith.maximumf %74, %75 : vector<16x32xf32>
    %77 = vector.extract_strided_slice %49 {offsets = [0, 32], sizes = [16, 32], strides = [1, 1]} : vector<16x64xf32> to vector<16x32xf32>
    %78 = vector.extract_strided_slice %5 {offsets = [0, 32], sizes = [1, 32], strides = [1, 1]} : vector<1x64xf32> to vector<1x32xf32>
    %79 = vector.extract_strided_slice %6 {offsets = [0, 32], sizes = [1, 32], strides = [1, 1]} : vector<1x64xf32> to vector<1x32xf32>
    %cst_24 = arith.constant dense<0.000000e+00> : vector<16xf32>
    %80 = vector.multi_reduction <add>, %77, %cst_24 [1] : vector<16x32xf32> to vector<16xf32>
    %81 = vector.shape_cast %80 : vector<16xf32> to vector<16x1xf32>
    %cst_25 = arith.constant 3.200000e+01 : f32
    %82 = vector.broadcast %cst_25 : f32 to vector<16x1xf32>
    %83 = arith.divf %81, %82 : vector<16x1xf32>
    %84 = vector.broadcast %83 : vector<16x1xf32> to vector<16x32xf32>
    %85 = arith.subf %77, %84 : vector<16x32xf32>
    %86 = arith.mulf %85, %85 : vector<16x32xf32>
    %cst_26 = arith.constant dense<0.000000e+00> : vector<16xf32>
    %87 = vector.multi_reduction <add>, %86, %cst_26 [1] : vector<16x32xf32> to vector<16xf32>
    %88 = vector.shape_cast %87 : vector<16xf32> to vector<16x1xf32>
    %cst_27 = arith.constant 3.200000e+01 : f32
    %89 = vector.broadcast %cst_27 : f32 to vector<16x1xf32>
    %90 = arith.divf %88, %89 : vector<16x1xf32>
    %91 = vector.broadcast %83 : vector<16x1xf32> to vector<16x32xf32>
    %92 = arith.subf %77, %91 : vector<16x32xf32>
    %cst_28 = arith.constant 9.99999974E-6 : f32
    %93 = vector.broadcast %cst_28 : f32 to vector<16x1xf32>
    %94 = arith.addf %90, %93 : vector<16x1xf32>
    %95 = math.rsqrt %94 : vector<16x1xf32>
    %96 = vector.broadcast %95 : vector<16x1xf32> to vector<16x32xf32>
    %97 = arith.mulf %92, %96 : vector<16x32xf32>
    %98 = vector.broadcast %78 : vector<1x32xf32> to vector<16x32xf32>
    %99 = arith.mulf %97, %98 : vector<16x32xf32>
    %100 = vector.broadcast %79 : vector<1x32xf32> to vector<16x32xf32>
    %101 = arith.addf %99, %100 : vector<16x32xf32>
    %cst_29 = arith.constant 0.000000e+00 : f32
    %102 = vector.broadcast %cst_29 : f32 to vector<16x32xf32>
    %103 = arith.maximumf %101, %102 : vector<16x32xf32>
    %104 = arith.truncf %76 : vector<16x32xf32> to vector<16x32xbf16>
    %c0_30 = arith.constant 0 : index
    %c0_31 = arith.constant 0 : index
    %105 = vector.load %arg6[%c0_30, %c0_31] : memref<32x32xbf16, #tpu.memory_space<vmem>>, vector<32x32xbf16>
    %cst_32 = arith.constant dense<0.000000e+00> : vector<16x32xf32>
    %106 = tpu.matmul %104, %105, %cst_32 {dimension_numbers = #tpu.dot_dimension_numbers<[1], [0], [0], [1], [0, 0, 1, 1], [], []>} : vector<16x32xbf16>, vector<32x32xbf16>, vector<16x32xf32> -> vector<16x32xf32>
    %107 = vector.extract_strided_slice %7 {offsets = [0, 0], sizes = [1, 32], strides = [1, 1]} : vector<1x64xf32> to vector<1x32xf32>
    %108 = vector.broadcast %107 : vector<1x32xf32> to vector<16x32xf32>
    %109 = arith.addf %106, %108 : vector<16x32xf32>
    %110 = vector.extract_strided_slice %8 {offsets = [0, 0], sizes = [1, 32], strides = [1, 1]} : vector<1x64xf32> to vector<1x32xf32>
    %111 = vector.extract_strided_slice %9 {offsets = [0, 0], sizes = [1, 32], strides = [1, 1]} : vector<1x64xf32> to vector<1x32xf32>
    %cst_33 = arith.constant dense<0.000000e+00> : vector<16xf32>
    %112 = vector.multi_reduction <add>, %109, %cst_33 [1] : vector<16x32xf32> to vector<16xf32>
    %113 = vector.shape_cast %112 : vector<16xf32> to vector<16x1xf32>
    %cst_34 = arith.constant 3.200000e+01 : f32
    %114 = vector.broadcast %cst_34 : f32 to vector<16x1xf32>
    %115 = arith.divf %113, %114 : vector<16x1xf32>
    %116 = vector.broadcast %115 : vector<16x1xf32> to vector<16x32xf32>
    %117 = arith.subf %109, %116 : vector<16x32xf32>
    %118 = arith.mulf %117, %117 : vector<16x32xf32>
    %cst_35 = arith.constant dense<0.000000e+00> : vector<16xf32>
    %119 = vector.multi_reduction <add>, %118, %cst_35 [1] : vector<16x32xf32> to vector<16xf32>
    %120 = vector.shape_cast %119 : vector<16xf32> to vector<16x1xf32>
    %cst_36 = arith.constant 3.200000e+01 : f32
    %121 = vector.broadcast %cst_36 : f32 to vector<16x1xf32>
    %122 = arith.divf %120, %121 : vector<16x1xf32>
    %123 = vector.broadcast %115 : vector<16x1xf32> to vector<16x32xf32>
    %124 = arith.subf %109, %123 : vector<16x32xf32>
    %cst_37 = arith.constant 9.99999974E-6 : f32
    %125 = vector.broadcast %cst_37 : f32 to vector<16x1xf32>
    %126 = arith.addf %122, %125 : vector<16x1xf32>
    %127 = math.rsqrt %126 : vector<16x1xf32>
    %128 = vector.broadcast %127 : vector<16x1xf32> to vector<16x32xf32>
    %129 = arith.mulf %124, %128 : vector<16x32xf32>
    %130 = vector.broadcast %110 : vector<1x32xf32> to vector<16x32xf32>
    %131 = arith.mulf %129, %130 : vector<16x32xf32>
    %132 = vector.broadcast %111 : vector<1x32xf32> to vector<16x32xf32>
    %133 = arith.addf %131, %132 : vector<16x32xf32>
    %cst_38 = arith.constant 0.000000e+00 : f32
    %134 = vector.broadcast %cst_38 : f32 to vector<16x32xf32>
    %135 = arith.maximumf %133, %134 : vector<16x32xf32>
    %136 = arith.truncf %103 : vector<16x32xf32> to vector<16x32xbf16>
    %c0_39 = arith.constant 0 : index
    %c0_40 = arith.constant 0 : index
    %137 = vector.load %arg7[%c0_39, %c0_40] : memref<32x32xbf16, #tpu.memory_space<vmem>>, vector<32x32xbf16>
    %cst_41 = arith.constant dense<0.000000e+00> : vector<16x32xf32>
    %138 = tpu.matmul %136, %137, %cst_41 {dimension_numbers = #tpu.dot_dimension_numbers<[1], [0], [0], [1], [0, 0, 1, 1], [], []>} : vector<16x32xbf16>, vector<32x32xbf16>, vector<16x32xf32> -> vector<16x32xf32>
    %139 = vector.extract_strided_slice %7 {offsets = [0, 32], sizes = [1, 32], strides = [1, 1]} : vector<1x64xf32> to vector<1x32xf32>
    %140 = vector.broadcast %139 : vector<1x32xf32> to vector<16x32xf32>
    %141 = arith.addf %138, %140 : vector<16x32xf32>
    %142 = vector.extract_strided_slice %8 {offsets = [0, 32], sizes = [1, 32], strides = [1, 1]} : vector<1x64xf32> to vector<1x32xf32>
    %143 = vector.extract_strided_slice %9 {offsets = [0, 32], sizes = [1, 32], strides = [1, 1]} : vector<1x64xf32> to vector<1x32xf32>
    %cst_42 = arith.constant dense<0.000000e+00> : vector<16xf32>
    %144 = vector.multi_reduction <add>, %141, %cst_42 [1] : vector<16x32xf32> to vector<16xf32>
    %145 = vector.shape_cast %144 : vector<16xf32> to vector<16x1xf32>
    %cst_43 = arith.constant 3.200000e+01 : f32
    %146 = vector.broadcast %cst_43 : f32 to vector<16x1xf32>
    %147 = arith.divf %145, %146 : vector<16x1xf32>
    %148 = vector.broadcast %147 : vector<16x1xf32> to vector<16x32xf32>
    %149 = arith.subf %141, %148 : vector<16x32xf32>
    %150 = arith.mulf %149, %149 : vector<16x32xf32>
    %cst_44 = arith.constant dense<0.000000e+00> : vector<16xf32>
    %151 = vector.multi_reduction <add>, %150, %cst_44 [1] : vector<16x32xf32> to vector<16xf32>
    %152 = vector.shape_cast %151 : vector<16xf32> to vector<16x1xf32>
    %cst_45 = arith.constant 3.200000e+01 : f32
    %153 = vector.broadcast %cst_45 : f32 to vector<16x1xf32>
    %154 = arith.divf %152, %153 : vector<16x1xf32>
    %155 = vector.broadcast %147 : vector<16x1xf32> to vector<16x32xf32>
    %156 = arith.subf %141, %155 : vector<16x32xf32>
    %cst_46 = arith.constant 9.99999974E-6 : f32
    %157 = vector.broadcast %cst_46 : f32 to vector<16x1xf32>
    %158 = arith.addf %154, %157 : vector<16x1xf32>
    %159 = math.rsqrt %158 : vector<16x1xf32>
    %160 = vector.broadcast %159 : vector<16x1xf32> to vector<16x32xf32>
    %161 = arith.mulf %156, %160 : vector<16x32xf32>
    %162 = vector.broadcast %142 : vector<1x32xf32> to vector<16x32xf32>
    %163 = arith.mulf %161, %162 : vector<16x32xf32>
    %164 = vector.broadcast %143 : vector<1x32xf32> to vector<16x32xf32>
    %165 = arith.addf %163, %164 : vector<16x32xf32>
    %cst_47 = arith.constant 0.000000e+00 : f32
    %166 = vector.broadcast %cst_47 : f32 to vector<16x32xf32>
    %167 = arith.maximumf %165, %166 : vector<16x32xf32>
    %168 = tpu.concatenate %135, %167 in 1 : vector<16x32xf32>, vector<16x32xf32> -> vector<16x64xf32>
    %169 = arith.truncf %168 : vector<16x64xf32> to vector<16x64xbf16>
    %c0_48 = arith.constant 0 : index
    %c0_49 = arith.constant 0 : index
    %170 = vector.load %arg8[%c0_48, %c0_49] : memref<64x2xbf16, #tpu.memory_space<vmem>>, vector<64x2xbf16>
    %cst_50 = arith.constant dense<0.000000e+00> : vector<16x2xf32>
    %171 = tpu.matmul %169, %170, %cst_50 {dimension_numbers = #tpu.dot_dimension_numbers<[1], [0], [0], [1], [0, 0, 1, 1], [], []>} : vector<16x64xbf16>, vector<64x2xbf16>, vector<16x2xf32> -> vector<16x2xf32>
    %172 = vector.broadcast %10 : vector<1x2xf32> to vector<16x2xf32>
    %173 = arith.addf %171, %172 : vector<16x2xf32>
    %c0_51 = arith.constant 0 : index
    %c0_52 = arith.constant 0 : index
    %174 = vector.load %arg10[%c0_51, %c0_52] : memref<16x2xf32, #tpu.memory_space<vmem>>, vector<16x2xf32>
    tpu.vector_store %arg10[%c0_51, %c0_52], %173 {strides = array<i32>} : memref<16x2xf32, #tpu.memory_space<vmem>>, vector<16x2xf32>,
    return
  }
  func.func @transform_0(%arg0: i32) -> (i32, i32) {
    %c0_i32 = arith.constant 0 : i32
    %c0_i32_0 = arith.constant 0 : i32
    return %arg0, %c0_i32 : i32, i32
  }
  func.func @transform_1(%arg0: i32) -> (i32, i32) {
    %c0_i32 = arith.constant 0 : i32
    %c0_i32_0 = arith.constant 0 : i32
    return %arg0, %c0_i32 : i32, i32
  }
  func.func @transform_2(%arg0: i32) -> (i32, i32) {
    %c0_i32 = arith.constant 0 : i32
    %c0_i32_0 = arith.constant 0 : i32
    %c0_i32_1 = arith.constant 0 : i32
    return %c0_i32, %c0_i32_0 : i32, i32
  }
  func.func @transform_3(%arg0: i32) -> (i32, i32) {
    %c0_i32 = arith.constant 0 : i32
    %c0_i32_0 = arith.constant 0 : i32
    %c0_i32_1 = arith.constant 0 : i32
    return %c0_i32, %c0_i32_0 : i32, i32
  }
  func.func @transform_4(%arg0: i32) -> (i32, i32) {
    %c0_i32 = arith.constant 0 : i32
    %c0_i32_0 = arith.constant 0 : i32
    %c0_i32_1 = arith.constant 0 : i32
    return %c0_i32, %c0_i32_0 : i32, i32
  }
  func.func @transform_5(%arg0: i32) -> (i32, i32) {
    %c0_i32 = arith.constant 0 : i32
    %c0_i32_0 = arith.constant 0 : i32
    %c0_i32_1 = arith.constant 0 : i32
    return %c0_i32, %c0_i32_0 : i32, i32
  }
  func.func @transform_6(%arg0: i32) -> (i32, i32) {
    %c0_i32 = arith.constant 0 : i32
    %c0_i32_0 = arith.constant 0 : i32
    %c0_i32_1 = arith.constant 0 : i32
    return %c0_i32, %c0_i32_0 : i32, i32
  }
  func.func @transform_7(%arg0: i32) -> (i32, i32) {
    %c0_i32 = arith.constant 0 : i32
    %c0_i32_0 = arith.constant 0 : i32
    %c0_i32_1 = arith.constant 0 : i32
    return %c0_i32, %c0_i32_0 : i32, i32
  }
  func.func @transform_8(%arg0: i32) -> (i32, i32) {
    %c0_i32 = arith.constant 0 : i32
    %c0_i32_0 = arith.constant 0 : i32
    %c0_i32_1 = arith.constant 0 : i32
    return %c0_i32, %c0_i32_0 : i32, i32
  }
  func.func @transform_9(%arg0: i32) -> (i32, i32) {
    %c0_i32 = arith.constant 0 : i32
    %c0_i32_0 = arith.constant 0 : i32
    return %arg0, %c0_i32 : i32, i32
  }
}

</mosaic_0001>

<llo_original>
// kernel: tpu_custom_call.1
$region0: #{tpu_custom_call.1}
  #allocation0 [shape = 'u32[]', space=smem, size = 0x4, offset = 0x4, fixed_abs, tag = 'smem constant byte address 0x4 - core index']
  #allocation1 [shape = 'u32[144,128]{1,0:T(1,128)}', space=vmem, size = 0x12000, scoped, tag = 'internal scratch']
  %s0 = inlined_call_operand.vmem [shape: f32[16,1024], index: 0, kind: input, shape index: {}]
  %s1 = inlined_call_operand.vmem [shape: f32[16,6], index: 1, kind: input, shape index: {}]
  %s2 = inlined_call_operand.vmem [shape: bf16[1024,32], index: 2, kind: input, shape index: {}]
  %s3 = inlined_call_operand.vmem [shape: bf16[32,64], index: 3, kind: input, shape index: {}]
  %s4 = inlined_call_operand.vmem [shape: bf16[6,64], index: 4, kind: input, shape index: {}]
  %s5 = inlined_call_operand.vmem [shape: bf16[32,32], index: 5, kind: input, shape index: {}]
  %s6 = inlined_call_operand.vmem [shape: bf16[32,32], index: 6, kind: input, shape index: {}]
  %s7 = inlined_call_operand.vmem [shape: bf16[64,2], index: 7, kind: input, shape index: {}]
  %s8 = inlined_call_operand.vmem [shape: f32[10,128], index: 8, kind: input, shape index: {}]
  %s9 = inlined_call_operand.vmem [shape: f32[16,2], index: 9, kind: output, shape index: {}]
  %s10 = sld [smem:[#allocation0]]
  $region46: #{tpu_custom_call.1} parent=0
    _
  %s12 = ssub.s32 1, %s10
  %s13 = scalar_select 0, %s12, %s10
  // Predicated region
  $region2: #{tpu_custom_call.1} parent=0 // pred_check
    _
  $region3: #{tpu_custom_call.1} parent=0 // pred_check_branch
    %15 = sbr.rel (0) target = $region5
  $region4: #{tpu_custom_call.1} parent=0 // pred_region
    _
  $region5: #{tpu_custom_call.1} parent=0 // pred_fallthru
    _
  // Predicated region
  $region6: #{tpu_custom_call.1} parent=0 // pred_check
    _
  $region7: #{tpu_custom_call.1} parent=0 // pred_check_branch
    %17 = sbr.rel (0) target = $region9
  $region8: #{tpu_custom_call.1} parent=0 // pred_region
    _
  $region9: #{tpu_custom_call.1} parent=0 // pred_fallthru
    _
  // Predicated region
  $region10: #{tpu_custom_call.1} parent=0 // pred_check
    _
  $region11: #{tpu_custom_call.1} parent=0 // pred_check_branch
    %19 = sbr.rel (0) target = $region13
  $region12: #{tpu_custom_call.1} parent=0 // pred_region
    _
  $region13: #{tpu_custom_call.1} parent=0 // pred_fallthru
    _
  // Predicated region
  $region14: #{tpu_custom_call.1} parent=0 // pred_check
    _
  $region15: #{tpu_custom_call.1} parent=0 // pred_check_branch
    %21 = sbr.rel (0) target = $region17
  $region16: #{tpu_custom_call.1} parent=0 // pred_region
    _
  $region17: #{tpu_custom_call.1} parent=0 // pred_fallthru
    _
  // Predicated region
  $region18: #{tpu_custom_call.1} parent=0 // pred_check
    _
  $region19: #{tpu_custom_call.1} parent=0 // pred_check_branch
    %23 = sbr.rel (0) target = $region21
  $region20: #{tpu_custom_call.1} parent=0 // pred_region
    _
  $region21: #{tpu_custom_call.1} parent=0 // pred_fallthru
    _
  // Predicated region
  $region22: #{tpu_custom_call.1} parent=0 // pred_check
    _
  $region23: #{tpu_custom_call.1} parent=0 // pred_check_branch
    %25 = sbr.rel (0) target = $region25
  $region24: #{tpu_custom_call.1} parent=0 // pred_region
    _
  $region25: #{tpu_custom_call.1} parent=0 // pred_fallthru
    _
  // Predicated region
  $region26: #{tpu_custom_call.1} parent=0 // pred_check
    _
  $region27: #{tpu_custom_call.1} parent=0 // pred_check_branch
    %27 = sbr.rel (0) target = $region29
  $region28: #{tpu_custom_call.1} parent=0 // pred_region
    _
  $region29: #{tpu_custom_call.1} parent=0 // pred_fallthru
    _
  // Predicated region
  $region30: #{tpu_custom_call.1} parent=0 // pred_check
    _
  $region31: #{tpu_custom_call.1} parent=0 // pred_check_branch
    %29 = sbr.rel (0) target = $region33
  $region32: #{tpu_custom_call.1} parent=0 // pred_region
    _
  $region33: #{tpu_custom_call.1} parent=0 // pred_fallthru
    _
  // Predicated region
  $region34: #{tpu_custom_call.1} parent=0 // pred_check
    _
  $region35: #{tpu_custom_call.1} parent=0 // pred_check_branch
    %31 = sbr.rel (0) target = $region37
  $region36: #{tpu_custom_call.1} parent=0 // pred_region
    _
  $region37: #{tpu_custom_call.1} parent=0 // pred_fallthru
    _
  %v33 = vld [vmem:[%s8] sm:$0xff]
  %v34 = vld [vmem:[%s8 + $0x8] sm:$0x3]
  %v35 = vld [vmem:[%s0] sm:$0xff]
  %v36 = vld [vmem:[%s0 + $0x8] sm:$0xff]
  %v37 = vld [vmem:[%s0 + $0x10] sm:$0xff]
  %v38 = vld [vmem:[%s0 + $0x18] sm:$0xff]
  %v39 = vld [vmem:[%s0 + $0x20] sm:$0xff]
  %v40 = vld [vmem:[%s0 + $0x28] sm:$0xff]
  %v41 = vld [vmem:[%s0 + $0x30] sm:$0xff]
  %v42 = vld [vmem:[%s0 + $0x38] sm:$0xff]
  %v43 = vld [vmem:[%s0 + $0x40] sm:$0xff]
  %v44 = vld [vmem:[%s0 + $0x48] sm:$0xff]
  %v45 = vld [vmem:[%s0 + $0x50] sm:$0xff]
  %v46 = vld [vmem:[%s0 + $0x58] sm:$0xff]
  %v47 = vld [vmem:[%s0 + $0x60] sm:$0xff]
  %v48 = vld [vmem:[%s0 + $0x68] sm:$0xff]
  %v49 = vld [vmem:[%s0 + $0x70] sm:$0xff]
  %v50 = vld [vmem:[%s0 + $0x78] sm:$0xff]
  %v51 = vpack.c.bf16 %v43, %v35
  %v52 = vpack.c.bf16 %v44, %v36
  %v53 = vpack.c.bf16 %v45, %v37
  %v54 = vpack.c.bf16 %v46, %v38
  %v55 = vpack.c.bf16 %v47, %v39
  %v56 = vpack.c.bf16 %v48, %v40
  %v57 = vpack.c.bf16 %v49, %v41
  %v58 = vpack.c.bf16 %v50, %v42
  %v59 = vld [vmem:[%s2] sm:$0xf]
  %v60 = vld [vmem:[%s2 + $0x4] sm:$0xf]
  %v61 = vld [vmem:[%s2 + $0x8] sm:$0xf]
  %v62 = vld [vmem:[%s2 + $0xc] sm:$0xf]
  %v63 = vld [vmem:[%s2 + $0x10] sm:$0xf]
  %v64 = vld [vmem:[%s2 + $0x14] sm:$0xf]
  %v65 = vld [vmem:[%s2 + $0x18] sm:$0xf]
  %v66 = vld [vmem:[%s2 + $0x1c] sm:$0xf]
  %v67 = vld [vmem:[%s2 + $0x20] sm:$0xf]
  %v68 = vld [vmem:[%s2 + $0x24] sm:$0xf]
  %v69 = vld [vmem:[%s2 + $0x28] sm:$0xf]
  %v70 = vld [vmem:[%s2 + $0x2c] sm:$0xf]
  %v71 = vld [vmem:[%s2 + $0x30] sm:$0xf]
  %v72 = vld [vmem:[%s2 + $0x34] sm:$0xf]
  %v73 = vld [vmem:[%s2 + $0x38] sm:$0xf]
  %v74 = vld [vmem:[%s2 + $0x3c] sm:$0xf]
  %v75 = vld [vmem:[%s2 + $0x40] sm:$0xf]
  %v76 = vld [vmem:[%s2 + $0x44] sm:$0xf]
  %v77 = vld [vmem:[%s2 + $0x48] sm:$0xf]
  %v78 = vld [vmem:[%s2 + $0x4c] sm:$0xf]
  %v79 = vld [vmem:[%s2 + $0x50] sm:$0xf]
  %v80 = vld [vmem:[%s2 + $0x54] sm:$0xf]
  %v81 = vld [vmem:[%s2 + $0x58] sm:$0xf]
  %v82 = vld [vmem:[%s2 + $0x5c] sm:$0xf]
  %v83 = vld [vmem:[%s2 + $0x60] sm:$0xf]
  %v84 = vld [vmem:[%s2 + $0x64] sm:$0xf]
  %v85 = vld [vmem:[%s2 + $0x68] sm:$0xf]
  %v86 = vld [vmem:[%s2 + $0x6c] sm:$0xf]
  %v87 = vld [vmem:[%s2 + $0x70] sm:$0xf]
  %v88 = vld [vmem:[%s2 + $0x74] sm:$0xf]
  %v89 = vld [vmem:[%s2 + $0x78] sm:$0xf]
  %v90 = vld [vmem:[%s2 + $0x7c] sm:$0xf]
  %v91 = vld [vmem:[%s2 + $0x80] sm:$0xf]
  %v92 = vld [vmem:[%s2 + $0x84] sm:$0xf]
  %v93 = vld [vmem:[%s2 + $0x88] sm:$0xf]
  %v94 = vld [vmem:[%s2 + $0x8c] sm:$0xf]
  %v95 = vld [vmem:[%s2 + $0x90] sm:$0xf]
  %v96 = vld [vmem:[%s2 + $0x94] sm:$0xf]
  %v97 = vld [vmem:[%s2 + $0x98] sm:$0xf]
  %v98 = vld [vmem:[%s2 + $0x9c] sm:$0xf]
  %v99 = vld [vmem:[%s2 + $0xa0] sm:$0xf]
  %v100 = vld [vmem:[%s2 + $0xa4] sm:$0xf]
  %v101 = vld [vmem:[%s2 + $0xa8] sm:$0xf]
  %v102 = vld [vmem:[%s2 + $0xac] sm:$0xf]
  %v103 = vld [vmem:[%s2 + $0xb0] sm:$0xf]
  %v104 = vld [vmem:[%s2 + $0xb4] sm:$0xf]
  %v105 = vld [vmem:[%s2 + $0xb8] sm:$0xf]
  %v106 = vld [vmem:[%s2 + $0xbc] sm:$0xf]
  %v107 = vld [vmem:[%s2 + $0xc0] sm:$0xf]
  %v108 = vld [vmem:[%s2 + $0xc4] sm:$0xf]
  %v109 = vld [vmem:[%s2 + $0xc8] sm:$0xf]
  %v110 = vld [vmem:[%s2 + $0xcc] sm:$0xf]
  %v111 = vld [vmem:[%s2 + $0xd0] sm:$0xf]
  %v112 = vld [vmem:[%s2 + $0xd4] sm:$0xf]
  %v113 = vld [vmem:[%s2 + $0xd8] sm:$0xf]
  %v114 = vld [vmem:[%s2 + $0xdc] sm:$0xf]
  %v115 = vld [vmem:[%s2 + $0xe0] sm:$0xf]
  %v116 = vld [vmem:[%s2 + $0xe4] sm:$0xf]
  %v117 = vld [vmem:[%s2 + $0xe8] sm:$0xf]
  %v118 = vld [vmem:[%s2 + $0xec] sm:$0xf]
  %v119 = vld [vmem:[%s2 + $0xf0] sm:$0xf]
  %v120 = vld [vmem:[%s2 + $0xf4] sm:$0xf]
  %v121 = vld [vmem:[%s2 + $0xf8] sm:$0xf]
  %v122 = vld [vmem:[%s2 + $0xfc] sm:$0xf]
  %v123 = vld [vmem:[%s2 + $0x100] sm:$0xf]
  %v124 = vld [vmem:[%s2 + $0x104] sm:$0xf]
  %v125 = vld [vmem:[%s2 + $0x108] sm:$0xf]
  %v126 = vld [vmem:[%s2 + $0x10c] sm:$0xf]
  %v127 = vld [vmem:[%s2 + $0x110] sm:$0xf]
  %v128 = vld [vmem:[%s2 + $0x114] sm:$0xf]
  %v129 = vld [vmem:[%s2 + $0x118] sm:$0xf]
  %v130 = vld [vmem:[%s2 + $0x11c] sm:$0xf]
  %v131 = vld [vmem:[%s2 + $0x120] sm:$0xf]
  %v132 = vld [vmem:[%s2 + $0x124] sm:$0xf]
  %v133 = vld [vmem:[%s2 + $0x128] sm:$0xf]
  %v134 = vld [vmem:[%s2 + $0x12c] sm:$0xf]
  %v135 = vld [vmem:[%s2 + $0x130] sm:$0xf]
  %v136 = vld [vmem:[%s2 + $0x134] sm:$0xf]
  %v137 = vld [vmem:[%s2 + $0x138] sm:$0xf]
  %v138 = vld [vmem:[%s2 + $0x13c] sm:$0xf]
  %v139 = vld [vmem:[%s2 + $0x140] sm:$0xf]
  %v140 = vld [vmem:[%s2 + $0x144] sm:$0xf]
  %v141 = vld [vmem:[%s2 + $0x148] sm:$0xf]
  %v142 = vld [vmem:[%s2 + $0x14c] sm:$0xf]
  %v143 = vld [vmem:[%s2 + $0x150] sm:$0xf]
  %v144 = vld [vmem:[%s2 + $0x154] sm:$0xf]
  %v145 = vld [vmem:[%s2 + $0x158] sm:$0xf]
  %v146 = vld [vmem:[%s2 + $0x15c] sm:$0xf]
  %v147 = vld [vmem:[%s2 + $0x160] sm:$0xf]
  %v148 = vld [vmem:[%s2 + $0x164] sm:$0xf]
  %v149 = vld [vmem:[%s2 + $0x168] sm:$0xf]
  %v150 = vld [vmem:[%s2 + $0x16c] sm:$0xf]
  %v151 = vld [vmem:[%s2 + $0x170] sm:$0xf]
  %v152 = vld [vmem:[%s2 + $0x174] sm:$0xf]
  %v153 = vld [vmem:[%s2 + $0x178] sm:$0xf]
  %v154 = vld [vmem:[%s2 + $0x17c] sm:$0xf]
  %v155 = vld [vmem:[%s2 + $0x180] sm:$0xf]
  %v156 = vld [vmem:[%s2 + $0x184] sm:$0xf]
  %v157 = vld [vmem:[%s2 + $0x188] sm:$0xf]
  %v158 = vld [vmem:[%s2 + $0x18c] sm:$0xf]
  %v159 = vld [vmem:[%s2 + $0x190] sm:$0xf]
  %v160 = vld [vmem:[%s2 + $0x194] sm:$0xf]
  %v161 = vld [vmem:[%s2 + $0x198] sm:$0xf]
  %v162 = vld [vmem:[%s2 + $0x19c] sm:$0xf]
  %v163 = vld [vmem:[%s2 + $0x1a0] sm:$0xf]
  %v164 = vld [vmem:[%s2 + $0x1a4] sm:$0xf]
  %v165 = vld [vmem:[%s2 + $0x1a8] sm:$0xf]
  %v166 = vld [vmem:[%s2 + $0x1ac] sm:$0xf]
  %v167 = vld [vmem:[%s2 + $0x1b0] sm:$0xf]
  %v168 = vld [vmem:[%s2 + $0x1b4] sm:$0xf]
  %v169 = vld [vmem:[%s2 + $0x1b8] sm:$0xf]
  %v170 = vld [vmem:[%s2 + $0x1bc] sm:$0xf]
  %v171 = vld [vmem:[%s2 + $0x1c0] sm:$0xf]
  %v172 = vld [vmem:[%s2 + $0x1c4] sm:$0xf]
  %v173 = vld [vmem:[%s2 + $0x1c8] sm:$0xf]
  %v174 = vld [vmem:[%s2 + $0x1cc] sm:$0xf]
  %v175 = vld [vmem:[%s2 + $0x1d0] sm:$0xf]
  %v176 = vld [vmem:[%s2 + $0x1d4] sm:$0xf]
  %v177 = vld [vmem:[%s2 + $0x1d8] sm:$0xf]
  %v178 = vld [vmem:[%s2 + $0x1dc] sm:$0xf]
  %v179 = vld [vmem:[%s2 + $0x1e0] sm:$0xf]
  %v180 = vld [vmem:[%s2 + $0x1e4] sm:$0xf]
  %v181 = vld [vmem:[%s2 + $0x1e8] sm:$0xf]
  %v182 = vld [vmem:[%s2 + $0x1ec] sm:$0xf]
  %v183 = vld [vmem:[%s2 + $0x1f0] sm:$0xf]
  %v184 = vld [vmem:[%s2 + $0x1f4] sm:$0xf]
  %v185 = vld [vmem:[%s2 + $0x1f8] sm:$0xf]
  %v186 = vld [vmem:[%s2 + $0x1fc] sm:$0xf]
  %v187 = vlaneseq
  %v188 = vshrl.u32 %v187, 7
  %v189 = vsub.s32 0, %v188
  %v190 = vrot.slane %v33, %v189
  %v319 = vunpack.c.l.b16 %v59
  %v320 = vunpack.c.l.b16 %v60
  %v321 = vunpack.c.l.b16 %v61
  %v322 = vunpack.c.l.b16 %v62
  %v323 = vunpack.c.l.b16 %v63
  %v324 = vunpack.c.l.b16 %v64
  %v325 = vunpack.c.l.b16 %v65
  %v326 = vunpack.c.l.b16 %v66
  %v327 = vunpack.c.l.b16 %v67
  %v328 = vunpack.c.l.b16 %v68
  %v329 = vunpack.c.l.b16 %v69
  %v330 = vunpack.c.l.b16 %v70
  %v331 = vunpack.c.l.b16 %v71
  %v332 = vunpack.c.l.b16 %v72
  %v333 = vunpack.c.l.b16 %v73
  %v334 = vunpack.c.l.b16 %v74
  %v335 = vunpack.c.l.b16 %v75
  %v336 = vunpack.c.l.b16 %v76
  %v337 = vunpack.c.l.b16 %v77
  %v338 = vunpack.c.l.b16 %v78
  %v339 = vunpack.c.l.b16 %v79
  %v340 = vunpack.c.l.b16 %v80
  %v341 = vunpack.c.l.b16 %v81
  %v342 = vunpack.c.l.b16 %v82
  %v343 = vunpack.c.l.b16 %v83
  %v344 = vunpack.c.l.b16 %v84
  %v345 = vunpack.c.l.b16 %v85
  %v346 = vunpack.c.l.b16 %v86
  %v347 = vunpack.c.l.b16 %v87
  %v348 = vunpack.c.l.b16 %v88
  %v349 = vunpack.c.l.b16 %v89
  %v350 = vunpack.c.l.b16 %v90
  %v351 = vunpack.c.l.b16 %v91
  %v352 = vunpack.c.l.b16 %v92
  %v353 = vunpack.c.l.b16 %v93
  %v354 = vunpack.c.l.b16 %v94
  %v355 = vunpack.c.l.b16 %v95
  %v356 = vunpack.c.l.b16 %v96
  %v357 = vunpack.c.l.b16 %v97
  %v358 = vunpack.c.l.b16 %v98
  %v359 = vunpack.c.l.b16 %v99
  %v360 = vunpack.c.l.b16 %v100
  %v361 = vunpack.c.l.b16 %v101
  %v362 = vunpack.c.l.b16 %v102
  %v363 = vunpack.c.l.b16 %v103
  %v364 = vunpack.c.l.b16 %v104
  %v365 = vunpack.c.l.b16 %v105
  %v366 = vunpack.c.l.b16 %v106
  %v367 = vunpack.c.l.b16 %v107
  %v368 = vunpack.c.l.b16 %v108
  %v369 = vunpack.c.l.b16 %v109
  %v370 = vunpack.c.l.b16 %v110
  %v371 = vunpack.c.l.b16 %v111
  %v372 = vunpack.c.l.b16 %v112
  %v373 = vunpack.c.l.b16 %v113
  %v374 = vunpack.c.l.b16 %v114
  %v375 = vunpack.c.l.b16 %v115
  %v376 = vunpack.c.l.b16 %v116
  %v377 = vunpack.c.l.b16 %v117
  %v378 = vunpack.c.l.b16 %v118
  %v379 = vunpack.c.l.b16 %v119
  %v380 = vunpack.c.l.b16 %v120
  %v381 = vunpack.c.l.b16 %v121
  %v382 = vunpack.c.l.b16 %v122
  %v383 = vunpack.c.l.b16 %v123
  %v384 = vunpack.c.l.b16 %v124
  %v385 = vunpack.c.l.b16 %v125
  %v386 = vunpack.c.l.b16 %v126
  %v387 = vunpack.c.l.b16 %v127
  %v388 = vunpack.c.l.b16 %v128
  %v389 = vunpack.c.l.b16 %v129
  %v390 = vunpack.c.l.b16 %v130
  %v391 = vunpack.c.l.b16 %v131
  %v392 = vunpack.c.l.b16 %v132
  %v393 = vunpack.c.l.b16 %v133
  %v394 = vunpack.c.l.b16 %v134
  %v395 = vunpack.c.l.b16 %v135
  %v396 = vunpack.c.l.b16 %v136
  %v397 = vunpack.c.l.b16 %v137
  %v398 = vunpack.c.l.b16 %v138
  %v399 = vunpack.c.l.b16 %v139
  %v400 = vunpack.c.l.b16 %v140
  %v401 = vunpack.c.l.b16 %v141
  %v402 = vunpack.c.l.b16 %v142
  %v403 = vunpack.c.l.b16 %v143
  %v404 = vunpack.c.l.b16 %v144
  %v405 = vunpack.c.l.b16 %v145
  %v406 = vunpack.c.l.b16 %v146
  %v407 = vunpack.c.l.b16 %v147
  %v408 = vunpack.c.l.b16 %v148
  %v409 = vunpack.c.l.b16 %v149
  %v410 = vunpack.c.l.b16 %v150
  %v411 = vunpack.c.l.b16 %v151
  %v412 = vunpack.c.l.b16 %v152
  %v413 = vunpack.c.l.b16 %v153
  %v414 = vunpack.c.l.b16 %v154
  %v415 = vunpack.c.l.b16 %v155
  %v416 = vunpack.c.l.b16 %v156
  %v417 = vunpack.c.l.b16 %v157
  %v418 = vunpack.c.l.b16 %v158
  %v419 = vunpack.c.l.b16 %v159
  %v420 = vunpack.c.l.b16 %v160
  %v421 = vunpack.c.l.b16 %v161
  %v422 = vunpack.c.l.b16 %v162
  %v423 = vunpack.c.l.b16 %v163
  %v424 = vunpack.c.l.b16 %v164
  %v425 = vunpack.c.l.b16 %v165
  %v426 = vunpack.c.l.b16 %v166
  %v427 = vunpack.c.l.b16 %v167
  %v428 = vunpack.c.l.b16 %v168
  %v429 = vunpack.c.l.b16 %v169
  %v430 = vunpack.c.l.b16 %v170
  %v431 = vunpack.c.l.b16 %v171
  %v432 = vunpack.c.l.b16 %v172
  %v433 = vunpack.c.l.b16 %v173
  %v434 = vunpack.c.l.b16 %v174
  %v435 = vunpack.c.l.b16 %v175
  %v436 = vunpack.c.l.b16 %v176
  %v437 = vunpack.c.l.b16 %v177
  %v438 = vunpack.c.l.b16 %v178
  %v439 = vunpack.c.l.b16 %v179
  %v440 = vunpack.c.l.b16 %v180
  %v441 = vunpack.c.l.b16 %v181
  %v442 = vunpack.c.l.b16 %v182
  %v443 = vunpack.c.l.b16 %v183
  %v444 = vunpack.c.l.b16 %v184
  %v445 = vunpack.c.l.b16 %v185
  %v446 = vunpack.c.l.b16 %v186
  %v447 = vpack.c.b16 %v320, %v319
  %v448 = vpack.c.b16 %v322, %v321
  %v449 = vpack.c.b16 %v324, %v323
  %v450 = vpack.c.b16 %v326, %v325
  %v451 = vpack.c.b16 %v328, %v327
  %v452 = vpack.c.b16 %v330, %v329
  %v453 = vpack.c.b16 %v332, %v331
  %v454 = vpack.c.b16 %v334, %v333
  %v455 = vpack.c.b16 %v336, %v335
  %v456 = vpack.c.b16 %v338, %v337
  %v457 = vpack.c.b16 %v340, %v339
  %v458 = vpack.c.b16 %v342, %v341
  %v459 = vpack.c.b16 %v344, %v343
  %v460 = vpack.c.b16 %v346, %v345
  %v461 = vpack.c.b16 %v348, %v347
  %v462 = vpack.c.b16 %v350, %v349
  %v463 = vpack.c.b16 %v352, %v351
  %v464 = vpack.c.b16 %v354, %v353
  %v465 = vpack.c.b16 %v356, %v355
  %v466 = vpack.c.b16 %v358, %v357
  %v467 = vpack.c.b16 %v360, %v359
  %v468 = vpack.c.b16 %v362, %v361
  %v469 = vpack.c.b16 %v364, %v363
  %v470 = vpack.c.b16 %v366, %v365
  %v471 = vpack.c.b16 %v368, %v367
  %v472 = vpack.c.b16 %v370, %v369
  %v473 = vpack.c.b16 %v372, %v371
  %v474 = vpack.c.b16 %v374, %v373
  %v475 = vpack.c.b16 %v376, %v375
  %v476 = vpack.c.b16 %v378, %v377
  %v477 = vpack.c.b16 %v380, %v379
  %v478 = vpack.c.b16 %v382, %v381
  %v479 = vpack.c.b16 %v384, %v383
  %v480 = vpack.c.b16 %v386, %v385
  %v481 = vpack.c.b16 %v388, %v387
  %v482 = vpack.c.b16 %v390, %v389
  %v483 = vpack.c.b16 %v392, %v391
  %v484 = vpack.c.b16 %v394, %v393
  %v485 = vpack.c.b16 %v396, %v395
  %v486 = vpack.c.b16 %v398, %v397
  %v487 = vpack.c.b16 %v400, %v399
  %v488 = vpack.c.b16 %v402, %v401
  %v489 = vpack.c.b16 %v404, %v403
  %v490 = vpack.c.b16 %v406, %v405
  %v491 = vpack.c.b16 %v408, %v407
  %v492 = vpack.c.b16 %v410, %v409
  %v493 = vpack.c.b16 %v412, %v411
  %v494 = vpack.c.b16 %v414, %v413
  %v495 = vpack.c.b16 %v416, %v415
  %v496 = vpack.c.b16 %v418, %v417
  %v497 = vpack.c.b16 %v420, %v419
  %v498 = vpack.c.b16 %v422, %v421
  %v499 = vpack.c.b16 %v424, %v423
  %v500 = vpack.c.b16 %v426, %v425
  %v501 = vpack.c.b16 %v428, %v427
  %v502 = vpack.c.b16 %v430, %v429
  %v503 = vpack.c.b16 %v432, %v431
  %v504 = vpack.c.b16 %v434, %v433
  %v505 = vpack.c.b16 %v436, %v435
  %v506 = vpack.c.b16 %v438, %v437
  %v507 = vpack.c.b16 %v440, %v439
  %v508 = vpack.c.b16 %v442, %v441
  %v509 = vpack.c.b16 %v444, %v443
  %v510 = vpack.c.b16 %v446, %v445
  %575 = vmatprep.subr.bf16.mxu0 0
  %576 = vmatpush1.bf16.msra.mxu0 %v447
  %577 = vmatprep.subr.bf16.mxu0 0
  %578 = vmatpush1.bf16.msra.mxu0 %v448
  %579 = vmatprep.subr.bf16.mxu0 0
  %580 = vmatpush1.bf16.msra.mxu0 %v449
  %581 = vmatprep.subr.bf16.mxu0 0
  %582 = vmatpush1.bf16.msra.mxu0 %v450
  %583 = vmatprep.subr.bf16.mxu0 0
  %584 = vmatpush1.bf16.msra.mxu0 %v451
  %585 = vmatprep.subr.bf16.mxu0 0
  %586 = vmatpush1.bf16.msra.mxu0 %v452
  %587 = vmatprep.subr.bf16.mxu0 0
  %588 = vmatpush1.bf16.msra.mxu0 %v453
  %589 = vmatprep.subr.bf16.mxu0 0
  %590 = vmatpush1.bf16.msra.mxu0 %v454
  %591 = vmatprep.subr.bf16.mxu0 0
  %592 = vmatpush1.bf16.msra.mxu0 %v455
  %593 = vmatprep.subr.bf16.mxu0 0
  %594 = vmatpush1.bf16.msra.mxu0 %v456
  %595 = vmatprep.subr.bf16.mxu0 0
  %596 = vmatpush1.bf16.msra.mxu0 %v457
  %597 = vmatprep.subr.bf16.mxu0 0
  %598 = vmatpush1.bf16.msra.mxu0 %v458
  %599 = vmatprep.subr.bf16.mxu0 0
  %600 = vmatpush1.bf16.msra.mxu0 %v459
  %601 = vmatprep.subr.bf16.mxu0 0
  %602 = vmatpush1.bf16.msra.mxu0 %v460
  %603 = vmatprep.subr.bf16.mxu0 0
  %604 = vmatpush1.bf16.msra.mxu0 %v461
  %605 = vmatprep.subr.bf16.mxu0 0
  %606 = vmatpush1.bf16.msra.mxu0 %v462
  %607 = vmatprep.mubr.bf16.mxu0 %v52
  %608 = vmatmul.mubr.bf16.gmra.mrb[0].mxu0 %v51
  %v609 = vpop.f32.mrb[0].mxu0
  %v610 = vadd.f32 %v190, %v609
  %v611 = vpop.f32.mrb[0].mxu0
  %v612 = vpop.f32.mrb[0].mxu0
  %v613 = vadd.f32 %v190, %v612
  %v614 = vpop.f32.mrb[0].mxu0
  %615 = vdwg.mxu0
  %616 = vmatprep.subr.bf16.mxu0 0
  %617 = vmatpush1.bf16.msra.mxu0 %v463
  %618 = vmatprep.subr.bf16.mxu0 0
  %619 = vmatpush1.bf16.msra.mxu0 %v464
  %620 = vmatprep.subr.bf16.mxu0 0
  %621 = vmatpush1.bf16.msra.mxu0 %v465
  %622 = vmatprep.subr.bf16.mxu0 0
  %623 = vmatpush1.bf16.msra.mxu0 %v466
  %624 = vmatprep.subr.bf16.mxu0 0
  %625 = vmatpush1.bf16.msra.mxu0 %v467
  %626 = vmatprep.subr.bf16.mxu0 0
  %627 = vmatpush1.bf16.msra.mxu0 %v468
  %628 = vmatprep.subr.bf16.mxu0 0
  %629 = vmatpush1.bf16.msra.mxu0 %v469
  %630 = vmatprep.subr.bf16.mxu0 0
  %631 = vmatpush1.bf16.msra.mxu0 %v470
  %632 = vmatprep.subr.bf16.mxu0 0
  %633 = vmatpush1.bf16.msra.mxu0 %v471
  %634 = vmatprep.subr.bf16.mxu0 0
  %635 = vmatpush1.bf16.msra.mxu0 %v472
  %636 = vmatprep.subr.bf16.mxu0 0
  %637 = vmatpush1.bf16.msra.mxu0 %v473
  %638 = vmatprep.subr.bf16.mxu0 0
  %639 = vmatpush1.bf16.msra.mxu0 %v474
  %640 = vmatprep.subr.bf16.mxu0 0
  %641 = vmatpush1.bf16.msra.mxu0 %v475
  %642 = vmatprep.subr.bf16.mxu0 0
  %643 = vmatpush1.bf16.msra.mxu0 %v476
  %644 = vmatprep.subr.bf16.mxu0 0
  %645 = vmatpush1.bf16.msra.mxu0 %v477
  %646 = vmatprep.subr.bf16.mxu0 0
  %647 = vmatpush1.bf16.msra.mxu0 %v478
  %648 = vmatprep.mubr.bf16.mxu0 %v54
  %649 = vmatmul.mubr.bf16.gmra.mrb[0].mxu0 %v53
  %v650 = vpop.f32.mrb[0].mxu0
  %v651 = vadd.f32 %v610, %v650
  %v652 = vpop.f32.mrb[0].mxu0
  %v653 = vpop.f32.mrb[0].mxu0
  %v654 = vadd.f32 %v613, %v653
  %v655 = vpop.f32.mrb[0].mxu0
  %656 = vdwg.mxu0
  %657 = vmatprep.subr.bf16.mxu0 0
  %658 = vmatpush1.bf16.msra.mxu0 %v479
  %659 = vmatprep.subr.bf16.mxu0 0
  %660 = vmatpush1.bf16.msra.mxu0 %v480
  %661 = vmatprep.subr.bf16.mxu0 0
  %662 = vmatpush1.bf16.msra.mxu0 %v481
  %663 = vmatprep.subr.bf16.mxu0 0
  %664 = vmatpush1.bf16.msra.mxu0 %v482
  %665 = vmatprep.subr.bf16.mxu0 0
  %666 = vmatpush1.bf16.msra.mxu0 %v483
  %667 = vmatprep.subr.bf16.mxu0 0
  %668 = vmatpush1.bf16.msra.mxu0 %v484
  %669 = vmatprep.subr.bf16.mxu0 0
  %670 = vmatpush1.bf16.msra.mxu0 %v485
  %671 = vmatprep.subr.bf16.mxu0 0
  %672 = vmatpush1.bf16.msra.mxu0 %v486
  %673 = vmatprep.subr.bf16.mxu0 0
  %674 = vmatpush1.bf16.msra.mxu0 %v487
  %675 = vmatprep.subr.bf16.mxu0 0
  %676 = vmatpush1.bf16.msra.mxu0 %v488
  %677 = vmatprep.subr.bf16.mxu0 0
  %678 = vmatpush1.bf16.msra.mxu0 %v489
  %679 = vmatprep.subr.bf16.mxu0 0
  %680 = vmatpush1.bf16.msra.mxu0 %v490
  %681 = vmatprep.subr.bf16.mxu0 0
  %682 = vmatpush1.bf16.msra.mxu0 %v491
  %683 = vmatprep.subr.bf16.mxu0 0
  %684 = vmatpush1.bf16.msra.mxu0 %v492
  %685 = vmatprep.subr.bf16.mxu0 0
  %686 = vmatpush1.bf16.msra.mxu0 %v493
  %687 = vmatprep.subr.bf16.mxu0 0
  %688 = vmatpush1.bf16.msra.mxu0 %v494
  %689 = vmatprep.mubr.bf16.mxu0 %v56
  %690 = vmatmul.mubr.bf16.gmra.mrb[0].mxu0 %v55
  %v691 = vpop.f32.mrb[0].mxu0
  %v692 = vadd.f32 %v651, %v691
  %v693 = vpop.f32.mrb[0].mxu0
  %v694 = vpop.f32.mrb[0].mxu0
  %v695 = vadd.f32 %v654, %v694
  %v696 = vpop.f32.mrb[0].mxu0
  %697 = vdwg.mxu0
  %698 = vmatprep.subr.bf16.mxu0 0
  %699 = vmatpush1.bf16.msra.mxu0 %v495
  %700 = vmatprep.subr.bf16.mxu0 0
  %701 = vmatpush1.bf16.msra.mxu0 %v496
  %702 = vmatprep.subr.bf16.mxu0 0
  %703 = vmatpush1.bf16.msra.mxu0 %v497
  %704 = vmatprep.subr.bf16.mxu0 0
  %705 = vmatpush1.bf16.msra.mxu0 %v498
  %706 = vmatprep.subr.bf16.mxu0 0
  %707 = vmatpush1.bf16.msra.mxu0 %v499
  %708 = vmatprep.subr.bf16.mxu0 0
  %709 = vmatpush1.bf16.msra.mxu0 %v500
  %710 = vmatprep.subr.bf16.mxu0 0
  %711 = vmatpush1.bf16.msra.mxu0 %v501
  %712 = vmatprep.subr.bf16.mxu0 0
  %713 = vmatpush1.bf16.msra.mxu0 %v502
  %714 = vmatprep.subr.bf16.mxu0 0
  %715 = vmatpush1.bf16.msra.mxu0 %v503
  %716 = vmatprep.subr.bf16.mxu0 0
  %717 = vmatpush1.bf16.msra.mxu0 %v504
  %718 = vmatprep.subr.bf16.mxu0 0
  %719 = vmatpush1.bf16.msra.mxu0 %v505
  %720 = vmatprep.subr.bf16.mxu0 0
  %721 = vmatpush1.bf16.msra.mxu0 %v506
  %722 = vmatprep.subr.bf16.mxu0 0
  %723 = vmatpush1.bf16.msra.mxu0 %v507
  %724 = vmatprep.subr.bf16.mxu0 0
  %725 = vmatpush1.bf16.msra.mxu0 %v508
  %726 = vmatprep.subr.bf16.mxu0 0
  %727 = vmatpush1.bf16.msra.mxu0 %v509
  %728 = vmatprep.subr.bf16.mxu0 0
  %729 = vmatpush1.bf16.msra.mxu0 %v510
  %730 = vmatprep.mubr.bf16.mxu0 %v58
  %731 = vmatmul.mubr.bf16.gmra.mrb[0].mxu0 %v57
  %v732 = vpop.f32.mrb[0].mxu0
  %v733 = vadd.f32 %v692, %v732
  %v734 = vpop.f32.mrb[0].mxu0
  %v735 = vpop.f32.mrb[0].mxu0
  %v736 = vadd.f32 %v695, %v735
  %v737 = vpop.f32.mrb[0].mxu0
  %738 = vdwg.mxu0
  %vm739 = vcmask 261120
  %v740 = vsel %vm739, %v733, 0.0
  %741 = vadd.xlane.f32.xlu0 %v740
  %v742 = vpop.xlane.xlu0 %741
  %v743 = vsel %vm739, %v736, 0.0
  %744 = vadd.xlane.f32.xlu0 %v743
  %v745 = vpop.xlane.xlu0 %744
  %v746 = vrcp.pop 32.0
  %v747 = vmul.f32 %v742, %v746
  %v748 = vmul.f32 %v745, %v746
  %v749 = vsub.f32 %v733, %v747
  %v750 = vsub.f32 %v736, %v748
  %v751 = vmul.f32 %v749, %v749
  %v752 = vmul.f32 %v750, %v750
  %v753 = vsel %vm739, %v751, 0.0
  %754 = vadd.xlane.f32.xlu0 %v753
  %v755 = vpop.xlane.xlu0 %754
  %v756 = vsel %vm739, %v752, 0.0
  %757 = vadd.xlane.f32.xlu0 %v756
  %v758 = vpop.xlane.xlu0 %757
  %v759 = vmul.f32 %v755, %v746
  %v760 = vmul.f32 %v758, %v746
  %v761 = vadd.f32 %v759, 1e-05
  %v762 = vadd.f32 %v760, 1e-05
  %v763 = vrsqrt.pop %v761
  %v764 = vrsqrt.pop %v762
  %v765 = vmul.f32 %v749, %v763
  %v766 = vmul.f32 %v750, %v764
  %v767 = vlaneseq
  %v768 = vshrl.u32 %v767, 7
  %v769 = vsub.s32 1, %v768
  %v770 = vrot.slane %v33, %v769
  %v771 = vmul.f32 %v765, %v770
  %v772 = vmul.f32 %v766, %v770
  %v773 = vlaneseq
  %v774 = vshrl.u32 %v773, 7
  %v775 = vsub.s32 2, %v774
  %v776 = vrot.slane %v33, %v775
  %v777 = vadd.f32 %v771, %v776
  %v778 = vadd.f32 %v772, %v776
  %v779 = vtanh.pop %v777
  %v780 = vtanh.pop %v778
  %v781 = vld [vmem:[%s1] sm:$0xff]
  %v782 = vld [vmem:[%s1 + $0x8] sm:$0xff]
  %v783 = vpack.c.bf16 %v782, %v781
  %v784 = vpack.c.bf16 %v780, %v779
  %v785 = vld [vmem:[%s3] sm:$0xf]
  %v786 = vld [vmem:[%s3 + $0x4] sm:$0xf]
  %v787 = vld [vmem:[%s3 + $0x8] sm:$0xf]
  %v788 = vld [vmem:[%s3 + $0xc] sm:$0xf]
  %v789 = vld [vmem:[%s4] sm:$0x7]
  %vm790 = vcmask 48128
  %v792 = vsel %vm790, %v783, 0
  %vm794 = vcmask 1042432
  %v796 = vsel %vm794, %v789, 0
  %798 = vmatprep.subr.bf16.mxu0 0
  %799 = vmatpush1.bf16.msra.mxu0 %v796
  %800 = vmatprep.subr.bf16.mxu0 0
  %801 = vmatpush1.bf16.msra.mxu0 0
  %802 = vmatprep.subr.bf16.mxu0 0
  %803 = vmatpush1.bf16.msra.mxu0 0
  %804 = vmatprep.subr.bf16.mxu0 0
  %805 = vmatpush1.bf16.msra.mxu0 0
  %806 = vmatprep.subr.bf16.mxu0 0
  %807 = vmatpush1.bf16.msra.mxu0 0
  %808 = vmatprep.subr.bf16.mxu0 0
  %809 = vmatpush1.bf16.msra.mxu0 0
  %810 = vmatprep.subr.bf16.mxu0 0
  %811 = vmatpush1.bf16.msra.mxu0 0
  %812 = vmatprep.subr.bf16.mxu0 0
  %813 = vmatpush1.bf16.msra.mxu0 0
  %814 = vmatprep.subr.bf16.mxu0 0
  %815 = vmatpush1.bf16.msra.mxu0 0
  %816 = vmatprep.subr.bf16.mxu0 0
  %817 = vmatpush1.bf16.msra.mxu0 0
  %818 = vmatprep.subr.bf16.mxu0 0
  %819 = vmatpush1.bf16.msra.mxu0 0
  %820 = vmatprep.subr.bf16.mxu0 0
  %821 = vmatpush1.bf16.msra.mxu0 0
  %822 = vmatprep.subr.bf16.mxu0 0
  %823 = vmatpush1.bf16.msra.mxu0 0
  %824 = vmatprep.subr.bf16.mxu0 0
  %825 = vmatpush1.bf16.msra.mxu0 0
  %826 = vmatprep.subr.bf16.mxu0 0
  %827 = vmatpush1.bf16.msra.mxu0 0
  %828 = vmatprep.subr.bf16.mxu0 0
  %829 = vmatpush1.bf16.msra.mxu0 0
  %830 = vmatprep.mubr.bf16.mxu0 0
  %831 = vmatmul.mubr.bf16.gmra.mrb[0].mxu0 %v792
  %v832 = vpop.f32.mrb[0].mxu0
  %v833 = vadd.f32 0.0, %v832
  %v834 = vpop.f32.mrb[0].mxu0
  %v835 = vpop.f32.mrb[0].mxu0
  %v836 = vadd.f32 0.0, %v835
  %v837 = vpop.f32.mrb[0].mxu0
  %838 = vdwg.mxu0
  %v843 = vunpack.c.l.b16 %v785
  %v844 = vunpack.c.l.b16 %v786
  %v845 = vunpack.c.l.b16 %v787
  %v846 = vunpack.c.l.b16 %v788
  %v847 = vpack.c.b16 %v844, %v843
  %v848 = vpack.c.b16 %v846, %v845
  %v852 = vsel %vm739, %v784, 0
  %854 = vmatprep.subr.bf16.mxu0 0
  %855 = vmatpush1.bf16.msra.mxu0 %v847
  %856 = vmatprep.subr.bf16.mxu0 0
  %857 = vmatpush1.bf16.msra.mxu0 %v848
  %858 = vmatprep.subr.bf16.mxu0 0
  %859 = vmatpush1.bf16.msra.mxu0 0
  %860 = vmatprep.subr.bf16.mxu0 0
  %861 = vmatpush1.bf16.msra.mxu0 0
  %862 = vmatprep.subr.bf16.mxu0 0
  %863 = vmatpush1.bf16.msra.mxu0 0
  %864 = vmatprep.subr.bf16.mxu0 0
  %865 = vmatpush1.bf16.msra.mxu0 0
  %866 = vmatprep.subr.bf16.mxu0 0
  %867 = vmatpush1.bf16.msra.mxu0 0
  %868 = vmatprep.subr.bf16.mxu0 0
  %869 = vmatpush1.bf16.msra.mxu0 0
  %870 = vmatprep.subr.bf16.mxu0 0
  %871 = vmatpush1.bf16.msra.mxu0 0
  %872 = vmatprep.subr.bf16.mxu0 0
  %873 = vmatpush1.bf16.msra.mxu0 0
  %874 = vmatprep.subr.bf16.mxu0 0
  %875 = vmatpush1.bf16.msra.mxu0 0
  %876 = vmatprep.subr.bf16.mxu0 0
  %877 = vmatpush1.bf16.msra.mxu0 0
  %878 = vmatprep.subr.bf16.mxu0 0
  %879 = vmatpush1.bf16.msra.mxu0 0
  %880 = vmatprep.subr.bf16.mxu0 0
  %881 = vmatpush1.bf16.msra.mxu0 0
  %882 = vmatprep.subr.bf16.mxu0 0
  %883 = vmatpush1.bf16.msra.mxu0 0
  %884 = vmatprep.subr.bf16.mxu0 0
  %885 = vmatpush1.bf16.msra.mxu0 0
  %886 = vmatprep.mubr.bf16.mxu0 0
  %887 = vmatmul.mubr.bf16.gmra.mrb[0].mxu0 %v852
  %v888 = vpop.f32.mrb[0].mxu0
  %v889 = vadd.f32 %v833, %v888
  %v890 = vpop.f32.mrb[0].mxu0
  %v891 = vpop.f32.mrb[0].mxu0
  %v892 = vadd.f32 %v836, %v891
  %v893 = vpop.f32.mrb[0].mxu0
  %894 = vdwg.mxu0
  %v895 = vlaneseq
  %v896 = vshrl.u32 %v895, 7
  %v897 = vsub.s32 3, %v896
  %v898 = vrot.slane %v33, %v897
  %v899 = vadd.f32 %v889, %v898
  %v900 = vadd.f32 %v892, %v898
  %v901 = vsel %vm739, %v899, 0.0
  %902 = vadd.xlane.f32.xlu0 %v901
  %v903 = vpop.xlane.xlu0 %902
  %v904 = vsel %vm739, %v900, 0.0
  %905 = vadd.xlane.f32.xlu0 %v904
  %v906 = vpop.xlane.xlu0 %905
  %v907 = vmul.f32 %v903, %v746
  %v908 = vmul.f32 %v906, %v746
  %v909 = vsub.f32 %v899, %v907
  %v910 = vsub.f32 %v900, %v908
  %v911 = vmul.f32 %v909, %v909
  %v912 = vmul.f32 %v910, %v910
  %v913 = vsel %vm739, %v911, 0.0
  %914 = vadd.xlane.f32.xlu0 %v913
  %v915 = vpop.xlane.xlu0 %914
  %v916 = vsel %vm739, %v912, 0.0
  %917 = vadd.xlane.f32.xlu0 %v916
  %v918 = vpop.xlane.xlu0 %917
  %v919 = vmul.f32 %v915, %v746
  %v920 = vmul.f32 %v918, %v746
  %v921 = vadd.f32 %v919, 1e-05
  %v922 = vadd.f32 %v920, 1e-05
  %v923 = vrsqrt.pop %v921
  %v924 = vrsqrt.pop %v922
  %v925 = vmul.f32 %v909, %v923
  %v926 = vmul.f32 %v910, %v924
  %v927 = vlaneseq
  %v928 = vshrl.u32 %v927, 7
  %v929 = vsub.s32 4, %v928
  %v930 = vrot.slane %v33, %v929
  %v931 = vmul.f32 %v925, %v930
  %v932 = vmul.f32 %v926, %v930
  %v933 = vlaneseq
  %v934 = vshrl.u32 %v933, 7
  %v935 = vsub.s32 5, %v934
  %v936 = vrot.slane %v33, %v935
  %v937 = vadd.f32 %v931, %v936
  %v938 = vadd.f32 %v932, %v936
  %v939 = vmax.f32 %v937, 0.0
  %v940 = vmax.f32 %v938, 0.0
  %943 = vrot.lane.b32.xlu0 %v899, 96
  %v944 = vpop.permute.xlu0 %943
  %945 = vrot.lane.b32.xlu0 %v900, 96
  %v946 = vpop.permute.xlu0 %945
  %v949 = vsel %vm739, %v944, 0.0
  %950 = vadd.xlane.f32.xlu0 %v949
  %v951 = vpop.xlane.xlu0 %950
  %v952 = vsel %vm739, %v946, 0.0
  %953 = vadd.xlane.f32.xlu0 %v952
  %v954 = vpop.xlane.xlu0 %953
  %v955 = vmul.f32 %v951, %v746
  %v956 = vmul.f32 %v954, %v746
  %v957 = vsub.f32 %v899, %v955
  %v958 = vsub.f32 %v900, %v956
  %v959 = vmul.f32 %v957, %v957
  %v960 = vmul.f32 %v958, %v958
  %963 = vrot.lane.b32.xlu0 %v959, 96
  %v964 = vpop.permute.xlu0 %963
  %965 = vrot.lane.b32.xlu0 %v960, 96
  %v966 = vpop.permute.xlu0 %965
  %v969 = vsel %vm739, %v964, 0.0
  %970 = vadd.xlane.f32.xlu0 %v969
  %v971 = vpop.xlane.xlu0 %970
  %v972 = vsel %vm739, %v966, 0.0
  %973 = vadd.xlane.f32.xlu0 %v972
  %v974 = vpop.xlane.xlu0 %973
  %v975 = vmul.f32 %v971, %v746
  %v976 = vmul.f32 %v974, %v746
  %v977 = vadd.f32 %v975, 1e-05
  %v978 = vadd.f32 %v976, 1e-05
  %v979 = vrsqrt.pop %v977
  %v980 = vrsqrt.pop %v978
  %v981 = vmul.f32 %v957, %v979
  %v982 = vmul.f32 %v958, %v980
  %v983 = vmul.f32 %v981, %v930
  %v984 = vmul.f32 %v982, %v930
  %v985 = vadd.f32 %v983, %v936
  %v986 = vadd.f32 %v984, %v936
  %v987 = vmax.f32 %v985, 0.0
  %v988 = vmax.f32 %v986, 0.0
  %v989 = vpack.c.bf16 %v940, %v939
  %v990 = vld [vmem:[%s5] sm:$0xf]
  %v991 = vld [vmem:[%s5 + $0x4] sm:$0xf]
  %v992 = vld [vmem:[%s5 + $0x8] sm:$0xf]
  %v993 = vld [vmem:[%s5 + $0xc] sm:$0xf]
  %v994 = vlaneseq
  %v995 = vshrl.u32 %v994, 7
  %v996 = vsub.s32 6, %v995
  %v997 = vrot.slane %v33, %v996
  %v1002 = vunpack.c.l.b16 %v990
  %v1003 = vunpack.c.l.b16 %v991
  %v1004 = vunpack.c.l.b16 %v992
  %v1005 = vunpack.c.l.b16 %v993
  %v1006 = vpack.c.b16 %v1003, %v1002
  %v1007 = vpack.c.b16 %v1005, %v1004
  %v1011 = vsel %vm739, %v989, 0
  %1013 = vmatprep.subr.bf16.mxu0 0
  %1014 = vmatpush1.bf16.msra.mxu0 %v1006
  %1015 = vmatprep.subr.bf16.mxu0 0
  %1016 = vmatpush1.bf16.msra.mxu0 %v1007
  %1017 = vmatprep.subr.bf16.mxu0 0
  %1018 = vmatpush1.bf16.msra.mxu0 0
  %1019 = vmatprep.subr.bf16.mxu0 0
  %1020 = vmatpush1.bf16.msra.mxu0 0
  %1021 = vmatprep.subr.bf16.mxu0 0
  %1022 = vmatpush1.bf16.msra.mxu0 0
  %1023 = vmatprep.subr.bf16.mxu0 0
  %1024 = vmatpush1.bf16.msra.mxu0 0
  %1025 = vmatprep.subr.bf16.mxu0 0
  %1026 = vmatpush1.bf16.msra.mxu0 0
  %1027 = vmatprep.subr.bf16.mxu0 0
  %1028 = vmatpush1.bf16.msra.mxu0 0
  %1029 = vmatprep.subr.bf16.mxu0 0
  %1030 = vmatpush1.bf16.msra.mxu0 0
  %1031 = vmatprep.subr.bf16.mxu0 0
  %1032 = vmatpush1.bf16.msra.mxu0 0
  %1033 = vmatprep.subr.bf16.mxu0 0
  %1034 = vmatpush1.bf16.msra.mxu0 0
  %1035 = vmatprep.subr.bf16.mxu0 0
  %1036 = vmatpush1.bf16.msra.mxu0 0
  %1037 = vmatprep.subr.bf16.mxu0 0
  %1038 = vmatpush1.bf16.msra.mxu0 0
  %1039 = vmatprep.subr.bf16.mxu0 0
  %1040 = vmatpush1.bf16.msra.mxu0 0
  %1041 = vmatprep.subr.bf16.mxu0 0
  %1042 = vmatpush1.bf16.msra.mxu0 0
  %1043 = vmatprep.subr.bf16.mxu0 0
  %1044 = vmatpush1.bf16.msra.mxu0 0
  %1045 = vmatprep.mubr.bf16.mxu0 0
  %1046 = vmatmul.mubr.bf16.gmra.mrb[0].mxu0 %v1011
  %v1047 = vpop.f32.mrb[0].mxu0
  %v1048 = vadd.f32 %v997, %v1047
  %v1049 = vpop.f32.mrb[0].mxu0
  %v1050 = vpop.f32.mrb[0].mxu0
  %v1051 = vadd.f32 %v997, %v1050
  %v1052 = vpop.f32.mrb[0].mxu0
  %1053 = vdwg.mxu0
  %v1054 = vsel %vm739, %v1048, 0.0
  %1055 = vadd.xlane.f32.xlu0 %v1054
  %v1056 = vpop.xlane.xlu0 %1055
  %v1057 = vsel %vm739, %v1051, 0.0
  %1058 = vadd.xlane.f32.xlu0 %v1057
  %v1059 = vpop.xlane.xlu0 %1058
  %v1060 = vmul.f32 %v1056, %v746
  %v1061 = vmul.f32 %v1059, %v746
  %v1062 = vsub.f32 %v1048, %v1060
  %v1063 = vsub.f32 %v1051, %v1061
  %v1064 = vmul.f32 %v1062, %v1062
  %v1065 = vmul.f32 %v1063, %v1063
  %v1066 = vsel %vm739, %v1064, 0.0
  %1067 = vadd.xlane.f32.xlu0 %v1066
  %v1068 = vpop.xlane.xlu0 %1067
  %v1069 = vsel %vm739, %v1065, 0.0
  %1070 = vadd.xlane.f32.xlu0 %v1069
  %v1071 = vpop.xlane.xlu0 %1070
  %v1072 = vmul.f32 %v1068, %v746
  %v1073 = vmul.f32 %v1071, %v746
  %v1074 = vadd.f32 %v1072, 1e-05
  %v1075 = vadd.f32 %v1073, 1e-05
  %v1076 = vrsqrt.pop %v1074
  %v1077 = vrsqrt.pop %v1075
  %v1078 = vmul.f32 %v1062, %v1076
  %v1079 = vmul.f32 %v1063, %v1077
  %v1080 = vlaneseq
  %v1081 = vshrl.u32 %v1080, 7
  %v1082 = vsub.s32 7, %v1081
  %v1083 = vrot.slane %v33, %v1082
  %v1084 = vmul.f32 %v1078, %v1083
  %v1085 = vmul.f32 %v1079, %v1083
  %v1086 = vlaneseq
  %v1087 = vshrl.u32 %v1086, 7
  %v1088 = vsub.s32 0, %v1087
  %v1089 = vrot.slane %v34, %v1088
  %v1090 = vadd.f32 %v1084, %v1089
  %v1091 = vadd.f32 %v1085, %v1089
  %v1092 = vmax.f32 %v1090, 0.0
  %v1093 = vmax.f32 %v1091, 0.0
  %v1094 = vpack.c.bf16 %v988, %v987
  %v1095 = vld [vmem:[%s6] sm:$0xf]
  %v1096 = vld [vmem:[%s6 + $0x4] sm:$0xf]
  %v1097 = vld [vmem:[%s6 + $0x8] sm:$0xf]
  %v1098 = vld [vmem:[%s6 + $0xc] sm:$0xf]
  %1100 = vrot.lane.b32.xlu0 %v1094, 96
  %v1101 = vpop.permute.xlu0 %1100
  %v1106 = vunpack.c.l.b16 %v1095
  %v1107 = vunpack.c.l.b16 %v1096
  %v1108 = vunpack.c.l.b16 %v1097
  %v1109 = vunpack.c.l.b16 %v1098
  %v1110 = vpack.c.b16 %v1107, %v1106
  %v1111 = vpack.c.b16 %v1109, %v1108
  %1115 = vrot.lane.b32.xlu0 %v997, 96
  %v1116 = vpop.permute.xlu0 %1115
  %v1119 = vsel %vm739, %v1101, 0
  %1121 = vmatprep.subr.bf16.mxu0 0
  %1122 = vmatpush1.bf16.msra.mxu0 %v1110
  %1123 = vmatprep.subr.bf16.mxu0 0
  %1124 = vmatpush1.bf16.msra.mxu0 %v1111
  %1125 = vmatprep.subr.bf16.mxu0 0
  %1126 = vmatpush1.bf16.msra.mxu0 0
  %1127 = vmatprep.subr.bf16.mxu0 0
  %1128 = vmatpush1.bf16.msra.mxu0 0
  %1129 = vmatprep.subr.bf16.mxu0 0
  %1130 = vmatpush1.bf16.msra.mxu0 0
  %1131 = vmatprep.subr.bf16.mxu0 0
  %1132 = vmatpush1.bf16.msra.mxu0 0
  %1133 = vmatprep.subr.bf16.mxu0 0
  %1134 = vmatpush1.bf16.msra.mxu0 0
  %1135 = vmatprep.subr.bf16.mxu0 0
  %1136 = vmatpush1.bf16.msra.mxu0 0
  %1137 = vmatprep.subr.bf16.mxu0 0
  %1138 = vmatpush1.bf16.msra.mxu0 0
  %1139 = vmatprep.subr.bf16.mxu0 0
  %1140 = vmatpush1.bf16.msra.mxu0 0
  %1141 = vmatprep.subr.bf16.mxu0 0
  %1142 = vmatpush1.bf16.msra.mxu0 0
  %1143 = vmatprep.subr.bf16.mxu0 0
  %1144 = vmatpush1.bf16.msra.mxu0 0
  %1145 = vmatprep.subr.bf16.mxu0 0
  %1146 = vmatpush1.bf16.msra.mxu0 0
  %1147 = vmatprep.subr.bf16.mxu0 0
  %1148 = vmatpush1.bf16.msra.mxu0 0
  %1149 = vmatprep.subr.bf16.mxu0 0
  %1150 = vmatpush1.bf16.msra.mxu0 0
  %1151 = vmatprep.subr.bf16.mxu0 0
  %1152 = vmatpush1.bf16.msra.mxu0 0
  %1153 = vmatprep.mubr.bf16.mxu0 0
  %1154 = vmatmul.mubr.bf16.gmra.mrb[0].mxu0 %v1119
  %v1155 = vpop.f32.mrb[0].mxu0
  %v1156 = vadd.f32 %v1116, %v1155
  %v1157 = vpop.f32.mrb[0].mxu0
  %v1158 = vpop.f32.mrb[0].mxu0
  %v1159 = vadd.f32 %v1116, %v1158
  %v1160 = vpop.f32.mrb[0].mxu0
  %1161 = vdwg.mxu0
  %v1162 = vsel %vm739, %v1156, 0.0
  %1163 = vadd.xlane.f32.xlu0 %v1162
  %v1164 = vpop.xlane.xlu0 %1163
  %v1165 = vsel %vm739, %v1159, 0.0
  %1166 = vadd.xlane.f32.xlu0 %v1165
  %v1167 = vpop.xlane.xlu0 %1166
  %v1168 = vmul.f32 %v1164, %v746
  %v1169 = vmul.f32 %v1167, %v746
  %v1170 = vsub.f32 %v1156, %v1168
  %v1171 = vsub.f32 %v1159, %v1169
  %v1172 = vmul.f32 %v1170, %v1170
  %v1173 = vmul.f32 %v1171, %v1171
  %v1174 = vsel %vm739, %v1172, 0.0
  %1175 = vadd.xlane.f32.xlu0 %v1174
  %v1176 = vpop.xlane.xlu0 %1175
  %v1177 = vsel %vm739, %v1173, 0.0
  %1178 = vadd.xlane.f32.xlu0 %v1177
  %v1179 = vpop.xlane.xlu0 %1178
  %v1180 = vmul.f32 %v1176, %v746
  %v1181 = vmul.f32 %v1179, %v746
  %v1182 = vadd.f32 %v1180, 1e-05
  %v1183 = vadd.f32 %v1181, 1e-05
  %v1184 = vrsqrt.pop %v1182
  %v1185 = vrsqrt.pop %v1183
  %v1186 = vmul.f32 %v1170, %v1184
  %v1187 = vmul.f32 %v1171, %v1185
  %1189 = vrot.lane.b32.xlu0 %v1083, 96
  %v1190 = vpop.permute.xlu0 %1189
  %v1192 = vmul.f32 %v1186, %v1190
  %v1193 = vmul.f32 %v1187, %v1190
  %1195 = vrot.lane.b32.xlu0 %v1089, 96
  %v1196 = vpop.permute.xlu0 %1195
  %v1198 = vadd.f32 %v1192, %v1196
  %v1199 = vadd.f32 %v1193, %v1196
  %v1200 = vmax.f32 %v1198, 0.0
  %v1201 = vmax.f32 %v1199, 0.0
  %1204 = vrot.lane.b32.xlu0 %v1200, 32
  %v1205 = vpop.permute.xlu0 %1204
  %1206 = vrot.lane.b32.xlu0 %v1201, 32
  %v1207 = vpop.permute.xlu0 %1206
  %v1210 = vsel %vm739, %v1092, %v1205
  %v1211 = vsel %vm739, %v1093, %v1207
  %v1212 = vpack.c.bf16 %v1211, %v1210
  %v1213 = vld [vmem:[%s7] sm:$0xf]
  %v1214 = vld [vmem:[%s7 + $0x4] sm:$0xf]
  %v1215 = vld [vmem:[%s7 + $0x8] sm:$0xf]
  %v1216 = vld [vmem:[%s7 + $0xc] sm:$0xf]
  %v1217 = vld [vmem:[%s7 + $0x10] sm:$0xf]
  %v1218 = vld [vmem:[%s7 + $0x14] sm:$0xf]
  %v1219 = vld [vmem:[%s7 + $0x18] sm:$0xf]
  %v1220 = vld [vmem:[%s7 + $0x1c] sm:$0xf]
  %v1221 = vlaneseq
  %v1222 = vshrl.u32 %v1221, 7
  %v1223 = vsub.s32 1, %v1222
  %v1224 = vrot.slane %v34, %v1223
  %v1233 = vunpack.c.l.b16 %v1213
  %v1234 = vunpack.c.l.b16 %v1214
  %v1235 = vunpack.c.l.b16 %v1215
  %v1236 = vunpack.c.l.b16 %v1216
  %v1237 = vunpack.c.l.b16 %v1217
  %v1238 = vunpack.c.l.b16 %v1218
  %v1239 = vunpack.c.l.b16 %v1219
  %v1240 = vunpack.c.l.b16 %v1220
  %v1241 = vpack.c.b16 %v1234, %v1233
  %v1242 = vpack.c.b16 %v1236, %v1235
  %v1243 = vpack.c.b16 %v1238, %v1237
  %v1244 = vpack.c.b16 %v1240, %v1239
  %vm1249 = vcmask 523264
  %v1251 = vsel %vm1249, %v1212, 0
  %1253 = vmatprep.subr.bf16.mxu0 0
  %1254 = vmatpush1.bf16.msra.mxu0 %v1241
  %1255 = vmatprep.subr.bf16.mxu0 0
  %1256 = vmatpush1.bf16.msra.mxu0 %v1242
  %1257 = vmatprep.subr.bf16.mxu0 0
  %1258 = vmatpush1.bf16.msra.mxu0 %v1243
  %1259 = vmatprep.subr.bf16.mxu0 0
  %1260 = vmatpush1.bf16.msra.mxu0 %v1244
  %1261 = vmatprep.subr.bf16.mxu0 0
  %1262 = vmatpush1.bf16.msra.mxu0 0
  %1263 = vmatprep.subr.bf16.mxu0 0
  %1264 = vmatpush1.bf16.msra.mxu0 0
  %1265 = vmatprep.subr.bf16.mxu0 0
  %1266 = vmatpush1.bf16.msra.mxu0 0
  %1267 = vmatprep.subr.bf16.mxu0 0
  %1268 = vmatpush1.bf16.msra.mxu0 0
  %1269 = vmatprep.subr.bf16.mxu0 0
  %1270 = vmatpush1.bf16.msra.mxu0 0
  %1271 = vmatprep.subr.bf16.mxu0 0
  %1272 = vmatpush1.bf16.msra.mxu0 0
  %1273 = vmatprep.subr.bf16.mxu0 0
  %1274 = vmatpush1.bf16.msra.mxu0 0
  %1275 = vmatprep.subr.bf16.mxu0 0
  %1276 = vmatpush1.bf16.msra.mxu0 0
  %1277 = vmatprep.subr.bf16.mxu0 0
  %1278 = vmatpush1.bf16.msra.mxu0 0
  %1279 = vmatprep.subr.bf16.mxu0 0
  %1280 = vmatpush1.bf16.msra.mxu0 0
  %1281 = vmatprep.subr.bf16.mxu0 0
  %1282 = vmatpush1.bf16.msra.mxu0 0
  %1283 = vmatprep.subr.bf16.mxu0 0
  %1284 = vmatpush1.bf16.msra.mxu0 0
  %1285 = vmatprep.mubr.bf16.mxu0 0
  %1286 = vmatmul.mubr.bf16.gmra.mrb[0].mxu0 %v1251
  %v1287 = vpop.f32.mrb[0].mxu0
  %v1288 = vadd.f32 %v1224, %v1287
  %v1289 = vpop.f32.mrb[0].mxu0
  %v1290 = vpop.f32.mrb[0].mxu0
  %v1291 = vadd.f32 %v1224, %v1290
  %v1292 = vpop.f32.mrb[0].mxu0
  %1293 = vdwg.mxu0
  %vm1294 = vcmask 15360
  %1295 = vst.msk [vmem:[%s9] sm:$0xff] %vm1294, %v1288
  %1296 = vst.msk [vmem:[%s9 + $0x8] sm:$0xff] %vm1294, %v1291
  // Predicated region
  $region38: #{tpu_custom_call.1} parent=0 // pred_check
    _
  $region39: #{tpu_custom_call.1} parent=0 // pred_check_branch
    %1298 = sbr.rel (0) target = $region41
  $region40: #{tpu_custom_call.1} parent=0 // pred_region
    _
  $region41: #{tpu_custom_call.1} parent=0 // pred_fallthru
    _
  // Predicated region
  $region42: #{tpu_custom_call.1} parent=0 // pred_check
    _
  $region43: #{tpu_custom_call.1} parent=0 // pred_check_branch
    %1300 = sbr.rel (0) target = $region45
  $region44: #{tpu_custom_call.1} parent=0 // pred_region
    _
  $region45: #{tpu_custom_call.1} parent=0 // pred_fallthru
    _

// kernel: tpu_custom_call.1
$region0: #{tpu_custom_call.1}
  #allocation0 [shape = 'u32[]', space=smem, size = 0x4, offset = 0x4, fixed_abs, tag = 'smem constant byte address 0x4 - core index']
  #allocation1 [shape = 'u32[144,128]{1,0:T(1,128)}', space=vmem, size = 0x12000, scoped, tag = 'internal scratch']
  %s0 = inlined_call_operand.vmem [shape: f32[16,1024], index: 0, kind: input, shape index: {}]
  %s1 = inlined_call_operand.vmem [shape: f32[16,6], index: 1, kind: input, shape index: {}]
  %s2 = inlined_call_operand.vmem [shape: bf16[1024,32], index: 2, kind: input, shape index: {}]
  %s3 = inlined_call_operand.vmem [shape: bf16[32,64], index: 3, kind: input, shape index: {}]
  %s4 = inlined_call_operand.vmem [shape: bf16[6,64], index: 4, kind: input, shape index: {}]
  %s5 = inlined_call_operand.vmem [shape: bf16[32,32], index: 5, kind: input, shape index: {}]
  %s6 = inlined_call_operand.vmem [shape: bf16[32,32], index: 6, kind: input, shape index: {}]
  %s7 = inlined_call_operand.vmem [shape: bf16[64,2], index: 7, kind: input, shape index: {}]
  %s8 = inlined_call_operand.vmem [shape: f32[10,128], index: 8, kind: input, shape index: {}]
  %s9 = inlined_call_operand.vmem [shape: f32[16,2], index: 9, kind: output, shape index: {}]
  %s10 = sld [smem:[#allocation0]]
  $region46: #{tpu_custom_call.1} parent=0
    _
  %s12 = ssub.s32 1, %s10
  %s13 = scalar_select 0, %s12, %s10
  // Predicated region
  $region2: #{tpu_custom_call.1} parent=0 // pred_check
    _
  $region3: #{tpu_custom_call.1} parent=0 // pred_check_branch
    %15 = sbr.rel (0) target = $region5
  $region4: #{tpu_custom_call.1} parent=0 // pred_region
    _
  $region5: #{tpu_custom_call.1} parent=0 // pred_fallthru
    _
  // Predicated region
  $region6: #{tpu_custom_call.1} parent=0 // pred_check
    _
  $region7: #{tpu_custom_call.1} parent=0 // pred_check_branch
    %17 = sbr.rel (0) target = $region9
  $region8: #{tpu_custom_call.1} parent=0 // pred_region
    _
  $region9: #{tpu_custom_call.1} parent=0 // pred_fallthru
    _
  // Predicated region
  $region10: #{tpu_custom_call.1} parent=0 // pred_check
    _
  $region11: #{tpu_custom_call.1} parent=0 // pred_check_branch
    %19 = sbr.rel (0) target = $region13
  $region12: #{tpu_custom_call.1} parent=0 // pred_region
    _
  $region13: #{tpu_custom_call.1} parent=0 // pred_fallthru
    _
  // Predicated region
  $region14: #{tpu_custom_call.1} parent=0 // pred_check
    _
  $region15: #{tpu_custom_call.1} parent=0 // pred_check_branch
    %21 = sbr.rel (0) target = $region17
  $region16: #{tpu_custom_call.1} parent=0 // pred_region
    _
  $region17: #{tpu_custom_call.1} parent=0 // pred_fallthru
    _
  // Predicated region
  $region18: #{tpu_custom_call.1} parent=0 // pred_check
    _
  $region19: #{tpu_custom_call.1} parent=0 // pred_check_branch
    %23 = sbr.rel (0) target = $region21
  $region20: #{tpu_custom_call.1} parent=0 // pred_region
    _
  $region21: #{tpu_custom_call.1} parent=0 // pred_fallthru
    _
  // Predicated region
  $region22: #{tpu_custom_call.1} parent=0 // pred_check
    _
  $region23: #{tpu_custom_call.1} parent=0 // pred_check_branch
    %25 = sbr.rel (0) target = $region25
  $region24: #{tpu_custom_call.1} parent=0 // pred_region
    _
  $region25: #{tpu_custom_call.1} parent=0 // pred_fallthru
    _
  // Predicated region
  $region26: #{tpu_custom_call.1} parent=0 // pred_check
    _
  $region27: #{tpu_custom_call.1} parent=0 // pred_check_branch
    %27 = sbr.rel (0) target = $region29
  $region28: #{tpu_custom_call.1} parent=0 // pred_region
    _
  $region29: #{tpu_custom_call.1} parent=0 // pred_fallthru
    _
  // Predicated region
  $region30: #{tpu_custom_call.1} parent=0 // pred_check
    _
  $region31: #{tpu_custom_call.1} parent=0 // pred_check_branch
    %29 = sbr.rel (0) target = $region33
  $region32: #{tpu_custom_call.1} parent=0 // pred_region
    _
  $region33: #{tpu_custom_call.1} parent=0 // pred_fallthru
    _
  // Predicated region
  $region34: #{tpu_custom_call.1} parent=0 // pred_check
    _
  $region35: #{tpu_custom_call.1} parent=0 // pred_check_branch
    %31 = sbr.rel (0) target = $region37
  $region36: #{tpu_custom_call.1} parent=0 // pred_region
    _
  $region37: #{tpu_custom_call.1} parent=0 // pred_fallthru
    _
  %v33 = vld [vmem:[%s8] sm:$0xff]
  %v34 = vld [vmem:[%s8 + $0x8] sm:$0x3]
  %v35 = vld [vmem:[%s0] sm:$0xff]
  %v36 = vld [vmem:[%s0 + $0x8] sm:$0xff]
  %v37 = vld [vmem:[%s0 + $0x10] sm:$0xff]
  %v38 = vld [vmem:[%s0 + $0x18] sm:$0xff]
  %v39 = vld [vmem:[%s0 + $0x20] sm:$0xff]
  %v40 = vld [vmem:[%s0 + $0x28] sm:$0xff]
  %v41 = vld [vmem:[%s0 + $0x30] sm:$0xff]
  %v42 = vld [vmem:[%s0 + $0x38] sm:$0xff]
  %v43 = vld [vmem:[%s0 + $0x40] sm:$0xff]
  %v44 = vld [vmem:[%s0 + $0x48] sm:$0xff]
  %v45 = vld [vmem:[%s0 + $0x50] sm:$0xff]
  %v46 = vld [vmem:[%s0 + $0x58] sm:$0xff]
  %v47 = vld [vmem:[%s0 + $0x60] sm:$0xff]
  %v48 = vld [vmem:[%s0 + $0x68] sm:$0xff]
  %v49 = vld [vmem:[%s0 + $0x70] sm:$0xff]
  %v50 = vld [vmem:[%s0 + $0x78] sm:$0xff]
  %v51 = vpack.c.bf16 %v43, %v35
  %v52 = vpack.c.bf16 %v44, %v36
  %v53 = vpack.c.bf16 %v45, %v37
  %v54 = vpack.c.bf16 %v46, %v38
  %v55 = vpack.c.bf16 %v47, %v39
  %v56 = vpack.c.bf16 %v48, %v40
  %v57 = vpack.c.bf16 %v49, %v41
  %v58 = vpack.c.bf16 %v50, %v42
  %v59 = vld [vmem:[%s2] sm:$0xf]
  %v60 = vld [vmem:[%s2 + $0x4] sm:$0xf]
  %v61 = vld [vmem:[%s2 + $0x8] sm:$0xf]
  %v62 = vld [vmem:[%s2 + $0xc] sm:$0xf]
  %v63 = vld [vmem:[%s2 + $0x10] sm:$0xf]
  %v64 = vld [vmem:[%s2 + $0x14] sm:$0xf]
  %v65 = vld [vmem:[%s2 + $0x18] sm:$0xf]
  %v66 = vld [vmem:[%s2 + $0x1c] sm:$0xf]
  %v67 = vld [vmem:[%s2 + $0x20] sm:$0xf]
  %v68 = vld [vmem:[%s2 + $0x24] sm:$0xf]
  %v69 = vld [vmem:[%s2 + $0x28] sm:$0xf]
  %v70 = vld [vmem:[%s2 + $0x2c] sm:$0xf]
  %v71 = vld [vmem:[%s2 + $0x30] sm:$0xf]
  %v72 = vld [vmem:[%s2 + $0x34] sm:$0xf]
  %v73 = vld [vmem:[%s2 + $0x38] sm:$0xf]
  %v74 = vld [vmem:[%s2 + $0x3c] sm:$0xf]
  %v75 = vld [vmem:[%s2 + $0x40] sm:$0xf]
  %v76 = vld [vmem:[%s2 + $0x44] sm:$0xf]
  %v77 = vld [vmem:[%s2 + $0x48] sm:$0xf]
  %v78 = vld [vmem:[%s2 + $0x4c] sm:$0xf]
  %v79 = vld [vmem:[%s2 + $0x50] sm:$0xf]
  %v80 = vld [vmem:[%s2 + $0x54] sm:$0xf]
  %v81 = vld [vmem:[%s2 + $0x58] sm:$0xf]
  %v82 = vld [vmem:[%s2 + $0x5c] sm:$0xf]
  %v83 = vld [vmem:[%s2 + $0x60] sm:$0xf]
  %v84 = vld [vmem:[%s2 + $0x64] sm:$0xf]
  %v85 = vld [vmem:[%s2 + $0x68] sm:$0xf]
  %v86 = vld [vmem:[%s2 + $0x6c] sm:$0xf]
  %v87 = vld [vmem:[%s2 + $0x70] sm:$0xf]
  %v88 = vld [vmem:[%s2 + $0x74] sm:$0xf]
  %v89 = vld [vmem:[%s2 + $0x78] sm:$0xf]
  %v90 = vld [vmem:[%s2 + $0x7c] sm:$0xf]
  %v91 = vld [vmem:[%s2 + $0x80] sm:$0xf]
  %v92 = vld [vmem:[%s2 + $0x84] sm:$0xf]
  %v93 = vld [vmem:[%s2 + $0x88] sm:$0xf]
  %v94 = vld [vmem:[%s2 + $0x8c] sm:$0xf]
  %v95 = vld [vmem:[%s2 + $0x90] sm:$0xf]
  %v96 = vld [vmem:[%s2 + $0x94] sm:$0xf]
  %v97 = vld [vmem:[%s2 + $0x98] sm:$0xf]
  %v98 = vld [vmem:[%s2 + $0x9c] sm:$0xf]
  %v99 = vld [vmem:[%s2 + $0xa0] sm:$0xf]
  %v100 = vld [vmem:[%s2 + $0xa4] sm:$0xf]
  %v101 = vld [vmem:[%s2 + $0xa8] sm:$0xf]
  %v102 = vld [vmem:[%s2 + $0xac] sm:$0xf]
  %v103 = vld [vmem:[%s2 + $0xb0] sm:$0xf]
  %v104 = vld [vmem:[%s2 + $0xb4] sm:$0xf]
  %v105 = vld [vmem:[%s2 + $0xb8] sm:$0xf]
  %v106 = vld [vmem:[%s2 + $0xbc] sm:$0xf]
  %v107 = vld [vmem:[%s2 + $0xc0] sm:$0xf]
  %v108 = vld [vmem:[%s2 + $0xc4] sm:$0xf]
  %v109 = vld [vmem:[%s2 + $0xc8] sm:$0xf]
  %v110 = vld [vmem:[%s2 + $0xcc] sm:$0xf]
  %v111 = vld [vmem:[%s2 + $0xd0] sm:$0xf]
  %v112 = vld [vmem:[%s2 + $0xd4] sm:$0xf]
  %v113 = vld [vmem:[%s2 + $0xd8] sm:$0xf]
  %v114 = vld [vmem:[%s2 + $0xdc] sm:$0xf]
  %v115 = vld [vmem:[%s2 + $0xe0] sm:$0xf]
  %v116 = vld [vmem:[%s2 + $0xe4] sm:$0xf]
  %v117 = vld [vmem:[%s2 + $0xe8] sm:$0xf]
  %v118 = vld [vmem:[%s2 + $0xec] sm:$0xf]
  %v119 = vld [vmem:[%s2 + $0xf0] sm:$0xf]
  %v120 = vld [vmem:[%s2 + $0xf4] sm:$0xf]
  %v121 = vld [vmem:[%s2 + $0xf8] sm:$0xf]
  %v122 = vld [vmem:[%s2 + $0xfc] sm:$0xf]
  %v123 = vld [vmem:[%s2 + $0x100] sm:$0xf]
  %v124 = vld [vmem:[%s2 + $0x104] sm:$0xf]
  %v125 = vld [vmem:[%s2 + $0x108] sm:$0xf]
  %v126 = vld [vmem:[%s2 + $0x10c] sm:$0xf]
  %v127 = vld [vmem:[%s2 + $0x110] sm:$0xf]
  %v128 = vld [vmem:[%s2 + $0x114] sm:$0xf]
  %v129 = vld [vmem:[%s2 + $0x118] sm:$0xf]
  %v130 = vld [vmem:[%s2 + $0x11c] sm:$0xf]
  %v131 = vld [vmem:[%s2 + $0x120] sm:$0xf]
  %v132 = vld [vmem:[%s2 + $0x124] sm:$0xf]
  %v133 = vld [vmem:[%s2 + $0x128] sm:$0xf]
  %v134 = vld [vmem:[%s2 + $0x12c] sm:$0xf]
  %v135 = vld [vmem:[%s2 + $0x130] sm:$0xf]
  %v136 = vld [vmem:[%s2 + $0x134] sm:$0xf]
  %v137 = vld [vmem:[%s2 + $0x138] sm:$0xf]
  %v138 = vld [vmem:[%s2 + $0x13c] sm:$0xf]
  %v139 = vld [vmem:[%s2 + $0x140] sm:$0xf]
  %v140 = vld [vmem:[%s2 + $0x144] sm:$0xf]
  %v141 = vld [vmem:[%s2 + $0x148] sm:$0xf]
  %v142 = vld [vmem:[%s2 + $0x14c] sm:$0xf]
  %v143 = vld [vmem:[%s2 + $0x150] sm:$0xf]
  %v144 = vld [vmem:[%s2 + $0x154] sm:$0xf]
  %v145 = vld [vmem:[%s2 + $0x158] sm:$0xf]
  %v146 = vld [vmem:[%s2 + $0x15c] sm:$0xf]
  %v147 = vld [vmem:[%s2 + $0x160] sm:$0xf]
  %v148 = vld [vmem:[%s2 + $0x164] sm:$0xf]
  %v149 = vld [vmem:[%s2 + $0x168] sm:$0xf]
  %v150 = vld [vmem:[%s2 + $0x16c] sm:$0xf]
  %v151 = vld [vmem:[%s2 + $0x170] sm:$0xf]
  %v152 = vld [vmem:[%s2 + $0x174] sm:$0xf]
  %v153 = vld [vmem:[%s2 + $0x178] sm:$0xf]
  %v154 = vld [vmem:[%s2 + $0x17c] sm:$0xf]
  %v155 = vld [vmem:[%s2 + $0x180] sm:$0xf]
  %v156 = vld [vmem:[%s2 + $0x184] sm:$0xf]
  %v157 = vld [vmem:[%s2 + $0x188] sm:$0xf]
  %v158 = vld [vmem:[%s2 + $0x18c] sm:$0xf]
  %v159 = vld [vmem:[%s2 + $0x190] sm:$0xf]
  %v160 = vld [vmem:[%s2 + $0x194] sm:$0xf]
  %v161 = vld [vmem:[%s2 + $0x198] sm:$0xf]
  %v162 = vld [vmem:[%s2 + $0x19c] sm:$0xf]
  %v163 = vld [vmem:[%s2 + $0x1a0] sm:$0xf]
  %v164 = vld [vmem:[%s2 + $0x1a4] sm:$0xf]
  %v165 = vld [vmem:[%s2 + $0x1a8] sm:$0xf]
  %v166 = vld [vmem:[%s2 + $0x1ac] sm:$0xf]
  %v167 = vld [vmem:[%s2 + $0x1b0] sm:$0xf]
  %v168 = vld [vmem:[%s2 + $0x1b4] sm:$0xf]
  %v169 = vld [vmem:[%s2 + $0x1b8] sm:$0xf]
  %v170 = vld [vmem:[%s2 + $0x1bc] sm:$0xf]
  %v171 = vld [vmem:[%s2 + $0x1c0] sm:$0xf]
  %v172 = vld [vmem:[%s2 + $0x1c4] sm:$0xf]
  %v173 = vld [vmem:[%s2 + $0x1c8] sm:$0xf]
  %v174 = vld [vmem:[%s2 + $0x1cc] sm:$0xf]
  %v175 = vld [vmem:[%s2 + $0x1d0] sm:$0xf]
  %v176 = vld [vmem:[%s2 + $0x1d4] sm:$0xf]
  %v177 = vld [vmem:[%s2 + $0x1d8] sm:$0xf]
  %v178 = vld [vmem:[%s2 + $0x1dc] sm:$0xf]
  %v179 = vld [vmem:[%s2 + $0x1e0] sm:$0xf]
  %v180 = vld [vmem:[%s2 + $0x1e4] sm:$0xf]
  %v181 = vld [vmem:[%s2 + $0x1e8] sm:$0xf]
  %v182 = vld [vmem:[%s2 + $0x1ec] sm:$0xf]
  %v183 = vld [vmem:[%s2 + $0x1f0] sm:$0xf]
  %v184 = vld [vmem:[%s2 + $0x1f4] sm:$0xf]
  %v185 = vld [vmem:[%s2 + $0x1f8] sm:$0xf]
  %v186 = vld [vmem:[%s2 + $0x1fc] sm:$0xf]
  %v187 = vlaneseq
  %v188 = vshrl.u32 %v187, 7
  %v189 = vsub.s32 0, %v188
  %v190 = vrot.slane %v33, %v189
  %v319 = vunpack.c.l.b16 %v59
  %v320 = vunpack.c.l.b16 %v60
  %v321 = vunpack.c.l.b16 %v61
  %v322 = vunpack.c.l.b16 %v62
  %v323 = vunpack.c.l.b16 %v63
  %v324 = vunpack.c.l.b16 %v64
  %v325 = vunpack.c.l.b16 %v65
  %v326 = vunpack.c.l.b16 %v66
  %v327 = vunpack.c.l.b16 %v67
  %v328 = vunpack.c.l.b16 %v68
  %v329 = vunpack.c.l.b16 %v69
  %v330 = vunpack.c.l.b16 %v70
  %v331 = vunpack.c.l.b16 %v71
  %v332 = vunpack.c.l.b16 %v72
  %v333 = vunpack.c.l.b16 %v73
  %v334 = vunpack.c.l.b16 %v74
  %v335 = vunpack.c.l.b16 %v75
  %v336 = vunpack.c.l.b16 %v76
  %v337 = vunpack.c.l.b16 %v77
  %v338 = vunpack.c.l.b16 %v78
  %v339 = vunpack.c.l.b16 %v79
  %v340 = vunpack.c.l.b16 %v80
  %v341 = vunpack.c.l.b16 %v81
  %v342 = vunpack.c.l.b16 %v82
  %v343 = vunpack.c.l.b16 %v83
  %v344 = vunpack.c.l.b16 %v84
  %v345 = vunpack.c.l.b16 %v85
  %v346 = vunpack.c.l.b16 %v86
  %v347 = vunpack.c.l.b16 %v87
  %v348 = vunpack.c.l.b16 %v88
  %v349 = vunpack.c.l.b16 %v89
  %v350 = vunpack.c.l.b16 %v90
  %v351 = vunpack.c.l.b16 %v91
  %v352 = vunpack.c.l.b16 %v92
  %v353 = vunpack.c.l.b16 %v93
  %v354 = vunpack.c.l.b16 %v94
  %v355 = vunpack.c.l.b16 %v95
  %v356 = vunpack.c.l.b16 %v96
  %v357 = vunpack.c.l.b16 %v97
  %v358 = vunpack.c.l.b16 %v98
  %v359 = vunpack.c.l.b16 %v99
  %v360 = vunpack.c.l.b16 %v100
  %v361 = vunpack.c.l.b16 %v101
  %v362 = vunpack.c.l.b16 %v102
  %v363 = vunpack.c.l.b16 %v103
  %v364 = vunpack.c.l.b16 %v104
  %v365 = vunpack.c.l.b16 %v105
  %v366 = vunpack.c.l.b16 %v106
  %v367 = vunpack.c.l.b16 %v107
  %v368 = vunpack.c.l.b16 %v108
  %v369 = vunpack.c.l.b16 %v109
  %v370 = vunpack.c.l.b16 %v110
  %v371 = vunpack.c.l.b16 %v111
  %v372 = vunpack.c.l.b16 %v112
  %v373 = vunpack.c.l.b16 %v113
  %v374 = vunpack.c.l.b16 %v114
  %v375 = vunpack.c.l.b16 %v115
  %v376 = vunpack.c.l.b16 %v116
  %v377 = vunpack.c.l.b16 %v117
  %v378 = vunpack.c.l.b16 %v118
  %v379 = vunpack.c.l.b16 %v119
  %v380 = vunpack.c.l.b16 %v120
  %v381 = vunpack.c.l.b16 %v121
  %v382 = vunpack.c.l.b16 %v122
  %v383 = vunpack.c.l.b16 %v123
  %v384 = vunpack.c.l.b16 %v124
  %v385 = vunpack.c.l.b16 %v125
  %v386 = vunpack.c.l.b16 %v126
  %v387 = vunpack.c.l.b16 %v127
  %v388 = vunpack.c.l.b16 %v128
  %v389 = vunpack.c.l.b16 %v129
  %v390 = vunpack.c.l.b16 %v130
  %v391 = vunpack.c.l.b16 %v131
  %v392 = vunpack.c.l.b16 %v132
  %v393 = vunpack.c.l.b16 %v133
  %v394 = vunpack.c.l.b16 %v134
  %v395 = vunpack.c.l.b16 %v135
  %v396 = vunpack.c.l.b16 %v136
  %v397 = vunpack.c.l.b16 %v137
  %v398 = vunpack.c.l.b16 %v138
  %v399 = vunpack.c.l.b16 %v139
  %v400 = vunpack.c.l.b16 %v140
  %v401 = vunpack.c.l.b16 %v141
  %v402 = vunpack.c.l.b16 %v142
  %v403 = vunpack.c.l.b16 %v143
  %v404 = vunpack.c.l.b16 %v144
  %v405 = vunpack.c.l.b16 %v145
  %v406 = vunpack.c.l.b16 %v146
  %v407 = vunpack.c.l.b16 %v147
  %v408 = vunpack.c.l.b16 %v148
  %v409 = vunpack.c.l.b16 %v149
  %v410 = vunpack.c.l.b16 %v150
  %v411 = vunpack.c.l.b16 %v151
  %v412 = vunpack.c.l.b16 %v152
  %v413 = vunpack.c.l.b16 %v153
  %v414 = vunpack.c.l.b16 %v154
  %v415 = vunpack.c.l.b16 %v155
  %v416 = vunpack.c.l.b16 %v156
  %v417 = vunpack.c.l.b16 %v157
  %v418 = vunpack.c.l.b16 %v158
  %v419 = vunpack.c.l.b16 %v159
  %v420 = vunpack.c.l.b16 %v160
  %v421 = vunpack.c.l.b16 %v161
  %v422 = vunpack.c.l.b16 %v162
  %v423 = vunpack.c.l.b16 %v163
  %v424 = vunpack.c.l.b16 %v164
  %v425 = vunpack.c.l.b16 %v165
  %v426 = vunpack.c.l.b16 %v166
  %v427 = vunpack.c.l.b16 %v167
  %v428 = vunpack.c.l.b16 %v168
  %v429 = vunpack.c.l.b16 %v169
  %v430 = vunpack.c.l.b16 %v170
  %v431 = vunpack.c.l.b16 %v171
  %v432 = vunpack.c.l.b16 %v172
  %v433 = vunpack.c.l.b16 %v173
  %v434 = vunpack.c.l.b16 %v174
  %v435 = vunpack.c.l.b16 %v175
  %v436 = vunpack.c.l.b16 %v176
  %v437 = vunpack.c.l.b16 %v177
  %v438 = vunpack.c.l.b16 %v178
  %v439 = vunpack.c.l.b16 %v179
  %v440 = vunpack.c.l.b16 %v180
  %v441 = vunpack.c.l.b16 %v181
  %v442 = vunpack.c.l.b16 %v182
  %v443 = vunpack.c.l.b16 %v183
  %v444 = vunpack.c.l.b16 %v184
  %v445 = vunpack.c.l.b16 %v185
  %v446 = vunpack.c.l.b16 %v186
  %v447 = vpack.c.b16 %v320, %v319
  %v448 = vpack.c.b16 %v322, %v321
  %v449 = vpack.c.b16 %v324, %v323
  %v450 = vpack.c.b16 %v326, %v325
  %v451 = vpack.c.b16 %v328, %v327
  %v452 = vpack.c.b16 %v330, %v329
  %v453 = vpack.c.b16 %v332, %v331
  %v454 = vpack.c.b16 %v334, %v333
  %v455 = vpack.c.b16 %v336, %v335
  %v456 = vpack.c.b16 %v338, %v337
  %v457 = vpack.c.b16 %v340, %v339
  %v458 = vpack.c.b16 %v342, %v341
  %v459 = vpack.c.b16 %v344, %v343
  %v460 = vpack.c.b16 %v346, %v345
  %v461 = vpack.c.b16 %v348, %v347
  %v462 = vpack.c.b16 %v350, %v349
  %v463 = vpack.c.b16 %v352, %v351
  %v464 = vpack.c.b16 %v354, %v353
  %v465 = vpack.c.b16 %v356, %v355
  %v466 = vpack.c.b16 %v358, %v357
  %v467 = vpack.c.b16 %v360, %v359
  %v468 = vpack.c.b16 %v362, %v361
  %v469 = vpack.c.b16 %v364, %v363
  %v470 = vpack.c.b16 %v366, %v365
  %v471 = vpack.c.b16 %v368, %v367
  %v472 = vpack.c.b16 %v370, %v369
  %v473 = vpack.c.b16 %v372, %v371
  %v474 = vpack.c.b16 %v374, %v373
  %v475 = vpack.c.b16 %v376, %v375
  %v476 = vpack.c.b16 %v378, %v377
  %v477 = vpack.c.b16 %v380, %v379
  %v478 = vpack.c.b16 %v382, %v381
  %v479 = vpack.c.b16 %v384, %v383
  %v480 = vpack.c.b16 %v386, %v385
  %v481 = vpack.c.b16 %v388, %v387
  %v482 = vpack.c.b16 %v390, %v389
  %v483 = vpack.c.b16 %v392, %v391
  %v484 = vpack.c.b16 %v394, %v393
  %v485 = vpack.c.b16 %v396, %v395
  %v486 = vpack.c.b16 %v398, %v397
  %v487 = vpack.c.b16 %v400, %v399
  %v488 = vpack.c.b16 %v402, %v401
  %v489 = vpack.c.b16 %v404, %v403
  %v490 = vpack.c.b16 %v406, %v405
  %v491 = vpack.c.b16 %v408, %v407
  %v492 = vpack.c.b16 %v410, %v409
  %v493 = vpack.c.b16 %v412, %v411
  %v494 = vpack.c.b16 %v414, %v413
  %v495 = vpack.c.b16 %v416, %v415
  %v496 = vpack.c.b16 %v418, %v417
  %v497 = vpack.c.b16 %v420, %v419
  %v498 = vpack.c.b16 %v422, %v421
  %v499 = vpack.c.b16 %v424, %v423
  %v500 = vpack.c.b16 %v426, %v425
  %v501 = vpack.c.b16 %v428, %v427
  %v502 = vpack.c.b16 %v430, %v429
  %v503 = vpack.c.b16 %v432, %v431
  %v504 = vpack.c.b16 %v434, %v433
  %v505 = vpack.c.b16 %v436, %v435
  %v506 = vpack.c.b16 %v438, %v437
  %v507 = vpack.c.b16 %v440, %v439
  %v508 = vpack.c.b16 %v442, %v441
  %v509 = vpack.c.b16 %v444, %v443
  %v510 = vpack.c.b16 %v446, %v445
  %575 = vmatprep.subr.bf16.mxu0 0
  %576 = vmatpush1.bf16.msra.mxu0 %v447
  %577 = vmatprep.subr.bf16.mxu0 0
  %578 = vmatpush1.bf16.msra.mxu0 %v448
  %579 = vmatprep.subr.bf16.mxu0 0
  %580 = vmatpush1.bf16.msra.mxu0 %v449
  %581 = vmatprep.subr.bf16.mxu0 0
  %582 = vmatpush1.bf16.msra.mxu0 %v450
  %583 = vmatprep.subr.bf16.mxu0 0
  %584 = vmatpush1.bf16.msra.mxu0 %v451
  %585 = vmatprep.subr.bf16.mxu0 0
  %586 = vmatpush1.bf16.msra.mxu0 %v452
  %587 = vmatprep.subr.bf16.mxu0 0
  %588 = vmatpush1.bf16.msra.mxu0 %v453
  %589 = vmatprep.subr.bf16.mxu0 0
  %590 = vmatpush1.bf16.msra.mxu0 %v454
  %591 = vmatprep.subr.bf16.mxu0 0
  %592 = vmatpush1.bf16.msra.mxu0 %v455
  %593 = vmatprep.subr.bf16.mxu0 0
  %594 = vmatpush1.bf16.msra.mxu0 %v456
  %595 = vmatprep.subr.bf16.mxu0 0
  %596 = vmatpush1.bf16.msra.mxu0 %v457
  %597 = vmatprep.subr.bf16.mxu0 0
  %598 = vmatpush1.bf16.msra.mxu0 %v458
  %599 = vmatprep.subr.bf16.mxu0 0
  %600 = vmatpush1.bf16.msra.mxu0 %v459
  %601 = vmatprep.subr.bf16.mxu0 0
  %602 = vmatpush1.bf16.msra.mxu0 %v460
  %603 = vmatprep.subr.bf16.mxu0 0
  %604 = vmatpush1.bf16.msra.mxu0 %v461
  %605 = vmatprep.subr.bf16.mxu0 0
  %606 = vmatpush1.bf16.msra.mxu0 %v462
  %607 = vmatprep.mubr.bf16.mxu0 %v52
  %608 = vmatmul.mubr.bf16.gmra.mrb[0].mxu0 %v51
  %v609 = vpop.f32.mrb[0].mxu0
  %v610 = vadd.f32 %v190, %v609
  %v611 = vpop.f32.mrb[0].mxu0
  %v612 = vpop.f32.mrb[0].mxu0
  %v613 = vadd.f32 %v190, %v612
  %v614 = vpop.f32.mrb[0].mxu0
  %615 = vdwg.mxu0
  %616 = vmatprep.subr.bf16.mxu0 0
  %617 = vmatpush1.bf16.msra.mxu0 %v463
  %618 = vmatprep.subr.bf16.mxu0 0
  %619 = vmatpush1.bf16.msra.mxu0 %v464
  %620 = vmatprep.subr.bf16.mxu0 0
  %621 = vmatpush1.bf16.msra.mxu0 %v465
  %622 = vmatprep.subr.bf16.mxu0 0
  %623 = vmatpush1.bf16.msra.mxu0 %v466
  %624 = vmatprep.subr.bf16.mxu0 0
  %625 = vmatpush1.bf16.msra.mxu0 %v467
  %626 = vmatprep.subr.bf16.mxu0 0
  %627 = vmatpush1.bf16.msra.mxu0 %v468
  %628 = vmatprep.subr.bf16.mxu0 0
  %629 = vmatpush1.bf16.msra.mxu0 %v469
  %630 = vmatprep.subr.bf16.mxu0 0
  %631 = vmatpush1.bf16.msra.mxu0 %v470
  %632 = vmatprep.subr.bf16.mxu0 0
  %633 = vmatpush1.bf16.msra.mxu0 %v471
  %634 = vmatprep.subr.bf16.mxu0 0
  %635 = vmatpush1.bf16.msra.mxu0 %v472
  %636 = vmatprep.subr.bf16.mxu0 0
  %637 = vmatpush1.bf16.msra.mxu0 %v473
  %638 = vmatprep.subr.bf16.mxu0 0
  %639 = vmatpush1.bf16.msra.mxu0 %v474
  %640 = vmatprep.subr.bf16.mxu0 0
  %641 = vmatpush1.bf16.msra.mxu0 %v475
  %642 = vmatprep.subr.bf16.mxu0 0
  %643 = vmatpush1.bf16.msra.mxu0 %v476
  %644 = vmatprep.subr.bf16.mxu0 0
  %645 = vmatpush1.bf16.msra.mxu0 %v477
  %646 = vmatprep.subr.bf16.mxu0 0
  %647 = vmatpush1.bf16.msra.mxu0 %v478
  %648 = vmatprep.mubr.bf16.mxu0 %v54
  %649 = vmatmul.mubr.bf16.gmra.mrb[0].mxu0 %v53
  %v650 = vpop.f32.mrb[0].mxu0
  %v651 = vadd.f32 %v610, %v650
  %v652 = vpop.f32.mrb[0].mxu0
  %v653 = vpop.f32.mrb[0].mxu0
  %v654 = vadd.f32 %v613, %v653
  %v655 = vpop.f32.mrb[0].mxu0
  %656 = vdwg.mxu0
  %657 = vmatprep.subr.bf16.mxu0 0
  %658 = vmatpush1.bf16.msra.mxu0 %v479
  %659 = vmatprep.subr.bf16.mxu0 0
  %660 = vmatpush1.bf16.msra.mxu0 %v480
  %661 = vmatprep.subr.bf16.mxu0 0
  %662 = vmatpush1.bf16.msra.mxu0 %v481
  %663 = vmatprep.subr.bf16.mxu0 0
  %664 = vmatpush1.bf16.msra.mxu0 %v482
  %665 = vmatprep.subr.bf16.mxu0 0
  %666 = vmatpush1.bf16.msra.mxu0 %v483
  %667 = vmatprep.subr.bf16.mxu0 0
  %668 = vmatpush1.bf16.msra.mxu0 %v484
  %669 = vmatprep.subr.bf16.mxu0 0
  %670 = vmatpush1.bf16.msra.mxu0 %v485
  %671 = vmatprep.subr.bf16.mxu0 0
  %672 = vmatpush1.bf16.msra.mxu0 %v486
  %673 = vmatprep.subr.bf16.mxu0 0
  %674 = vmatpush1.bf16.msra.mxu0 %v487
  %675 = vmatprep.subr.bf16.mxu0 0
  %676 = vmatpush1.bf16.msra.mxu0 %v488
  %677 = vmatprep.subr.bf16.mxu0 0
  %678 = vmatpush1.bf16.msra.mxu0 %v489
  %679 = vmatprep.subr.bf16.mxu0 0
  %680 = vmatpush1.bf16.msra.mxu0 %v490
  %681 = vmatprep.subr.bf16.mxu0 0
  %682 = vmatpush1.bf16.msra.mxu0 %v491
  %683 = vmatprep.subr.bf16.mxu0 0
  %684 = vmatpush1.bf16.msra.mxu0 %v492
  %685 = vmatprep.subr.bf16.mxu0 0
  %686 = vmatpush1.bf16.msra.mxu0 %v493
  %687 = vmatprep.subr.bf16.mxu0 0
  %688 = vmatpush1.bf16.msra.mxu0 %v494
  %689 = vmatprep.mubr.bf16.mxu0 %v56
  %690 = vmatmul.mubr.bf16.gmra.mrb[0].mxu0 %v55
  %v691 = vpop.f32.mrb[0].mxu0
  %v692 = vadd.f32 %v651, %v691
  %v693 = vpop.f32.mrb[0].mxu0
  %v694 = vpop.f32.mrb[0].mxu0
  %v695 = vadd.f32 %v654, %v694
  %v696 = vpop.f32.mrb[0].mxu0
  %697 = vdwg.mxu0
  %698 = vmatprep.subr.bf16.mxu0 0
  %699 = vmatpush1.bf16.msra.mxu0 %v495
  %700 = vmatprep.subr.bf16.mxu0 0
  %701 = vmatpush1.bf16.msra.mxu0 %v496
  %702 = vmatprep.subr.bf16.mxu0 0
  %703 = vmatpush1.bf16.msra.mxu0 %v497
  %704 = vmatprep.subr.bf16.mxu0 0
  %705 = vmatpush1.bf16.msra.mxu0 %v498
  %706 = vmatprep.subr.bf16.mxu0 0
  %707 = vmatpush1.bf16.msra.mxu0 %v499
  %708 = vmatprep.subr.bf16.mxu0 0
  %709 = vmatpush1.bf16.msra.mxu0 %v500
  %710 = vmatprep.subr.bf16.mxu0 0
  %711 = vmatpush1.bf16.msra.mxu0 %v501
  %712 = vmatprep.subr.bf16.mxu0 0
  %713 = vmatpush1.bf16.msra.mxu0 %v502
  %714 = vmatprep.subr.bf16.mxu0 0
  %715 = vmatpush1.bf16.msra.mxu0 %v503
  %716 = vmatprep.subr.bf16.mxu0 0
  %717 = vmatpush1.bf16.msra.mxu0 %v504
  %718 = vmatprep.subr.bf16.mxu0 0
  %719 = vmatpush1.bf16.msra.mxu0 %v505
  %720 = vmatprep.subr.bf16.mxu0 0
  %721 = vmatpush1.bf16.msra.mxu0 %v506
  %722 = vmatprep.subr.bf16.mxu0 0
  %723 = vmatpush1.bf16.msra.mxu0 %v507
  %724 = vmatprep.subr.bf16.mxu0 0
  %725 = vmatpush1.bf16.msra.mxu0 %v508
  %726 = vmatprep.subr.bf16.mxu0 0
  %727 = vmatpush1.bf16.msra.mxu0 %v509
  %728 = vmatprep.subr.bf16.mxu0 0
  %729 = vmatpush1.bf16.msra.mxu0 %v510
  %730 = vmatprep.mubr.bf16.mxu0 %v58
  %731 = vmatmul.mubr.bf16.gmra.mrb[0].mxu0 %v57
  %v732 = vpop.f32.mrb[0].mxu0
  %v733 = vadd.f32 %v692, %v732
  %v734 = vpop.f32.mrb[0].mxu0
  %v735 = vpop.f32.mrb[0].mxu0
  %v736 = vadd.f32 %v695, %v735
  %v737 = vpop.f32.mrb[0].mxu0
  %738 = vdwg.mxu0
  %vm739 = vcmask 261120
  %v740 = vsel %vm739, %v733, 0.0
  %741 = vadd.xlane.f32.xlu0 %v740
  %v742 = vpop.xlane.xlu0 %741
  %v743 = vsel %vm739, %v736, 0.0
  %744 = vadd.xlane.f32.xlu0 %v743
  %v745 = vpop.xlane.xlu0 %744
  %v746 = vrcp.pop 32.0
  %v747 = vmul.f32 %v742, %v746
  %v748 = vmul.f32 %v745, %v746
  %v749 = vsub.f32 %v733, %v747
  %v750 = vsub.f32 %v736, %v748
  %v751 = vmul.f32 %v749, %v749
  %v752 = vmul.f32 %v750, %v750
  %v753 = vsel %vm739, %v751, 0.0
  %754 = vadd.xlane.f32.xlu0 %v753
  %v755 = vpop.xlane.xlu0 %754
  %v756 = vsel %vm739, %v752, 0.0
  %757 = vadd.xlane.f32.xlu0 %v756
  %v758 = vpop.xlane.xlu0 %757
  %v759 = vmul.f32 %v755, %v746
  %v760 = vmul.f32 %v758, %v746
  %v761 = vadd.f32 %v759, 1e-05
  %v762 = vadd.f32 %v760, 1e-05
  %v763 = vrsqrt.pop %v761
  %v764 = vrsqrt.pop %v762
  %v765 = vmul.f32 %v749, %v763
  %v766 = vmul.f32 %v750, %v764
  %v767 = vlaneseq
  %v768 = vshrl.u32 %v767, 7
  %v769 = vsub.s32 1, %v768
  %v770 = vrot.slane %v33, %v769
  %v771 = vmul.f32 %v765, %v770
  %v772 = vmul.f32 %v766, %v770
  %v773 = vlaneseq
  %v774 = vshrl.u32 %v773, 7
  %v775 = vsub.s32 2, %v774
  %v776 = vrot.slane %v33, %v775
  %v777 = vadd.f32 %v771, %v776
  %v778 = vadd.f32 %v772, %v776
  %v779 = vtanh.pop %v777
  %v780 = vtanh.pop %v778
  %v781 = vld [vmem:[%s1] sm:$0xff]
  %v782 = vld [vmem:[%s1 + $0x8] sm:$0xff]
  %v783 = vpack.c.bf16 %v782, %v781
  %v784 = vpack.c.bf16 %v780, %v779
  %v785 = vld [vmem:[%s3] sm:$0xf]
  %v786 = vld [vmem:[%s3 + $0x4] sm:$0xf]
  %v787 = vld [vmem:[%s3 + $0x8] sm:$0xf]
  %v788 = vld [vmem:[%s3 + $0xc] sm:$0xf]
  %v789 = vld [vmem:[%s4] sm:$0x7]
  %vm790 = vcmask 48128
  %v792 = vsel %vm790, %v783, 0
  %vm794 = vcmask 1042432
  %v796 = vsel %vm794, %v789, 0
  %798 = vmatprep.subr.bf16.mxu0 0
  %799 = vmatpush1.bf16.msra.mxu0 %v796
  %800 = vmatprep.subr.bf16.mxu0 0
  %801 = vmatpush1.bf16.msra.mxu0 0
  %802 = vmatprep.subr.bf16.mxu0 0
  %803 = vmatpush1.bf16.msra.mxu0 0
  %804 = vmatprep.subr.bf16.mxu0 0
  %805 = vmatpush1.bf16.msra.mxu0 0
  %806 = vmatprep.subr.bf16.mxu0 0
  %807 = vmatpush1.bf16.msra.mxu0 0
  %808 = vmatprep.subr.bf16.mxu0 0
  %809 = vmatpush1.bf16.msra.mxu0 0
  %810 = vmatprep.subr.bf16.mxu0 0
  %811 = vmatpush1.bf16.msra.mxu0 0
  %812 = vmatprep.subr.bf16.mxu0 0
  %813 = vmatpush1.bf16.msra.mxu0 0
  %814 = vmatprep.subr.bf16.mxu0 0
  %815 = vmatpush1.bf16.msra.mxu0 0
  %816 = vmatprep.subr.bf16.mxu0 0
  %817 = vmatpush1.bf16.msra.mxu0 0
  %818 = vmatprep.subr.bf16.mxu0 0
  %819 = vmatpush1.bf16.msra.mxu0 0
  %820 = vmatprep.subr.bf16.mxu0 0
  %821 = vmatpush1.bf16.msra.mxu0 0
  %822 = vmatprep.subr.bf16.mxu0 0
  %823 = vmatpush1.bf16.msra.mxu0 0
  %824 = vmatprep.subr.bf16.mxu0 0
  %825 = vmatpush1.bf16.msra.mxu0 0
  %826 = vmatprep.subr.bf16.mxu0 0
  %827 = vmatpush1.bf16.msra.mxu0 0
  %828 = vmatprep.subr.bf16.mxu0 0
  %829 = vmatpush1.bf16.msra.mxu0 0
  %830 = vmatprep.mubr.bf16.mxu0 0
  %831 = vmatmul.mubr.bf16.gmra.mrb[0].mxu0 %v792
  %v832 = vpop.f32.mrb[0].mxu0
  %v833 = vadd.f32 0.0, %v832
  %v834 = vpop.f32.mrb[0].mxu0
  %v835 = vpop.f32.mrb[0].mxu0
  %v836 = vadd.f32 0.0, %v835
  %v837 = vpop.f32.mrb[0].mxu0
  %838 = vdwg.mxu0
  %v843 = vunpack.c.l.b16 %v785
  %v844 = vunpack.c.l.b16 %v786
  %v845 = vunpack.c.l.b16 %v787
  %v846 = vunpack.c.l.b16 %v788
  %v847 = vpack.c.b16 %v844, %v843
  %v848 = vpack.c.b16 %v846, %v845
  %v852 = vsel %vm739, %v784, 0
  %854 = vmatprep.subr.bf16.mxu0 0
  %855 = vmatpush1.bf16.msra.mxu0 %v847
  %856 = vmatprep.subr.bf16.mxu0 0
  %857 = vmatpush1.bf16.msra.mxu0 %v848
  %858 = vmatprep.subr.bf16.mxu0 0
  %859 = vmatpush1.bf16.msra.mxu0 0
  %860 = vmatprep.subr.bf16.mxu0 0
  %861 = vmatpush1.bf16.msra.mxu0 0
  %862 = vmatprep.subr.bf16.mxu0 0
  %863 = vmatpush1.bf16.msra.mxu0 0
  %864 = vmatprep.subr.bf16.mxu0 0
  %865 = vmatpush1.bf16.msra.mxu0 0
  %866 = vmatprep.subr.bf16.mxu0 0
  %867 = vmatpush1.bf16.msra.mxu0 0
  %868 = vmatprep.subr.bf16.mxu0 0
  %869 = vmatpush1.bf16.msra.mxu0 0
  %870 = vmatprep.subr.bf16.mxu0 0
  %871 = vmatpush1.bf16.msra.mxu0 0
  %872 = vmatprep.subr.bf16.mxu0 0
  %873 = vmatpush1.bf16.msra.mxu0 0
  %874 = vmatprep.subr.bf16.mxu0 0
  %875 = vmatpush1.bf16.msra.mxu0 0
  %876 = vmatprep.subr.bf16.mxu0 0
  %877 = vmatpush1.bf16.msra.mxu0 0
  %878 = vmatprep.subr.bf16.mxu0 0
  %879 = vmatpush1.bf16.msra.mxu0 0
  %880 = vmatprep.subr.bf16.mxu0 0
  %881 = vmatpush1.bf16.msra.mxu0 0
  %882 = vmatprep.subr.bf16.mxu0 0
  %883 = vmatpush1.bf16.msra.mxu0 0
  %884 = vmatprep.subr.bf16.mxu0 0
  %885 = vmatpush1.bf16.msra.mxu0 0
  %886 = vmatprep.mubr.bf16.mxu0 0
  %887 = vmatmul.mubr.bf16.gmra.mrb[0].mxu0 %v852
  %v888 = vpop.f32.mrb[0].mxu0
  %v889 = vadd.f32 %v833, %v888
  %v890 = vpop.f32.mrb[0].mxu0
  %v891 = vpop.f32.mrb[0].mxu0
  %v892 = vadd.f32 %v836, %v891
  %v893 = vpop.f32.mrb[0].mxu0
  %894 = vdwg.mxu0
  %v895 = vlaneseq
  %v896 = vshrl.u32 %v895, 7
  %v897 = vsub.s32 3, %v896
  %v898 = vrot.slane %v33, %v897
  %v899 = vadd.f32 %v889, %v898
  %v900 = vadd.f32 %v892, %v898
  %v901 = vsel %vm739, %v899, 0.0
  %902 = vadd.xlane.f32.xlu0 %v901
  %v903 = vpop.xlane.xlu0 %902
  %v904 = vsel %vm739, %v900, 0.0
  %905 = vadd.xlane.f32.xlu0 %v904
  %v906 = vpop.xlane.xlu0 %905
  %v907 = vmul.f32 %v903, %v746
  %v908 = vmul.f32 %v906, %v746
  %v909 = vsub.f32 %v899, %v907
  %v910 = vsub.f32 %v900, %v908
  %v911 = vmul.f32 %v909, %v909
  %v912 = vmul.f32 %v910, %v910
  %v913 = vsel %vm739, %v911, 0.0
  %914 = vadd.xlane.f32.xlu0 %v913
  %v915 = vpop.xlane.xlu0 %914
  %v916 = vsel %vm739, %v912, 0.0
  %917 = vadd.xlane.f32.xlu0 %v916
  %v918 = vpop.xlane.xlu0 %917
  %v919 = vmul.f32 %v915, %v746
  %v920 = vmul.f32 %v918, %v746
  %v921 = vadd.f32 %v919, 1e-05
  %v922 = vadd.f32 %v920, 1e-05
  %v923 = vrsqrt.pop %v921
  %v924 = vrsqrt.pop %v922
  %v925 = vmul.f32 %v909, %v923
  %v926 = vmul.f32 %v910, %v924
  %v927 = vlaneseq
  %v928 = vshrl.u32 %v927, 7
  %v929 = vsub.s32 4, %v928
  %v930 = vrot.slane %v33, %v929
  %v931 = vmul.f32 %v925, %v930
  %v932 = vmul.f32 %v926, %v930
  %v933 = vlaneseq
  %v934 = vshrl.u32 %v933, 7
  %v935 = vsub.s32 5, %v934
  %v936 = vrot.slane %v33, %v935
  %v937 = vadd.f32 %v931, %v936
  %v938 = vadd.f32 %v932, %v936
  %v939 = vmax.f32 %v937, 0.0
  %v940 = vmax.f32 %v938, 0.0
  %943 = vrot.lane.b32.xlu0 %v899, 96
  %v944 = vpop.permute.xlu0 %943
  %945 = vrot.lane.b32.xlu0 %v900, 96
  %v946 = vpop.permute.xlu0 %945
  %v949 = vsel %vm739, %v944, 0.0
  %950 = vadd.xlane.f32.xlu0 %v949
  %v951 = vpop.xlane.xlu0 %950
  %v952 = vsel %vm739, %v946, 0.0
  %953 = vadd.xlane.f32.xlu0 %v952
  %v954 = vpop.xlane.xlu0 %953
  %v955 = vmul.f32 %v951, %v746
  %v956 = vmul.f32 %v954, %v746
  %v957 = vsub.f32 %v899, %v955
  %v958 = vsub.f32 %v900, %v956
  %v959 = vmul.f32 %v957, %v957
  %v960 = vmul.f32 %v958, %v958
  %963 = vrot.lane.b32.xlu0 %v959, 96
  %v964 = vpop.permute.xlu0 %963
  %965 = vrot.lane.b32.xlu0 %v960, 96
  %v966 = vpop.permute.xlu0 %965
  %v969 = vsel %vm739, %v964, 0.0
  %970 = vadd.xlane.f32.xlu0 %v969
  %v971 = vpop.xlane.xlu0 %970
  %v972 = vsel %vm739, %v966, 0.0
  %973 = vadd.xlane.f32.xlu0 %v972
  %v974 = vpop.xlane.xlu0 %973
  %v975 = vmul.f32 %v971, %v746
  %v976 = vmul.f32 %v974, %v746
  %v977 = vadd.f32 %v975, 1e-05
  %v978 = vadd.f32 %v976, 1e-05
  %v979 = vrsqrt.pop %v977
  %v980 = vrsqrt.pop %v978
  %v981 = vmul.f32 %v957, %v979
  %v982 = vmul.f32 %v958, %v980
  %v983 = vmul.f32 %v981, %v930
  %v984 = vmul.f32 %v982, %v930
  %v985 = vadd.f32 %v983, %v936
  %v986 = vadd.f32 %v984, %v936
  %v987 = vmax.f32 %v985, 0.0
  %v988 = vmax.f32 %v986, 0.0
  %v989 = vpack.c.bf16 %v940, %v939
  %v990 = vld [vmem:[%s5] sm:$0xf]
  %v991 = vld [vmem:[%s5 + $0x4] sm:$0xf]
  %v992 = vld [vmem:[%s5 + $0x8] sm:$0xf]
  %v993 = vld [vmem:[%s5 + $0xc] sm:$0xf]
  %v994 = vlaneseq
  %v995 = vshrl.u32 %v994, 7
  %v996 = vsub.s32 6, %v995
  %v997 = vrot.slane %v33, %v996
  %v1002 = vunpack.c.l.b16 %v990
  %v1003 = vunpack.c.l.b16 %v991
  %v1004 = vunpack.c.l.b16 %v992
  %v1005 = vunpack.c.l.b16 %v993
  %v1006 = vpack.c.b16 %v1003, %v1002
  %v1007 = vpack.c.b16 %v1005, %v1004
  %v1011 = vsel %vm739, %v989, 0
  %1013 = vmatprep.subr.bf16.mxu0 0
  %1014 = vmatpush1.bf16.msra.mxu0 %v1006
  %1015 = vmatprep.subr.bf16.mxu0 0
  %1016 = vmatpush1.bf16.msra.mxu0 %v1007
  %1017 = vmatprep.subr.bf16.mxu0 0
  %1018 = vmatpush1.bf16.msra.mxu0 0
  %1019 = vmatprep.subr.bf16.mxu0 0
  %1020 = vmatpush1.bf16.msra.mxu0 0
  %1021 = vmatprep.subr.bf16.mxu0 0
  %1022 = vmatpush1.bf16.msra.mxu0 0
  %1023 = vmatprep.subr.bf16.mxu0 0
  %1024 = vmatpush1.bf16.msra.mxu0 0
  %1025 = vmatprep.subr.bf16.mxu0 0
  %1026 = vmatpush1.bf16.msra.mxu0 0
  %1027 = vmatprep.subr.bf16.mxu0 0
  %1028 = vmatpush1.bf16.msra.mxu0 0
  %1029 = vmatprep.subr.bf16.mxu0 0
  %1030 = vmatpush1.bf16.msra.mxu0 0
  %1031 = vmatprep.subr.bf16.mxu0 0
  %1032 = vmatpush1.bf16.msra.mxu0 0
  %1033 = vmatprep.subr.bf16.mxu0 0
  %1034 = vmatpush1.bf16.msra.mxu0 0
  %1035 = vmatprep.subr.bf16.mxu0 0
  %1036 = vmatpush1.bf16.msra.mxu0 0
  %1037 = vmatprep.subr.bf16.mxu0 0
  %1038 = vmatpush1.bf16.msra.mxu0 0
  %1039 = vmatprep.subr.bf16.mxu0 0
  %1040 = vmatpush1.bf16.msra.mxu0 0
  %1041 = vmatprep.subr.bf16.mxu0 0
  %1042 = vmatpush1.bf16.msra.mxu0 0
  %1043 = vmatprep.subr.bf16.mxu0 0
  %1044 = vmatpush1.bf16.msra.mxu0 0
  %1045 = vmatprep.mubr.bf16.mxu0 0
  %1046 = vmatmul.mubr.bf16.gmra.mrb[0].mxu0 %v1011
  %v1047 = vpop.f32.mrb[0].mxu0
  %v1048 = vadd.f32 %v997, %v1047
  %v1049 = vpop.f32.mrb[0].mxu0
  %v1050 = vpop.f32.mrb[0].mxu0
  %v1051 = vadd.f32 %v997, %v1050
  %v1052 = vpop.f32.mrb[0].mxu0
  %1053 = vdwg.mxu0
  %v1054 = vsel %vm739, %v1048, 0.0
  %1055 = vadd.xlane.f32.xlu0 %v1054
  %v1056 = vpop.xlane.xlu0 %1055
  %v1057 = vsel %vm739, %v1051, 0.0
  %1058 = vadd.xlane.f32.xlu0 %v1057
  %v1059 = vpop.xlane.xlu0 %1058
  %v1060 = vmul.f32 %v1056, %v746
  %v1061 = vmul.f32 %v1059, %v746
  %v1062 = vsub.f32 %v1048, %v1060
  %v1063 = vsub.f32 %v1051, %v1061
  %v1064 = vmul.f32 %v1062, %v1062
  %v1065 = vmul.f32 %v1063, %v1063
  %v1066 = vsel %vm739, %v1064, 0.0
  %1067 = vadd.xlane.f32.xlu0 %v1066
  %v1068 = vpop.xlane.xlu0 %1067
  %v1069 = vsel %vm739, %v1065, 0.0
  %1070 = vadd.xlane.f32.xlu0 %v1069
  %v1071 = vpop.xlane.xlu0 %1070
  %v1072 = vmul.f32 %v1068, %v746
  %v1073 = vmul.f32 %v1071, %v746
  %v1074 = vadd.f32 %v1072, 1e-05
  %v1075 = vadd.f32 %v1073, 1e-05
  %v1076 = vrsqrt.pop %v1074
  %v1077 = vrsqrt.pop %v1075
  %v1078 = vmul.f32 %v1062, %v1076
  %v1079 = vmul.f32 %v1063, %v1077
  %v1080 = vlaneseq
  %v1081 = vshrl.u32 %v1080, 7
  %v1082 = vsub.s32 7, %v1081
  %v1083 = vrot.slane %v33, %v1082
  %v1084 = vmul.f32 %v1078, %v1083
  %v1085 = vmul.f32 %v1079, %v1083
  %v1086 = vlaneseq
  %v1087 = vshrl.u32 %v1086, 7
  %v1088 = vsub.s32 0, %v1087
  %v1089 = vrot.slane %v34, %v1088
  %v1090 = vadd.f32 %v1084, %v1089
  %v1091 = vadd.f32 %v1085, %v1089
  %v1092 = vmax.f32 %v1090, 0.0
  %v1093 = vmax.f32 %v1091, 0.0
  %v1094 = vpack.c.bf16 %v988, %v987
  %v1095 = vld [vmem:[%s6] sm:$0xf]
  %v1096 = vld [vmem:[%s6 + $0x4] sm:$0xf]
  %v1097 = vld [vmem:[%s6 + $0x8] sm:$0xf]
  %v1098 = vld [vmem:[%s6 + $0xc] sm:$0xf]
  %1100 = vrot.lane.b32.xlu0 %v1094, 96
  %v1101 = vpop.permute.xlu0 %1100
  %v1106 = vunpack.c.l.b16 %v1095
  %v1107 = vunpack.c.l.b16 %v1096
  %v1108 = vunpack.c.l.b16 %v1097
  %v1109 = vunpack.c.l.b16 %v1098
  %v1110 = vpack.c.b16 %v1107, %v1106
  %v1111 = vpack.c.b16 %v1109, %v1108
  %1115 = vrot.lane.b32.xlu0 %v997, 96
  %v1116 = vpop.permute.xlu0 %1115
  %v1119 = vsel %vm739, %v1101, 0
  %1121 = vmatprep.subr.bf16.mxu0 0
  %1122 = vmatpush1.bf16.msra.mxu0 %v1110
  %1123 = vmatprep.subr.bf16.mxu0 0
  %1124 = vmatpush1.bf16.msra.mxu0 %v1111
  %1125 = vmatprep.subr.bf16.mxu0 0
  %1126 = vmatpush1.bf16.msra.mxu0 0
  %1127 = vmatprep.subr.bf16.mxu0 0
  %1128 = vmatpush1.bf16.msra.mxu0 0
  %1129 = vmatprep.subr.bf16.mxu0 0
  %1130 = vmatpush1.bf16.msra.mxu0 0
  %1131 = vmatprep.subr.bf16.mxu0 0
  %1132 = vmatpush1.bf16.msra.mxu0 0
  %1133 = vmatprep.subr.bf16.mxu0 0
  %1134 = vmatpush1.bf16.msra.mxu0 0
  %1135 = vmatprep.subr.bf16.mxu0 0
  %1136 = vmatpush1.bf16.msra.mxu0 0
  %1137 = vmatprep.subr.bf16.mxu0 0
  %1138 = vmatpush1.bf16.msra.mxu0 0
  %1139 = vmatprep.subr.bf16.mxu0 0
  %1140 = vmatpush1.bf16.msra.mxu0 0
  %1141 = vmatprep.subr.bf16.mxu0 0
  %1142 = vmatpush1.bf16.msra.mxu0 0
  %1143 = vmatprep.subr.bf16.mxu0 0
  %1144 = vmatpush1.bf16.msra.mxu0 0
  %1145 = vmatprep.subr.bf16.mxu0 0
  %1146 = vmatpush1.bf16.msra.mxu0 0
  %1147 = vmatprep.subr.bf16.mxu0 0
  %1148 = vmatpush1.bf16.msra.mxu0 0
  %1149 = vmatprep.subr.bf16.mxu0 0
  %1150 = vmatpush1.bf16.msra.mxu0 0
  %1151 = vmatprep.subr.bf16.mxu0 0
  %1152 = vmatpush1.bf16.msra.mxu0 0
  %1153 = vmatprep.mubr.bf16.mxu0 0
  %1154 = vmatmul.mubr.bf16.gmra.mrb[0].mxu0 %v1119
  %v1155 = vpop.f32.mrb[0].mxu0
  %v1156 = vadd.f32 %v1116, %v1155
  %v1157 = vpop.f32.mrb[0].mxu0
  %v1158 = vpop.f32.mrb[0].mxu0
  %v1159 = vadd.f32 %v1116, %v1158
  %v1160 = vpop.f32.mrb[0].mxu0
  %1161 = vdwg.mxu0
  %v1162 = vsel %vm739, %v1156, 0.0
  %1163 = vadd.xlane.f32.xlu0 %v1162
  %v1164 = vpop.xlane.xlu0 %1163
  %v1165 = vsel %vm739, %v1159, 0.0
  %1166 = vadd.xlane.f32.xlu0 %v1165
  %v1167 = vpop.xlane.xlu0 %1166
  %v1168 = vmul.f32 %v1164, %v746
  %v1169 = vmul.f32 %v1167, %v746
  %v1170 = vsub.f32 %v1156, %v1168
  %v1171 = vsub.f32 %v1159, %v1169
  %v1172 = vmul.f32 %v1170, %v1170
  %v1173 = vmul.f32 %v1171, %v1171
  %v1174 = vsel %vm739, %v1172, 0.0
  %1175 = vadd.xlane.f32.xlu0 %v1174
  %v1176 = vpop.xlane.xlu0 %1175
  %v1177 = vsel %vm739, %v1173, 0.0
  %1178 = vadd.xlane.f32.xlu0 %v1177
  %v1179 = vpop.xlane.xlu0 %1178
  %v1180 = vmul.f32 %v1176, %v746
  %v1181 = vmul.f32 %v1179, %v746
  %v1182 = vadd.f32 %v1180, 1e-05
  %v1183 = vadd.f32 %v1181, 1e-05
  %v1184 = vrsqrt.pop %v1182
  %v1185 = vrsqrt.pop %v1183
  %v1186 = vmul.f32 %v1170, %v1184
  %v1187 = vmul.f32 %v1171, %v1185
  %1189 = vrot.lane.b32.xlu0 %v1083, 96
  %v1190 = vpop.permute.xlu0 %1189
  %v1192 = vmul.f32 %v1186, %v1190
  %v1193 = vmul.f32 %v1187, %v1190
  %1195 = vrot.lane.b32.xlu0 %v1089, 96
  %v1196 = vpop.permute.xlu0 %1195
  %v1198 = vadd.f32 %v1192, %v1196
  %v1199 = vadd.f32 %v1193, %v1196
  %v1200 = vmax.f32 %v1198, 0.0
  %v1201 = vmax.f32 %v1199, 0.0
  %1204 = vrot.lane.b32.xlu0 %v1200, 32
  %v1205 = vpop.permute.xlu0 %1204
  %1206 = vrot.lane.b32.xlu0 %v1201, 32
  %v1207 = vpop.permute.xlu0 %1206
  %v1210 = vsel %vm739, %v1092, %v1205
  %v1211 = vsel %vm739, %v1093, %v1207
  %v1212 = vpack.c.bf16 %v1211, %v1210
  %v1213 = vld [vmem:[%s7] sm:$0xf]
  %v1214 = vld [vmem:[%s7 + $0x4] sm:$0xf]
  %v1215 = vld [vmem:[%s7 + $0x8] sm:$0xf]
  %v1216 = vld [vmem:[%s7 + $0xc] sm:$0xf]
  %v1217 = vld [vmem:[%s7 + $0x10] sm:$0xf]
  %v1218 = vld [vmem:[%s7 + $0x14] sm:$0xf]
  %v1219 = vld [vmem:[%s7 + $0x18] sm:$0xf]
  %v1220 = vld [vmem:[%s7 + $0x1c] sm:$0xf]
  %v1221 = vlaneseq
  %v1222 = vshrl.u32 %v1221, 7
  %v1223 = vsub.s32 1, %v1222
  %v1224 = vrot.slane %v34, %v1223
  %v1233 = vunpack.c.l.b16 %v1213
  %v1234 = vunpack.c.l.b16 %v1214
  %v1235 = vunpack.c.l.b16 %v1215
  %v1236 = vunpack.c.l.b16 %v1216
  %v1237 = vunpack.c.l.b16 %v1217
  %v1238 = vunpack.c.l.b16 %v1218
  %v1239 = vunpack.c.l.b16 %v1219
  %v1240 = vunpack.c.l.b16 %v1220
  %v1241 = vpack.c.b16 %v1234, %v1233
  %v1242 = vpack.c.b16 %v1236, %v1235
  %v1243 = vpack.c.b16 %v1238, %v1237
  %v1244 = vpack.c.b16 %v1240, %v1239
  %vm1249 = vcmask 523264
  %v1251 = vsel %vm1249, %v1212, 0
  %1253 = vmatprep.subr.bf16.mxu0 0
  %1254 = vmatpush1.bf16.msra.mxu0 %v1241
  %1255 = vmatprep.subr.bf16.mxu0 0
  %1256 = vmatpush1.bf16.msra.mxu0 %v1242
  %1257 = vmatprep.subr.bf16.mxu0 0
  %1258 = vmatpush1.bf16.msra.mxu0 %v1243
  %1259 = vmatprep.subr.bf16.mxu0 0
  %1260 = vmatpush1.bf16.msra.mxu0 %v1244
  %1261 = vmatprep.subr.bf16.mxu0 0
  %1262 = vmatpush1.bf16.msra.mxu0 0
  %1263 = vmatprep.subr.bf16.mxu0 0
  %1264 = vmatpush1.bf16.msra.mxu0 0
  %1265 = vmatprep.subr.bf16.mxu0 0
  %1266 = vmatpush1.bf16.msra.mxu0 0
  %1267 = vmatprep.subr.bf16.mxu0 0
  %1268 = vmatpush1.bf16.msra.mxu0 0
  %1269 = vmatprep.subr.bf16.mxu0 0
  %1270 = vmatpush1.bf16.msra.mxu0 0
  %1271 = vmatprep.subr.bf16.mxu0 0
  %1272 = vmatpush1.bf16.msra.mxu0 0
  %1273 = vmatprep.subr.bf16.mxu0 0
  %1274 = vmatpush1.bf16.msra.mxu0 0
  %1275 = vmatprep.subr.bf16.mxu0 0
  %1276 = vmatpush1.bf16.msra.mxu0 0
  %1277 = vmatprep.subr.bf16.mxu0 0
  %1278 = vmatpush1.bf16.msra.mxu0 0
  %1279 = vmatprep.subr.bf16.mxu0 0
  %1280 = vmatpush1.bf16.msra.mxu0 0
  %1281 = vmatprep.subr.bf16.mxu0 0
  %1282 = vmatpush1.bf16.msra.mxu0 0
  %1283 = vmatprep.subr.bf16.mxu0 0
  %1284 = vmatpush1.bf16.msra.mxu0 0
  %1285 = vmatprep.mubr.bf16.mxu0 0
  %1286 = vmatmul.mubr.bf16.gmra.mrb[0].mxu0 %v1251
  %v1287 = vpop.f32.mrb[0].mxu0
  %v1288 = vadd.f32 %v1224, %v1287
  %v1289 = vpop.f32.mrb[0].mxu0
  %v1290 = vpop.f32.mrb[0].mxu0
  %v1291 = vadd.f32 %v1224, %v1290
  %v1292 = vpop.f32.mrb[0].mxu0
  %1293 = vdwg.mxu0
  %vm1294 = vcmask 15360
  %1295 = vst.msk [vmem:[%s9] sm:$0xff] %vm1294, %v1288
  %1296 = vst.msk [vmem:[%s9 + $0x8] sm:$0xff] %vm1294, %v1291
  // Predicated region
  $region38: #{tpu_custom_call.1} parent=0 // pred_check
    _
  $region39: #{tpu_custom_call.1} parent=0 // pred_check_branch
    %1298 = sbr.rel (0) target = $region41
  $region40: #{tpu_custom_call.1} parent=0 // pred_region
    _
  $region41: #{tpu_custom_call.1} parent=0 // pred_fallthru
    _
  // Predicated region
  $region42: #{tpu_custom_call.1} parent=0 // pred_check
    _
  $region43: #{tpu_custom_call.1} parent=0 // pred_check_branch
    %1300 = sbr.rel (0) target = $region45
  $region44: #{tpu_custom_call.1} parent=0 // pred_region
    _
  $region45: #{tpu_custom_call.1} parent=0 // pred_fallthru
    _

</llo_original>
